<compile_context>
chip_gen: v5e
topology: v5e:2x2
jax: 0.10.0
libtpu: 0.0.40
codegen_flags: <defaults>
</compile_context>

<pallas_src>
import jax
import jax.numpy as jnp
from jax.experimental import pallas as pl
from jax.experimental.pallas import tpu as pltpu

IN_FEATURES = 2048    # resnet50.fc.in_features
OUT_FEATURES = 1000   # resnet50.fc.out_features
LANE = 128

# Sublane packing per compute dtype (rows per vreg).
_SUBLANE = {jnp.dtype(jnp.float32): 8, jnp.dtype(jnp.bfloat16): 16}


def _device_config():
    """Pick the N column tile + dimension semantics per TPU generation."""
    kind = ""
    try:
        kind = jax.devices()[0].device_kind.lower()
    except Exception:
        pass
    if "v7" in kind:
        # Two TensorCores per chip: shard the two 512-wide N slabs across them.
        return 512, (pltpu.CORE_PARALLEL,)
    # Single TensorCore (v5e / v6e): one grid step, whole padded N in one block.
    return 1024, ("arbitrary",)


TN, DIM_SEMANTICS = _device_config()
N_PADDED = OUT_FEATURES + (-OUT_FEATURES % TN)   # 1000 -> 1024


def fc_kernel(x_ref, w_ref, b_ref, o_ref):
    """One grid step: full-K contraction for one lane-aligned N slab."""
    o_ref[...] = (
        jnp.dot(x_ref[...], w_ref[...], preferred_element_type=jnp.float32)
        + b_ref[...]
    ).astype(o_ref.dtype)


def prepare_params(weight, bias, compute_dtype=jnp.bfloat16):
    """One-time (outside the hot path) cast + lane-pad of the fc parameters.

    weight: (in_features, out_features) f32 -> (in_features, N_PADDED) bf16
    bias:   (out_features,)             f32 -> (1, N_PADDED)           f32
    """
    # TODO(synk): optionally quantize the weight stream further (int8 on
    # v5e/v6e, fp8 on v7x) with a per-column scale applied in the epilogue.
    k, n = weight.shape
    n_pad = N_PADDED - n
    w_p = jnp.pad(weight.astype(compute_dtype), ((0, 0), (0, n_pad)))
    b_p = jnp.pad(bias.astype(jnp.float32), ((0, n_pad),)).reshape(1, N_PADDED)
    return w_p, b_p


@jax.jit
def resnet50_c_forward(x, w_padded, b_padded):
    """y = x @ W + b with pre-padded bf16 W (K, N_PADDED) and f32 b (1, N_PADDED)."""
    B, K = x.shape
    Kw, Np = w_padded.shape
    assert K == Kw and Np % TN == 0

    compute_dtype = w_padded.dtype
    sub = _SUBLANE.get(jnp.dtype(compute_dtype), 8)
    b_pad = -B % sub
    Bp = B + b_pad

    x_c = x.astype(compute_dtype)
    if b_pad:
        x_c = jnp.pad(x_c, ((0, b_pad), (0, 0)))

    # TODO(synk): add an M (batch) grid axis if Bp grows past a few thousand
    # rows — the resident (Bp, K) x block would then overrun scoped VMEM.

    cost = pl.CostEstimate(
        flops=2 * Bp * K * Np,
        transcendentals=0,
        bytes_accessed=K * Np * 2 + Bp * K * 2 + Np * 4 + Bp * Np * 4,
    )

    y_pad = pl.pallas_call(
        fc_kernel,
        out_shape=jax.ShapeDtypeStruct((Bp, Np), jnp.float32),
        grid_spec=pltpu.PrefetchScalarGridSpec(
            num_scalar_prefetch=0,
            grid=(Np // TN,),                               # N-parallel, no K grid
            in_specs=[
                pl.BlockSpec((Bp, K), lambda j: (0, 0)),    # x: tiny, resident
                pl.BlockSpec((K, TN), lambda j: (0, j)),    # weight column slab
                pl.BlockSpec((1, TN), lambda j: (0, j)),    # bias slab
            ],
            out_specs=pl.BlockSpec((Bp, TN), lambda j: (0, j)),
        ),
        compiler_params=pltpu.CompilerParams(
            dimension_semantics=DIM_SEMANTICS,
            vmem_limit_bytes=32 * 1024 * 1024,
        ),
        cost_estimate=cost,
    )(x_c, w_padded, b_padded)

    return y_pad[:B, :OUT_FEATURES].astype(x.dtype)


def init_params(key, in_features=IN_FEATURES, out_features=OUT_FEATURES):
    """Deterministic init mimicking torch.nn.Linear default (uniform +-1/sqrt(fan_in))."""
    kw, kb = jax.random.split(key)
    bound = 1.0 / jnp.sqrt(jnp.float32(in_features))
    # Stored as (in, out) so the kernel computes x @ W directly
    # (== torch's x @ W.T with W of shape (out, in)).
    weight = jax.random.uniform(
        kw, (in_features, out_features), jnp.float32, -bound, bound
    )
    bias = jax.random.uniform(kb, (out_features,), jnp.float32, -bound, bound)
    return weight, bias


if __name__ == "__main__":
    key = jax.random.PRNGKey(0)
    kx, kp = jax.random.split(key)

    B = 8  # small batch of flat 2048-d features
    x = jax.random.normal(kx, (B, IN_FEATURES), jnp.float32)
    weight, bias = init_params(kp)

    # One-time parameter preparation (cast + pad), outside the hot path.
    w_padded, b_padded = prepare_params(weight, bias)
    (w_padded, b_padded) = jax.block_until_ready((w_padded, b_padded))

    y = resnet50_c_forward(x, w_padded, b_padded)
    y = jax.block_until_ready(y)
    assert y.shape == (B, OUT_FEATURES)

    # Reference at the same compute precision (bf16 operands, f32 accumulation).
    y_ref = (
        jnp.dot(
            x.astype(jnp.bfloat16),
            weight.astype(jnp.bfloat16),
            preferred_element_type=jnp.float32,
        )
        + bias
    )
    assert jnp.allclose(y, y_ref, atol=2e-3, rtol=2e-3)

    # Loose sanity check against full-f32 math (bounds bf16 cast error only).
    y_f32 = x @ weight + bias
    max_err = float(jnp.max(jnp.abs(y - y_f32)))
    assert max_err < 0.5, max_err

    print("KERNEL_OK")
</pallas_src>

<mosaic_0001>
module attributes {stable_mosaic.version = 11 : i64} {
  func.func @fc_kernel(%arg0: i32, %arg1: memref<16x2048xbf16, #tpu.memory_space<vmem>>, %arg2: memref<2048x1024xbf16, #tpu.memory_space<vmem>>, %arg3: memref<1x1024xf32, #tpu.memory_space<vmem>>, %arg4: memref<16x1024xf32, #tpu.memory_space<vmem>>) attributes {dimension_semantics = [#tpu.dimension_semantics<arbitrary>], iteration_bounds = array<i64: 1>, scalar_prefetch = 0 : i64, scratch_operands = 0 : i64, tpu.core_type = #tpu.core_type<tc>, window_params = [{pipeline_mode = #tpu.pipeline_mode<synchronous>, transform_indices = @transform_0, window_bounds = array<i64: 16, 2048>}, {transform_indices = @transform_1, window_bounds = array<i64: 2048, 1024>}, {transform_indices = @transform_2, window_bounds = array<i64: 1, 1024>}, {transform_indices = @transform_3, window_bounds = array<i64: 16, 1024>}]} {
    %c0 = arith.constant 0 : index
    %c0_0 = arith.constant 0 : index
    %0 = vector.load %arg1[%c0, %c0_0] : memref<16x2048xbf16, #tpu.memory_space<vmem>>, vector<16x2048xbf16>
    %c0_1 = arith.constant 0 : index
    %c0_2 = arith.constant 0 : index
    %1 = vector.load %arg2[%c0_1, %c0_2] : memref<2048x1024xbf16, #tpu.memory_space<vmem>>, vector<2048x1024xbf16>
    %cst = arith.constant dense<0.000000e+00> : vector<16x1024xf32>
    %2 = tpu.matmul %0, %1, %cst {dimension_numbers = #tpu.dot_dimension_numbers<[1], [0], [0], [1], [0, 0, 1, 1], [], []>} : vector<16x2048xbf16>, vector<2048x1024xbf16>, vector<16x1024xf32> -> vector<16x1024xf32>
    %c0_3 = arith.constant 0 : index
    %c0_4 = arith.constant 0 : index
    %3 = vector.load %arg3[%c0_3, %c0_4] : memref<1x1024xf32, #tpu.memory_space<vmem>>, vector<1x1024xf32>
    %4 = vector.broadcast %3 : vector<1x1024xf32> to vector<16x1024xf32>
    %5 = arith.addf %2, %4 : vector<16x1024xf32>
    %c0_5 = arith.constant 0 : index
    %c0_6 = arith.constant 0 : index
    %6 = vector.load %arg4[%c0_5, %c0_6] : memref<16x1024xf32, #tpu.memory_space<vmem>>, vector<16x1024xf32>
    tpu.vector_store %arg4[%c0_5, %c0_6], %5 {strides = array<i32>} : memref<16x1024xf32, #tpu.memory_space<vmem>>, vector<16x1024xf32>,
    return
  }
  func.func @transform_0(%arg0: i32) -> (i32, i32) {
    %c0_i32 = arith.constant 0 : i32
    %c0_i32_0 = arith.constant 0 : i32
    %c0_i32_1 = arith.constant 0 : i32
    return %c0_i32, %c0_i32_0 : i32, i32
  }
  func.func @transform_1(%arg0: i32) -> (i32, i32) {
    %c0_i32 = arith.constant 0 : i32
    %c0_i32_0 = arith.constant 0 : i32
    return %c0_i32, %arg0 : i32, i32
  }
  func.func @transform_2(%arg0: i32) -> (i32, i32) {
    %c0_i32 = arith.constant 0 : i32
    %c0_i32_0 = arith.constant 0 : i32
    return %c0_i32, %arg0 : i32, i32
  }
  func.func @transform_3(%arg0: i32) -> (i32, i32) {
    %c0_i32 = arith.constant 0 : i32
    %c0_i32_0 = arith.constant 0 : i32
    return %c0_i32, %arg0 : i32, i32
  }
}

</mosaic_0001>

<llo_original>
// kernel: resnet50_c_forward.1
$region0: #{resnet50_c_forward.1}
  #allocation0 [shape = 'u32[]', space=smem, size = 0x4, offset = 0x4, fixed_abs, tag = 'smem constant byte address 0x4 - core index']
  #allocation1 [shape = 'u32[72,128]{1,0:T(1,128)}', space=vmem, size = 0x9000, scoped, tag = 'internal scratch']
  %s0 = inlined_call_operand.vmem [shape: bf16[16,2048], index: 0, kind: input, shape index: {}]
  %s1 = inlined_call_operand.hbm [shape: bf16[2048,1024], index: 1, kind: input, shape index: {}]
  %s2 = inlined_call_operand.hbm [shape: f32[1,1024], index: 2, kind: input, shape index: {}]
  %s3 = inlined_call_operand.vmem [shape: f32[16,1024], index: 3, kind: output, shape index: {}]
  %s4 = sld [smem:[#allocation0]]
  $region30: #{resnet50_c_forward.1} parent=0
    _
  %s6 = ssub.s32 1, %s4
  %s7 = scalar_select 0, %s6, %s4
  $region1: #{resnet50_c_forward.1} parent=0
    #allocation2 [shape = 'u8[4194304]{0}', space=vmem, size = 0x400000, scoped, tag = 'input window, operand 1, single buffered']
    #allocation3 [shape = 's32[1]{0}', space=sflag, size = 0x4, scoped, tag = 'scoped memory for resnet50_c_forward.1']
    #allocation4 [shape = 'u8[4096]{0}', space=vmem, size = 0x1000, scoped, tag = 'input window, operand 2, single buffered']
    #allocation5 [shape = 's32[1]{0}', space=sflag, size = 0x4, scoped, tag = 'scoped memory for resnet50_c_forward.1']
    %8 = vsyncpa [#allocation3], 0
    %9 = vsyncpa [#allocation5], 0
    // Predicated region
    $region2: #{resnet50_c_forward.1} parent=1 // pred_check
      _
    $region3: #{resnet50_c_forward.1} parent=1 // pred_check_branch
      %11 = sbr.rel (0) target = $region5
    $region4: #{resnet50_c_forward.1} parent=1 // pred_region
      _
    $region5: #{resnet50_c_forward.1} parent=1 // pred_fallthru
      _
    // Predicated region
    $region6: #{resnet50_c_forward.1} parent=1 // pred_check
      _
    $region7: #{resnet50_c_forward.1} parent=1 // pred_check_branch
      %13 = sbr.rel (0) target = $region9
    $region8: #{resnet50_c_forward.1} parent=1 // pred_region
      %15 = vsyncadd [#allocation3], 0
      %s16 = sshll.u32 %s1, 4
      %s17 = int_to_ptr.hbm [resolvable:$true] %s16
      %s18 = sshll.u32 [#allocation2], 4
      %s19 = int_to_ptr.vmem [resolvable:$true] %s18
      %24 = dma.hbm_to_vmem [thread:$0]  %s17, 131072, %s19, [#allocation3], 512, 512, 32
    $region9: #{resnet50_c_forward.1} parent=1 // pred_fallthru
      _
    // Predicated region
    $region10: #{resnet50_c_forward.1} parent=1 // pred_check
      _
    $region11: #{resnet50_c_forward.1} parent=1 // pred_check_branch
      %26 = sbr.rel (0) target = $region13
    $region12: #{resnet50_c_forward.1} parent=1 // pred_region
      %28 = vsyncadd [#allocation5], 0
      %s30 = sshll.u32 %s2, 4
      %s31 = int_to_ptr.hbm [resolvable:$true] %s30
      %s32 = sshll.u32 [#allocation4], 4
      %s33 = int_to_ptr.vmem [resolvable:$true] %s32
      %35 = dma.hbm_to_vmem [thread:$0]  %s31, 128, %s33, [#allocation5]
    $region13: #{resnet50_c_forward.1} parent=1 // pred_fallthru
      _
    // Predicated region
    $region14: #{resnet50_c_forward.1} parent=1 // pred_check
      _
    $region15: #{resnet50_c_forward.1} parent=1 // pred_check_branch
      %37 = sbr.rel (0) target = $region17
    $region16: #{resnet50_c_forward.1} parent=1 // pred_region
      %39 = dma.done [#allocation3], 131072
    $region17: #{resnet50_c_forward.1} parent=1 // pred_fallthru
      _
    // Predicated region
    $region18: #{resnet50_c_forward.1} parent=1 // pred_check
      _
    $region19: #{resnet50_c_forward.1} parent=1 // pred_check_branch
      %41 = sbr.rel (0) target = $region21
    $region20: #{resnet50_c_forward.1} parent=1 // pred_region
      %43 = dma.done [#allocation5], 128
    $region21: #{resnet50_c_forward.1} parent=1 // pred_fallthru
      _
    %v44 = vld [vmem:[%s0] sm:$0xff]
    %v45 = vld [vmem:[%s0 + $0x8] sm:$0xff]
    %v46 = vld [vmem:[%s0 + $0x10] sm:$0xff]
    %v47 = vld [vmem:[%s0 + $0x18] sm:$0xff]
    %v48 = vld [vmem:[%s0 + $0x20] sm:$0xff]
    %v49 = vld [vmem:[%s0 + $0x28] sm:$0xff]
    %v50 = vld [vmem:[%s0 + $0x30] sm:$0xff]
    %v51 = vld [vmem:[%s0 + $0x38] sm:$0xff]
    %v52 = vld [vmem:[%s0 + $0x40] sm:$0xff]
    %v53 = vld [vmem:[%s0 + $0x48] sm:$0xff]
    %v54 = vld [vmem:[%s0 + $0x50] sm:$0xff]
    %v55 = vld [vmem:[%s0 + $0x58] sm:$0xff]
    %v56 = vld [vmem:[%s0 + $0x60] sm:$0xff]
    %v57 = vld [vmem:[%s0 + $0x68] sm:$0xff]
    %v58 = vld [vmem:[%s0 + $0x70] sm:$0xff]
    %v59 = vld [vmem:[%s0 + $0x78] sm:$0xff]
    %v60 = vld [vmem:[#allocation2] sm:$0xff]
    %v61 = vld [vmem:[#allocation2 + $0x8] sm:$0xff]
    %v62 = vld [vmem:[#allocation2 + $0x10] sm:$0xff]
    %v63 = vld [vmem:[#allocation2 + $0x18] sm:$0xff]
    %v64 = vld [vmem:[#allocation2 + $0x20] sm:$0xff]
    %v65 = vld [vmem:[#allocation2 + $0x28] sm:$0xff]
    %v66 = vld [vmem:[#allocation2 + $0x30] sm:$0xff]
    %v67 = vld [vmem:[#allocation2 + $0x38] sm:$0xff]
    %v68 = vld [vmem:[#allocation2 + $0x40] sm:$0xff]
    %v69 = vld [vmem:[#allocation2 + $0x48] sm:$0xff]
    %v70 = vld [vmem:[#allocation2 + $0x50] sm:$0xff]
    %v71 = vld [vmem:[#allocation2 + $0x58] sm:$0xff]
    %v72 = vld [vmem:[#allocation2 + $0x60] sm:$0xff]
    %v73 = vld [vmem:[#allocation2 + $0x68] sm:$0xff]
    %v74 = vld [vmem:[#allocation2 + $0x70] sm:$0xff]
    %v75 = vld [vmem:[#allocation2 + $0x78] sm:$0xff]
    %v76 = vld [vmem:[#allocation2 + $0x80] sm:$0xff]
    %v77 = vld [vmem:[#allocation2 + $0x88] sm:$0xff]
    %v78 = vld [vmem:[#allocation2 + $0x90] sm:$0xff]
    %v79 = vld [vmem:[#allocation2 + $0x98] sm:$0xff]
    %v80 = vld [vmem:[#allocation2 + $0xa0] sm:$0xff]
    %v81 = vld [vmem:[#allocation2 + $0xa8] sm:$0xff]
    %v82 = vld [vmem:[#allocation2 + $0xb0] sm:$0xff]
    %v83 = vld [vmem:[#allocation2 + $0xb8] sm:$0xff]
    %v84 = vld [vmem:[#allocation2 + $0xc0] sm:$0xff]
    %v85 = vld [vmem:[#allocation2 + $0xc8] sm:$0xff]
    %v86 = vld [vmem:[#allocation2 + $0xd0] sm:$0xff]
    %v87 = vld [vmem:[#allocation2 + $0xd8] sm:$0xff]
    %v88 = vld [vmem:[#allocation2 + $0xe0] sm:$0xff]
    %v89 = vld [vmem:[#allocation2 + $0xe8] sm:$0xff]
    %v90 = vld [vmem:[#allocation2 + $0xf0] sm:$0xff]
    %v91 = vld [vmem:[#allocation2 + $0xf8] sm:$0xff]
    %v92 = vld [vmem:[#allocation2 + $0x100] sm:$0xff]
    %v93 = vld [vmem:[#allocation2 + $0x108] sm:$0xff]
    %v94 = vld [vmem:[#allocation2 + $0x110] sm:$0xff]
    %v95 = vld [vmem:[#allocation2 + $0x118] sm:$0xff]
    %v96 = vld [vmem:[#allocation2 + $0x120] sm:$0xff]
    %v97 = vld [vmem:[#allocation2 + $0x128] sm:$0xff]
    %v98 = vld [vmem:[#allocation2 + $0x130] sm:$0xff]
    %v99 = vld [vmem:[#allocation2 + $0x138] sm:$0xff]
    %v100 = vld [vmem:[#allocation2 + $0x140] sm:$0xff]
    %v101 = vld [vmem:[#allocation2 + $0x148] sm:$0xff]
    %v102 = vld [vmem:[#allocation2 + $0x150] sm:$0xff]
    %v103 = vld [vmem:[#allocation2 + $0x158] sm:$0xff]
    %v104 = vld [vmem:[#allocation2 + $0x160] sm:$0xff]
    %v105 = vld [vmem:[#allocation2 + $0x168] sm:$0xff]
    %v106 = vld [vmem:[#allocation2 + $0x170] sm:$0xff]
    %v107 = vld [vmem:[#allocation2 + $0x178] sm:$0xff]
    %v108 = vld [vmem:[#allocation2 + $0x180] sm:$0xff]
    %v109 = vld [vmem:[#allocation2 + $0x188] sm:$0xff]
    %v110 = vld [vmem:[#allocation2 + $0x190] sm:$0xff]
    %v111 = vld [vmem:[#allocation2 + $0x198] sm:$0xff]
    %v112 = vld [vmem:[#allocation2 + $0x1a0] sm:$0xff]
    %v113 = vld [vmem:[#allocation2 + $0x1a8] sm:$0xff]
    %v114 = vld [vmem:[#allocation2 + $0x1b0] sm:$0xff]
    %v115 = vld [vmem:[#allocation2 + $0x1b8] sm:$0xff]
    %v116 = vld [vmem:[#allocation2 + $0x1c0] sm:$0xff]
    %v117 = vld [vmem:[#allocation2 + $0x1c8] sm:$0xff]
    %v118 = vld [vmem:[#allocation2 + $0x1d0] sm:$0xff]
    %v119 = vld [vmem:[#allocation2 + $0x1d8] sm:$0xff]
    %v120 = vld [vmem:[#allocation2 + $0x1e0] sm:$0xff]
    %v121 = vld [vmem:[#allocation2 + $0x1e8] sm:$0xff]
    %v122 = vld [vmem:[#allocation2 + $0x1f0] sm:$0xff]
    %v123 = vld [vmem:[#allocation2 + $0x1f8] sm:$0xff]
    %v124 = vld [vmem:[#allocation2 + $0x200] sm:$0xff]
    %v125 = vld [vmem:[#allocation2 + $0x208] sm:$0xff]
    %v126 = vld [vmem:[#allocation2 + $0x210] sm:$0xff]
    %v127 = vld [vmem:[#allocation2 + $0x218] sm:$0xff]
    %v128 = vld [vmem:[#allocation2 + $0x220] sm:$0xff]
    %v129 = vld [vmem:[#allocation2 + $0x228] sm:$0xff]
    %v130 = vld [vmem:[#allocation2 + $0x230] sm:$0xff]
    %v131 = vld [vmem:[#allocation2 + $0x238] sm:$0xff]
    %v132 = vld [vmem:[#allocation2 + $0x240] sm:$0xff]
    %v133 = vld [vmem:[#allocation2 + $0x248] sm:$0xff]
    %v134 = vld [vmem:[#allocation2 + $0x250] sm:$0xff]
    %v135 = vld [vmem:[#allocation2 + $0x258] sm:$0xff]
    %v136 = vld [vmem:[#allocation2 + $0x260] sm:$0xff]
    %v137 = vld [vmem:[#allocation2 + $0x268] sm:$0xff]
    %v138 = vld [vmem:[#allocation2 + $0x270] sm:$0xff]
    %v139 = vld [vmem:[#allocation2 + $0x278] sm:$0xff]
    %v140 = vld [vmem:[#allocation2 + $0x280] sm:$0xff]
    %v141 = vld [vmem:[#allocation2 + $0x288] sm:$0xff]
    %v142 = vld [vmem:[#allocation2 + $0x290] sm:$0xff]
    %v143 = vld [vmem:[#allocation2 + $0x298] sm:$0xff]
    %v144 = vld [vmem:[#allocation2 + $0x2a0] sm:$0xff]
    %v145 = vld [vmem:[#allocation2 + $0x2a8] sm:$0xff]
    %v146 = vld [vmem:[#allocation2 + $0x2b0] sm:$0xff]
    %v147 = vld [vmem:[#allocation2 + $0x2b8] sm:$0xff]
    %v148 = vld [vmem:[#allocation2 + $0x2c0] sm:$0xff]
    %v149 = vld [vmem:[#allocation2 + $0x2c8] sm:$0xff]
    %v150 = vld [vmem:[#allocation2 + $0x2d0] sm:$0xff]
    %v151 = vld [vmem:[#allocation2 + $0x2d8] sm:$0xff]
    %v152 = vld [vmem:[#allocation2 + $0x2e0] sm:$0xff]
    %v153 = vld [vmem:[#allocation2 + $0x2e8] sm:$0xff]
    %v154 = vld [vmem:[#allocation2 + $0x2f0] sm:$0xff]
    %v155 = vld [vmem:[#allocation2 + $0x2f8] sm:$0xff]
    %v156 = vld [vmem:[#allocation2 + $0x300] sm:$0xff]
    %v157 = vld [vmem:[#allocation2 + $0x308] sm:$0xff]
    %v158 = vld [vmem:[#allocation2 + $0x310] sm:$0xff]
    %v159 = vld [vmem:[#allocation2 + $0x318] sm:$0xff]
    %v160 = vld [vmem:[#allocation2 + $0x320] sm:$0xff]
    %v161 = vld [vmem:[#allocation2 + $0x328] sm:$0xff]
    %v162 = vld [vmem:[#allocation2 + $0x330] sm:$0xff]
    %v163 = vld [vmem:[#allocation2 + $0x338] sm:$0xff]
    %v164 = vld [vmem:[#allocation2 + $0x340] sm:$0xff]
    %v165 = vld [vmem:[#allocation2 + $0x348] sm:$0xff]
    %v166 = vld [vmem:[#allocation2 + $0x350] sm:$0xff]
    %v167 = vld [vmem:[#allocation2 + $0x358] sm:$0xff]
    %v168 = vld [vmem:[#allocation2 + $0x360] sm:$0xff]
    %v169 = vld [vmem:[#allocation2 + $0x368] sm:$0xff]
    %v170 = vld [vmem:[#allocation2 + $0x370] sm:$0xff]
    %v171 = vld [vmem:[#allocation2 + $0x378] sm:$0xff]
    %v172 = vld [vmem:[#allocation2 + $0x380] sm:$0xff]
    %v173 = vld [vmem:[#allocation2 + $0x388] sm:$0xff]
    %v174 = vld [vmem:[#allocation2 + $0x390] sm:$0xff]
    %v175 = vld [vmem:[#allocation2 + $0x398] sm:$0xff]
    %v176 = vld [vmem:[#allocation2 + $0x3a0] sm:$0xff]
    %v177 = vld [vmem:[#allocation2 + $0x3a8] sm:$0xff]
    %v178 = vld [vmem:[#allocation2 + $0x3b0] sm:$0xff]
    %v179 = vld [vmem:[#allocation2 + $0x3b8] sm:$0xff]
    %v180 = vld [vmem:[#allocation2 + $0x3c0] sm:$0xff]
    %v181 = vld [vmem:[#allocation2 + $0x3c8] sm:$0xff]
    %v182 = vld [vmem:[#allocation2 + $0x3d0] sm:$0xff]
    %v183 = vld [vmem:[#allocation2 + $0x3d8] sm:$0xff]
    %v184 = vld [vmem:[#allocation2 + $0x3e0] sm:$0xff]
    %v185 = vld [vmem:[#allocation2 + $0x3e8] sm:$0xff]
    %v186 = vld [vmem:[#allocation2 + $0x3f0] sm:$0xff]
    %v187 = vld [vmem:[#allocation2 + $0x3f8] sm:$0xff]
    %v188 = vld [vmem:[#allocation2 + $0x400] sm:$0xff]
    %v189 = vld [vmem:[#allocation2 + $0x408] sm:$0xff]
    %v190 = vld [vmem:[#allocation2 + $0x410] sm:$0xff]
    %v191 = vld [vmem:[#allocation2 + $0x418] sm:$0xff]
    %v192 = vld [vmem:[#allocation2 + $0x420] sm:$0xff]
    %v193 = vld [vmem:[#allocation2 + $0x428] sm:$0xff]
    %v194 = vld [vmem:[#allocation2 + $0x430] sm:$0xff]
    %v195 = vld [vmem:[#allocation2 + $0x438] sm:$0xff]
    %v196 = vld [vmem:[#allocation2 + $0x440] sm:$0xff]
    %v197 = vld [vmem:[#allocation2 + $0x448] sm:$0xff]
    %v198 = vld [vmem:[#allocation2 + $0x450] sm:$0xff]
    %v199 = vld [vmem:[#allocation2 + $0x458] sm:$0xff]
    %v200 = vld [vmem:[#allocation2 + $0x460] sm:$0xff]
    %v201 = vld [vmem:[#allocation2 + $0x468] sm:$0xff]
    %v202 = vld [vmem:[#allocation2 + $0x470] sm:$0xff]
    %v203 = vld [vmem:[#allocation2 + $0x478] sm:$0xff]
    %v204 = vld [vmem:[#allocation2 + $0x480] sm:$0xff]
    %v205 = vld [vmem:[#allocation2 + $0x488] sm:$0xff]
    %v206 = vld [vmem:[#allocation2 + $0x490] sm:$0xff]
    %v207 = vld [vmem:[#allocation2 + $0x498] sm:$0xff]
    %v208 = vld [vmem:[#allocation2 + $0x4a0] sm:$0xff]
    %v209 = vld [vmem:[#allocation2 + $0x4a8] sm:$0xff]
    %v210 = vld [vmem:[#allocation2 + $0x4b0] sm:$0xff]
    %v211 = vld [vmem:[#allocation2 + $0x4b8] sm:$0xff]
    %v212 = vld [vmem:[#allocation2 + $0x4c0] sm:$0xff]
    %v213 = vld [vmem:[#allocation2 + $0x4c8] sm:$0xff]
    %v214 = vld [vmem:[#allocation2 + $0x4d0] sm:$0xff]
    %v215 = vld [vmem:[#allocation2 + $0x4d8] sm:$0xff]
    %v216 = vld [vmem:[#allocation2 + $0x4e0] sm:$0xff]
    %v217 = vld [vmem:[#allocation2 + $0x4e8] sm:$0xff]
    %v218 = vld [vmem:[#allocation2 + $0x4f0] sm:$0xff]
    %v219 = vld [vmem:[#allocation2 + $0x4f8] sm:$0xff]
    %v220 = vld [vmem:[#allocation2 + $0x500] sm:$0xff]
    %v221 = vld [vmem:[#allocation2 + $0x508] sm:$0xff]
    %v222 = vld [vmem:[#allocation2 + $0x510] sm:$0xff]
    %v223 = vld [vmem:[#allocation2 + $0x518] sm:$0xff]
    %v224 = vld [vmem:[#allocation2 + $0x520] sm:$0xff]
    %v225 = vld [vmem:[#allocation2 + $0x528] sm:$0xff]
    %v226 = vld [vmem:[#allocation2 + $0x530] sm:$0xff]
    %v227 = vld [vmem:[#allocation2 + $0x538] sm:$0xff]
    %v228 = vld [vmem:[#allocation2 + $0x540] sm:$0xff]
    %v229 = vld [vmem:[#allocation2 + $0x548] sm:$0xff]
    %v230 = vld [vmem:[#allocation2 + $0x550] sm:$0xff]
    %v231 = vld [vmem:[#allocation2 + $0x558] sm:$0xff]
    %v232 = vld [vmem:[#allocation2 + $0x560] sm:$0xff]
    %v233 = vld [vmem:[#allocation2 + $0x568] sm:$0xff]
    %v234 = vld [vmem:[#allocation2 + $0x570] sm:$0xff]
    %v235 = vld [vmem:[#allocation2 + $0x578] sm:$0xff]
    %v236 = vld [vmem:[#allocation2 + $0x580] sm:$0xff]
    %v237 = vld [vmem:[#allocation2 + $0x588] sm:$0xff]
    %v238 = vld [vmem:[#allocation2 + $0x590] sm:$0xff]
    %v239 = vld [vmem:[#allocation2 + $0x598] sm:$0xff]
    %v240 = vld [vmem:[#allocation2 + $0x5a0] sm:$0xff]
    %v241 = vld [vmem:[#allocation2 + $0x5a8] sm:$0xff]
    %v242 = vld [vmem:[#allocation2 + $0x5b0] sm:$0xff]
    %v243 = vld [vmem:[#allocation2 + $0x5b8] sm:$0xff]
    %v244 = vld [vmem:[#allocation2 + $0x5c0] sm:$0xff]
    %v245 = vld [vmem:[#allocation2 + $0x5c8] sm:$0xff]
    %v246 = vld [vmem:[#allocation2 + $0x5d0] sm:$0xff]
    %v247 = vld [vmem:[#allocation2 + $0x5d8] sm:$0xff]
    %v248 = vld [vmem:[#allocation2 + $0x5e0] sm:$0xff]
    %v249 = vld [vmem:[#allocation2 + $0x5e8] sm:$0xff]
    %v250 = vld [vmem:[#allocation2 + $0x5f0] sm:$0xff]
    %v251 = vld [vmem:[#allocation2 + $0x5f8] sm:$0xff]
    %v252 = vld [vmem:[#allocation2 + $0x600] sm:$0xff]
    %v253 = vld [vmem:[#allocation2 + $0x608] sm:$0xff]
    %v254 = vld [vmem:[#allocation2 + $0x610] sm:$0xff]
    %v255 = vld [vmem:[#allocation2 + $0x618] sm:$0xff]
    %v256 = vld [vmem:[#allocation2 + $0x620] sm:$0xff]
    %v257 = vld [vmem:[#allocation2 + $0x628] sm:$0xff]
    %v258 = vld [vmem:[#allocation2 + $0x630] sm:$0xff]
    %v259 = vld [vmem:[#allocation2 + $0x638] sm:$0xff]
    %v260 = vld [vmem:[#allocation2 + $0x640] sm:$0xff]
    %v261 = vld [vmem:[#allocation2 + $0x648] sm:$0xff]
    %v262 = vld [vmem:[#allocation2 + $0x650] sm:$0xff]
    %v263 = vld [vmem:[#allocation2 + $0x658] sm:$0xff]
    %v264 = vld [vmem:[#allocation2 + $0x660] sm:$0xff]
    %v265 = vld [vmem:[#allocation2 + $0x668] sm:$0xff]
    %v266 = vld [vmem:[#allocation2 + $0x670] sm:$0xff]
    %v267 = vld [vmem:[#allocation2 + $0x678] sm:$0xff]
    %v268 = vld [vmem:[#allocation2 + $0x680] sm:$0xff]
    %v269 = vld [vmem:[#allocation2 + $0x688] sm:$0xff]
    %v270 = vld [vmem:[#allocation2 + $0x690] sm:$0xff]
    %v271 = vld [vmem:[#allocation2 + $0x698] sm:$0xff]
    %v272 = vld [vmem:[#allocation2 + $0x6a0] sm:$0xff]
    %v273 = vld [vmem:[#allocation2 + $0x6a8] sm:$0xff]
    %v274 = vld [vmem:[#allocation2 + $0x6b0] sm:$0xff]
    %v275 = vld [vmem:[#allocation2 + $0x6b8] sm:$0xff]
    %v276 = vld [vmem:[#allocation2 + $0x6c0] sm:$0xff]
    %v277 = vld [vmem:[#allocation2 + $0x6c8] sm:$0xff]
    %v278 = vld [vmem:[#allocation2 + $0x6d0] sm:$0xff]
    %v279 = vld [vmem:[#allocation2 + $0x6d8] sm:$0xff]
    %v280 = vld [vmem:[#allocation2 + $0x6e0] sm:$0xff]
    %v281 = vld [vmem:[#allocation2 + $0x6e8] sm:$0xff]
    %v282 = vld [vmem:[#allocation2 + $0x6f0] sm:$0xff]
    %v283 = vld [vmem:[#allocation2 + $0x6f8] sm:$0xff]
    %v284 = vld [vmem:[#allocation2 + $0x700] sm:$0xff]
    %v285 = vld [vmem:[#allocation2 + $0x708] sm:$0xff]
    %v286 = vld [vmem:[#allocation2 + $0x710] sm:$0xff]
    %v287 = vld [vmem:[#allocation2 + $0x718] sm:$0xff]
    %v288 = vld [vmem:[#allocation2 + $0x720] sm:$0xff]
    %v289 = vld [vmem:[#allocation2 + $0x728] sm:$0xff]
    %v290 = vld [vmem:[#allocation2 + $0x730] sm:$0xff]
    %v291 = vld [vmem:[#allocation2 + $0x738] sm:$0xff]
    %v292 = vld [vmem:[#allocation2 + $0x740] sm:$0xff]
    %v293 = vld [vmem:[#allocation2 + $0x748] sm:$0xff]
    %v294 = vld [vmem:[#allocation2 + $0x750] sm:$0xff]
    %v295 = vld [vmem:[#allocation2 + $0x758] sm:$0xff]
    %v296 = vld [vmem:[#allocation2 + $0x760] sm:$0xff]
    %v297 = vld [vmem:[#allocation2 + $0x768] sm:$0xff]
    %v298 = vld [vmem:[#allocation2 + $0x770] sm:$0xff]
    %v299 = vld [vmem:[#allocation2 + $0x778] sm:$0xff]
    %v300 = vld [vmem:[#allocation2 + $0x780] sm:$0xff]
    %v301 = vld [vmem:[#allocation2 + $0x788] sm:$0xff]
    %v302 = vld [vmem:[#allocation2 + $0x790] sm:$0xff]
    %v303 = vld [vmem:[#allocation2 + $0x798] sm:$0xff]
    %v304 = vld [vmem:[#allocation2 + $0x7a0] sm:$0xff]
    %v305 = vld [vmem:[#allocation2 + $0x7a8] sm:$0xff]
    %v306 = vld [vmem:[#allocation2 + $0x7b0] sm:$0xff]
    %v307 = vld [vmem:[#allocation2 + $0x7b8] sm:$0xff]
    %v308 = vld [vmem:[#allocation2 + $0x7c0] sm:$0xff]
    %v309 = vld [vmem:[#allocation2 + $0x7c8] sm:$0xff]
    %v310 = vld [vmem:[#allocation2 + $0x7d0] sm:$0xff]
    %v311 = vld [vmem:[#allocation2 + $0x7d8] sm:$0xff]
    %v312 = vld [vmem:[#allocation2 + $0x7e0] sm:$0xff]
    %v313 = vld [vmem:[#allocation2 + $0x7e8] sm:$0xff]
    %v314 = vld [vmem:[#allocation2 + $0x7f0] sm:$0xff]
    %v315 = vld [vmem:[#allocation2 + $0x7f8] sm:$0xff]
    %v316 = vld [vmem:[#allocation2 + $0x800] sm:$0xff]
    %v317 = vld [vmem:[#allocation2 + $0x808] sm:$0xff]
    %v318 = vld [vmem:[#allocation2 + $0x810] sm:$0xff]
    %v319 = vld [vmem:[#allocation2 + $0x818] sm:$0xff]
    %v320 = vld [vmem:[#allocation2 + $0x820] sm:$0xff]
    %v321 = vld [vmem:[#allocation2 + $0x828] sm:$0xff]
    %v322 = vld [vmem:[#allocation2 + $0x830] sm:$0xff]
    %v323 = vld [vmem:[#allocation2 + $0x838] sm:$0xff]
    %v324 = vld [vmem:[#allocation2 + $0x840] sm:$0xff]
    %v325 = vld [vmem:[#allocation2 + $0x848] sm:$0xff]
    %v326 = vld [vmem:[#allocation2 + $0x850] sm:$0xff]
    %v327 = vld [vmem:[#allocation2 + $0x858] sm:$0xff]
    %v328 = vld [vmem:[#allocation2 + $0x860] sm:$0xff]
    %v329 = vld [vmem:[#allocation2 + $0x868] sm:$0xff]
    %v330 = vld [vmem:[#allocation2 + $0x870] sm:$0xff]
    %v331 = vld [vmem:[#allocation2 + $0x878] sm:$0xff]
    %v332 = vld [vmem:[#allocation2 + $0x880] sm:$0xff]
    %v333 = vld [vmem:[#allocation2 + $0x888] sm:$0xff]
    %v334 = vld [vmem:[#allocation2 + $0x890] sm:$0xff]
    %v335 = vld [vmem:[#allocation2 + $0x898] sm:$0xff]
    %v336 = vld [vmem:[#allocation2 + $0x8a0] sm:$0xff]
    %v337 = vld [vmem:[#allocation2 + $0x8a8] sm:$0xff]
    %v338 = vld [vmem:[#allocation2 + $0x8b0] sm:$0xff]
    %v339 = vld [vmem:[#allocation2 + $0x8b8] sm:$0xff]
    %v340 = vld [vmem:[#allocation2 + $0x8c0] sm:$0xff]
    %v341 = vld [vmem:[#allocation2 + $0x8c8] sm:$0xff]
    %v342 = vld [vmem:[#allocation2 + $0x8d0] sm:$0xff]
    %v343 = vld [vmem:[#allocation2 + $0x8d8] sm:$0xff]
    %v344 = vld [vmem:[#allocation2 + $0x8e0] sm:$0xff]
    %v345 = vld [vmem:[#allocation2 + $0x8e8] sm:$0xff]
    %v346 = vld [vmem:[#allocation2 + $0x8f0] sm:$0xff]
    %v347 = vld [vmem:[#allocation2 + $0x8f8] sm:$0xff]
    %v348 = vld [vmem:[#allocation2 + $0x900] sm:$0xff]
    %v349 = vld [vmem:[#allocation2 + $0x908] sm:$0xff]
    %v350 = vld [vmem:[#allocation2 + $0x910] sm:$0xff]
    %v351 = vld [vmem:[#allocation2 + $0x918] sm:$0xff]
    %v352 = vld [vmem:[#allocation2 + $0x920] sm:$0xff]
    %v353 = vld [vmem:[#allocation2 + $0x928] sm:$0xff]
    %v354 = vld [vmem:[#allocation2 + $0x930] sm:$0xff]
    %v355 = vld [vmem:[#allocation2 + $0x938] sm:$0xff]
    %v356 = vld [vmem:[#allocation2 + $0x940] sm:$0xff]
    %v357 = vld [vmem:[#allocation2 + $0x948] sm:$0xff]
    %v358 = vld [vmem:[#allocation2 + $0x950] sm:$0xff]
    %v359 = vld [vmem:[#allocation2 + $0x958] sm:$0xff]
    %v360 = vld [vmem:[#allocation2 + $0x960] sm:$0xff]
    %v361 = vld [vmem:[#allocation2 + $0x968] sm:$0xff]
    %v362 = vld [vmem:[#allocation2 + $0x970] sm:$0xff]
    %v363 = vld [vmem:[#allocation2 + $0x978] sm:$0xff]
    %v364 = vld [vmem:[#allocation2 + $0x980] sm:$0xff]
    %v365 = vld [vmem:[#allocation2 + $0x988] sm:$0xff]
    %v366 = vld [vmem:[#allocation2 + $0x990] sm:$0xff]
    %v367 = vld [vmem:[#allocation2 + $0x998] sm:$0xff]
    %v368 = vld [vmem:[#allocation2 + $0x9a0] sm:$0xff]
    %v369 = vld [vmem:[#allocation2 + $0x9a8] sm:$0xff]
    %v370 = vld [vmem:[#allocation2 + $0x9b0] sm:$0xff]
    %v371 = vld [vmem:[#allocation2 + $0x9b8] sm:$0xff]
    %v372 = vld [vmem:[#allocation2 + $0x9c0] sm:$0xff]
    %v373 = vld [vmem:[#allocation2 + $0x9c8] sm:$0xff]
    %v374 = vld [vmem:[#allocation2 + $0x9d0] sm:$0xff]
    %v375 = vld [vmem:[#allocation2 + $0x9d8] sm:$0xff]
    %v376 = vld [vmem:[#allocation2 + $0x9e0] sm:$0xff]
    %v377 = vld [vmem:[#allocation2 + $0x9e8] sm:$0xff]
    %v378 = vld [vmem:[#allocation2 + $0x9f0] sm:$0xff]
    %v379 = vld [vmem:[#allocation2 + $0x9f8] sm:$0xff]
    %v380 = vld [vmem:[#allocation2 + $0xa00] sm:$0xff]
    %v381 = vld [vmem:[#allocation2 + $0xa08] sm:$0xff]
    %v382 = vld [vmem:[#allocation2 + $0xa10] sm:$0xff]
    %v383 = vld [vmem:[#allocation2 + $0xa18] sm:$0xff]
    %v384 = vld [vmem:[#allocation2 + $0xa20] sm:$0xff]
    %v385 = vld [vmem:[#allocation2 + $0xa28] sm:$0xff]
    %v386 = vld [vmem:[#allocation2 + $0xa30] sm:$0xff]
    %v387 = vld [vmem:[#allocation2 + $0xa38] sm:$0xff]
    %v388 = vld [vmem:[#allocation2 + $0xa40] sm:$0xff]
    %v389 = vld [vmem:[#allocation2 + $0xa48] sm:$0xff]
    %v390 = vld [vmem:[#allocation2 + $0xa50] sm:$0xff]
    %v391 = vld [vmem:[#allocation2 + $0xa58] sm:$0xff]
    %v392 = vld [vmem:[#allocation2 + $0xa60] sm:$0xff]
    %v393 = vld [vmem:[#allocation2 + $0xa68] sm:$0xff]
    %v394 = vld [vmem:[#allocation2 + $0xa70] sm:$0xff]
    %v395 = vld [vmem:[#allocation2 + $0xa78] sm:$0xff]
    %v396 = vld [vmem:[#allocation2 + $0xa80] sm:$0xff]
    %v397 = vld [vmem:[#allocation2 + $0xa88] sm:$0xff]
    %v398 = vld [vmem:[#allocation2 + $0xa90] sm:$0xff]
    %v399 = vld [vmem:[#allocation2 + $0xa98] sm:$0xff]
    %v400 = vld [vmem:[#allocation2 + $0xaa0] sm:$0xff]
    %v401 = vld [vmem:[#allocation2 + $0xaa8] sm:$0xff]
    %v402 = vld [vmem:[#allocation2 + $0xab0] sm:$0xff]
    %v403 = vld [vmem:[#allocation2 + $0xab8] sm:$0xff]
    %v404 = vld [vmem:[#allocation2 + $0xac0] sm:$0xff]
    %v405 = vld [vmem:[#allocation2 + $0xac8] sm:$0xff]
    %v406 = vld [vmem:[#allocation2 + $0xad0] sm:$0xff]
    %v407 = vld [vmem:[#allocation2 + $0xad8] sm:$0xff]
    %v408 = vld [vmem:[#allocation2 + $0xae0] sm:$0xff]
    %v409 = vld [vmem:[#allocation2 + $0xae8] sm:$0xff]
    %v410 = vld [vmem:[#allocation2 + $0xaf0] sm:$0xff]
    %v411 = vld [vmem:[#allocation2 + $0xaf8] sm:$0xff]
    %v412 = vld [vmem:[#allocation2 + $0xb00] sm:$0xff]
    %v413 = vld [vmem:[#allocation2 + $0xb08] sm:$0xff]
    %v414 = vld [vmem:[#allocation2 + $0xb10] sm:$0xff]
    %v415 = vld [vmem:[#allocation2 + $0xb18] sm:$0xff]
    %v416 = vld [vmem:[#allocation2 + $0xb20] sm:$0xff]
    %v417 = vld [vmem:[#allocation2 + $0xb28] sm:$0xff]
    %v418 = vld [vmem:[#allocation2 + $0xb30] sm:$0xff]
    %v419 = vld [vmem:[#allocation2 + $0xb38] sm:$0xff]
    %v420 = vld [vmem:[#allocation2 + $0xb40] sm:$0xff]
    %v421 = vld [vmem:[#allocation2 + $0xb48] sm:$0xff]
    %v422 = vld [vmem:[#allocation2 + $0xb50] sm:$0xff]
    %v423 = vld [vmem:[#allocation2 + $0xb58] sm:$0xff]
    %v424 = vld [vmem:[#allocation2 + $0xb60] sm:$0xff]
    %v425 = vld [vmem:[#allocation2 + $0xb68] sm:$0xff]
    %v426 = vld [vmem:[#allocation2 + $0xb70] sm:$0xff]
    %v427 = vld [vmem:[#allocation2 + $0xb78] sm:$0xff]
    %v428 = vld [vmem:[#allocation2 + $0xb80] sm:$0xff]
    %v429 = vld [vmem:[#allocation2 + $0xb88] sm:$0xff]
    %v430 = vld [vmem:[#allocation2 + $0xb90] sm:$0xff]
    %v431 = vld [vmem:[#allocation2 + $0xb98] sm:$0xff]
    %v432 = vld [vmem:[#allocation2 + $0xba0] sm:$0xff]
    %v433 = vld [vmem:[#allocation2 + $0xba8] sm:$0xff]
    %v434 = vld [vmem:[#allocation2 + $0xbb0] sm:$0xff]
    %v435 = vld [vmem:[#allocation2 + $0xbb8] sm:$0xff]
    %v436 = vld [vmem:[#allocation2 + $0xbc0] sm:$0xff]
    %v437 = vld [vmem:[#allocation2 + $0xbc8] sm:$0xff]
    %v438 = vld [vmem:[#allocation2 + $0xbd0] sm:$0xff]
    %v439 = vld [vmem:[#allocation2 + $0xbd8] sm:$0xff]
    %v440 = vld [vmem:[#allocation2 + $0xbe0] sm:$0xff]
    %v441 = vld [vmem:[#allocation2 + $0xbe8] sm:$0xff]
    %v442 = vld [vmem:[#allocation2 + $0xbf0] sm:$0xff]
    %v443 = vld [vmem:[#allocation2 + $0xbf8] sm:$0xff]
    %v444 = vld [vmem:[#allocation2 + $0xc00] sm:$0xff]
    %v445 = vld [vmem:[#allocation2 + $0xc08] sm:$0xff]
    %v446 = vld [vmem:[#allocation2 + $0xc10] sm:$0xff]
    %v447 = vld [vmem:[#allocation2 + $0xc18] sm:$0xff]
    %v448 = vld [vmem:[#allocation2 + $0xc20] sm:$0xff]
    %v449 = vld [vmem:[#allocation2 + $0xc28] sm:$0xff]
    %v450 = vld [vmem:[#allocation2 + $0xc30] sm:$0xff]
    %v451 = vld [vmem:[#allocation2 + $0xc38] sm:$0xff]
    %v452 = vld [vmem:[#allocation2 + $0xc40] sm:$0xff]
    %v453 = vld [vmem:[#allocation2 + $0xc48] sm:$0xff]
    %v454 = vld [vmem:[#allocation2 + $0xc50] sm:$0xff]
    %v455 = vld [vmem:[#allocation2 + $0xc58] sm:$0xff]
    %v456 = vld [vmem:[#allocation2 + $0xc60] sm:$0xff]
    %v457 = vld [vmem:[#allocation2 + $0xc68] sm:$0xff]
    %v458 = vld [vmem:[#allocation2 + $0xc70] sm:$0xff]
    %v459 = vld [vmem:[#allocation2 + $0xc78] sm:$0xff]
    %v460 = vld [vmem:[#allocation2 + $0xc80] sm:$0xff]
    %v461 = vld [vmem:[#allocation2 + $0xc88] sm:$0xff]
    %v462 = vld [vmem:[#allocation2 + $0xc90] sm:$0xff]
    %v463 = vld [vmem:[#allocation2 + $0xc98] sm:$0xff]
    %v464 = vld [vmem:[#allocation2 + $0xca0] sm:$0xff]
    %v465 = vld [vmem:[#allocation2 + $0xca8] sm:$0xff]
    %v466 = vld [vmem:[#allocation2 + $0xcb0] sm:$0xff]
    %v467 = vld [vmem:[#allocation2 + $0xcb8] sm:$0xff]
    %v468 = vld [vmem:[#allocation2 + $0xcc0] sm:$0xff]
    %v469 = vld [vmem:[#allocation2 + $0xcc8] sm:$0xff]
    %v470 = vld [vmem:[#allocation2 + $0xcd0] sm:$0xff]
    %v471 = vld [vmem:[#allocation2 + $0xcd8] sm:$0xff]
    %v472 = vld [vmem:[#allocation2 + $0xce0] sm:$0xff]
    %v473 = vld [vmem:[#allocation2 + $0xce8] sm:$0xff]
    %v474 = vld [vmem:[#allocation2 + $0xcf0] sm:$0xff]
    %v475 = vld [vmem:[#allocation2 + $0xcf8] sm:$0xff]
    %v476 = vld [vmem:[#allocation2 + $0xd00] sm:$0xff]
    %v477 = vld [vmem:[#allocation2 + $0xd08] sm:$0xff]
    %v478 = vld [vmem:[#allocation2 + $0xd10] sm:$0xff]
    %v479 = vld [vmem:[#allocation2 + $0xd18] sm:$0xff]
    %v480 = vld [vmem:[#allocation2 + $0xd20] sm:$0xff]
    %v481 = vld [vmem:[#allocation2 + $0xd28] sm:$0xff]
    %v482 = vld [vmem:[#allocation2 + $0xd30] sm:$0xff]
    %v483 = vld [vmem:[#allocation2 + $0xd38] sm:$0xff]
    %v484 = vld [vmem:[#allocation2 + $0xd40] sm:$0xff]
    %v485 = vld [vmem:[#allocation2 + $0xd48] sm:$0xff]
    %v486 = vld [vmem:[#allocation2 + $0xd50] sm:$0xff]
    %v487 = vld [vmem:[#allocation2 + $0xd58] sm:$0xff]
    %v488 = vld [vmem:[#allocation2 + $0xd60] sm:$0xff]
    %v489 = vld [vmem:[#allocation2 + $0xd68] sm:$0xff]
    %v490 = vld [vmem:[#allocation2 + $0xd70] sm:$0xff]
    %v491 = vld [vmem:[#allocation2 + $0xd78] sm:$0xff]
    %v492 = vld [vmem:[#allocation2 + $0xd80] sm:$0xff]
    %v493 = vld [vmem:[#allocation2 + $0xd88] sm:$0xff]
    %v494 = vld [vmem:[#allocation2 + $0xd90] sm:$0xff]
    %v495 = vld [vmem:[#allocation2 + $0xd98] sm:$0xff]
    %v496 = vld [vmem:[#allocation2 + $0xda0] sm:$0xff]
    %v497 = vld [vmem:[#allocation2 + $0xda8] sm:$0xff]
    %v498 = vld [vmem:[#allocation2 + $0xdb0] sm:$0xff]
    %v499 = vld [vmem:[#allocation2 + $0xdb8] sm:$0xff]
    %v500 = vld [vmem:[#allocation2 + $0xdc0] sm:$0xff]
    %v501 = vld [vmem:[#allocation2 + $0xdc8] sm:$0xff]
    %v502 = vld [vmem:[#allocation2 + $0xdd0] sm:$0xff]
    %v503 = vld [vmem:[#allocation2 + $0xdd8] sm:$0xff]
    %v504 = vld [vmem:[#allocation2 + $0xde0] sm:$0xff]
    %v505 = vld [vmem:[#allocation2 + $0xde8] sm:$0xff]
    %v506 = vld [vmem:[#allocation2 + $0xdf0] sm:$0xff]
    %v507 = vld [vmem:[#allocation2 + $0xdf8] sm:$0xff]
    %v508 = vld [vmem:[#allocation2 + $0xe00] sm:$0xff]
    %v509 = vld [vmem:[#allocation2 + $0xe08] sm:$0xff]
    %v510 = vld [vmem:[#allocation2 + $0xe10] sm:$0xff]
    %v511 = vld [vmem:[#allocation2 + $0xe18] sm:$0xff]
    %v512 = vld [vmem:[#allocation2 + $0xe20] sm:$0xff]
    %v513 = vld [vmem:[#allocation2 + $0xe28] sm:$0xff]
    %v514 = vld [vmem:[#allocation2 + $0xe30] sm:$0xff]
    %v515 = vld [vmem:[#allocation2 + $0xe38] sm:$0xff]
    %v516 = vld [vmem:[#allocation2 + $0xe40] sm:$0xff]
    %v517 = vld [vmem:[#allocation2 + $0xe48] sm:$0xff]
    %v518 = vld [vmem:[#allocation2 + $0xe50] sm:$0xff]
    %v519 = vld [vmem:[#allocation2 + $0xe58] sm:$0xff]
    %v520 = vld [vmem:[#allocation2 + $0xe60] sm:$0xff]
    %v521 = vld [vmem:[#allocation2 + $0xe68] sm:$0xff]
    %v522 = vld [vmem:[#allocation2 + $0xe70] sm:$0xff]
    %v523 = vld [vmem:[#allocation2 + $0xe78] sm:$0xff]
    %v524 = vld [vmem:[#allocation2 + $0xe80] sm:$0xff]
    %v525 = vld [vmem:[#allocation2 + $0xe88] sm:$0xff]
    %v526 = vld [vmem:[#allocation2 + $0xe90] sm:$0xff]
    %v527 = vld [vmem:[#allocation2 + $0xe98] sm:$0xff]
    %v528 = vld [vmem:[#allocation2 + $0xea0] sm:$0xff]
    %v529 = vld [vmem:[#allocation2 + $0xea8] sm:$0xff]
    %v530 = vld [vmem:[#allocation2 + $0xeb0] sm:$0xff]
    %v531 = vld [vmem:[#allocation2 + $0xeb8] sm:$0xff]
    %v532 = vld [vmem:[#allocation2 + $0xec0] sm:$0xff]
    %v533 = vld [vmem:[#allocation2 + $0xec8] sm:$0xff]
    %v534 = vld [vmem:[#allocation2 + $0xed0] sm:$0xff]
    %v535 = vld [vmem:[#allocation2 + $0xed8] sm:$0xff]
    %v536 = vld [vmem:[#allocation2 + $0xee0] sm:$0xff]
    %v537 = vld [vmem:[#allocation2 + $0xee8] sm:$0xff]
    %v538 = vld [vmem:[#allocation2 + $0xef0] sm:$0xff]
    %v539 = vld [vmem:[#allocation2 + $0xef8] sm:$0xff]
    %v540 = vld [vmem:[#allocation2 + $0xf00] sm:$0xff]
    %v541 = vld [vmem:[#allocation2 + $0xf08] sm:$0xff]
    %v542 = vld [vmem:[#allocation2 + $0xf10] sm:$0xff]
    %v543 = vld [vmem:[#allocation2 + $0xf18] sm:$0xff]
    %v544 = vld [vmem:[#allocation2 + $0xf20] sm:$0xff]
    %v545 = vld [vmem:[#allocation2 + $0xf28] sm:$0xff]
    %v546 = vld [vmem:[#allocation2 + $0xf30] sm:$0xff]
    %v547 = vld [vmem:[#allocation2 + $0xf38] sm:$0xff]
    %v548 = vld [vmem:[#allocation2 + $0xf40] sm:$0xff]
    %v549 = vld [vmem:[#allocation2 + $0xf48] sm:$0xff]
    %v550 = vld [vmem:[#allocation2 + $0xf50] sm:$0xff]
    %v551 = vld [vmem:[#allocation2 + $0xf58] sm:$0xff]
    %v552 = vld [vmem:[#allocation2 + $0xf60] sm:$0xff]
    %v553 = vld [vmem:[#allocation2 + $0xf68] sm:$0xff]
    %v554 = vld [vmem:[#allocation2 + $0xf70] sm:$0xff]
    %v555 = vld [vmem:[#allocation2 + $0xf78] sm:$0xff]
    %v556 = vld [vmem:[#allocation2 + $0xf80] sm:$0xff]
    %v557 = vld [vmem:[#allocation2 + $0xf88] sm:$0xff]
    %v558 = vld [vmem:[#allocation2 + $0xf90] sm:$0xff]
    %v559 = vld [vmem:[#allocation2 + $0xf98] sm:$0xff]
    %v560 = vld [vmem:[#allocation2 + $0xfa0] sm:$0xff]
    %v561 = vld [vmem:[#allocation2 + $0xfa8] sm:$0xff]
    %v562 = vld [vmem:[#allocation2 + $0xfb0] sm:$0xff]
    %v563 = vld [vmem:[#allocation2 + $0xfb8] sm:$0xff]
    %v564 = vld [vmem:[#allocation2 + $0xfc0] sm:$0xff]
    %v565 = vld [vmem:[#allocation2 + $0xfc8] sm:$0xff]
    %v566 = vld [vmem:[#allocation2 + $0xfd0] sm:$0xff]
    %v567 = vld [vmem:[#allocation2 + $0xfd8] sm:$0xff]
    %v568 = vld [vmem:[#allocation2 + $0xfe0] sm:$0xff]
    %v569 = vld [vmem:[#allocation2 + $0xfe8] sm:$0xff]
    %v570 = vld [vmem:[#allocation2 + $0xff0] sm:$0xff]
    %v571 = vld [vmem:[#allocation2 + $0xff8] sm:$0xff]
    %v572 = vld [vmem:[#allocation2 + $0x1000] sm:$0xff]
    %v573 = vld [vmem:[#allocation2 + $0x1008] sm:$0xff]
    %v574 = vld [vmem:[#allocation2 + $0x1010] sm:$0xff]
    %v575 = vld [vmem:[#allocation2 + $0x1018] sm:$0xff]
    %v576 = vld [vmem:[#allocation2 + $0x1020] sm:$0xff]
    %v577 = vld [vmem:[#allocation2 + $0x1028] sm:$0xff]
    %v578 = vld [vmem:[#allocation2 + $0x1030] sm:$0xff]
    %v579 = vld [vmem:[#allocation2 + $0x1038] sm:$0xff]
    %v580 = vld [vmem:[#allocation2 + $0x1040] sm:$0xff]
    %v581 = vld [vmem:[#allocation2 + $0x1048] sm:$0xff]
    %v582 = vld [vmem:[#allocation2 + $0x1050] sm:$0xff]
    %v583 = vld [vmem:[#allocation2 + $0x1058] sm:$0xff]
    %v584 = vld [vmem:[#allocation2 + $0x1060] sm:$0xff]
    %v585 = vld [vmem:[#allocation2 + $0x1068] sm:$0xff]
    %v586 = vld [vmem:[#allocation2 + $0x1070] sm:$0xff]
    %v587 = vld [vmem:[#allocation2 + $0x1078] sm:$0xff]
    %v588 = vld [vmem:[#allocation2 + $0x1080] sm:$0xff]
    %v589 = vld [vmem:[#allocation2 + $0x1088] sm:$0xff]
    %v590 = vld [vmem:[#allocation2 + $0x1090] sm:$0xff]
    %v591 = vld [vmem:[#allocation2 + $0x1098] sm:$0xff]
    %v592 = vld [vmem:[#allocation2 + $0x10a0] sm:$0xff]
    %v593 = vld [vmem:[#allocation2 + $0x10a8] sm:$0xff]
    %v594 = vld [vmem:[#allocation2 + $0x10b0] sm:$0xff]
    %v595 = vld [vmem:[#allocation2 + $0x10b8] sm:$0xff]
    %v596 = vld [vmem:[#allocation2 + $0x10c0] sm:$0xff]
    %v597 = vld [vmem:[#allocation2 + $0x10c8] sm:$0xff]
    %v598 = vld [vmem:[#allocation2 + $0x10d0] sm:$0xff]
    %v599 = vld [vmem:[#allocation2 + $0x10d8] sm:$0xff]
    %v600 = vld [vmem:[#allocation2 + $0x10e0] sm:$0xff]
    %v601 = vld [vmem:[#allocation2 + $0x10e8] sm:$0xff]
    %v602 = vld [vmem:[#allocation2 + $0x10f0] sm:$0xff]
    %v603 = vld [vmem:[#allocation2 + $0x10f8] sm:$0xff]
    %v604 = vld [vmem:[#allocation2 + $0x1100] sm:$0xff]
    %v605 = vld [vmem:[#allocation2 + $0x1108] sm:$0xff]
    %v606 = vld [vmem:[#allocation2 + $0x1110] sm:$0xff]
    %v607 = vld [vmem:[#allocation2 + $0x1118] sm:$0xff]
    %v608 = vld [vmem:[#allocation2 + $0x1120] sm:$0xff]
    %v609 = vld [vmem:[#allocation2 + $0x1128] sm:$0xff]
    %v610 = vld [vmem:[#allocation2 + $0x1130] sm:$0xff]
    %v611 = vld [vmem:[#allocation2 + $0x1138] sm:$0xff]
    %v612 = vld [vmem:[#allocation2 + $0x1140] sm:$0xff]
    %v613 = vld [vmem:[#allocation2 + $0x1148] sm:$0xff]
    %v614 = vld [vmem:[#allocation2 + $0x1150] sm:$0xff]
    %v615 = vld [vmem:[#allocation2 + $0x1158] sm:$0xff]
    %v616 = vld [vmem:[#allocation2 + $0x1160] sm:$0xff]
    %v617 = vld [vmem:[#allocation2 + $0x1168] sm:$0xff]
    %v618 = vld [vmem:[#allocation2 + $0x1170] sm:$0xff]
    %v619 = vld [vmem:[#allocation2 + $0x1178] sm:$0xff]
    %v620 = vld [vmem:[#allocation2 + $0x1180] sm:$0xff]
    %v621 = vld [vmem:[#allocation2 + $0x1188] sm:$0xff]
    %v622 = vld [vmem:[#allocation2 + $0x1190] sm:$0xff]
    %v623 = vld [vmem:[#allocation2 + $0x1198] sm:$0xff]
    %v624 = vld [vmem:[#allocation2 + $0x11a0] sm:$0xff]
    %v625 = vld [vmem:[#allocation2 + $0x11a8] sm:$0xff]
    %v626 = vld [vmem:[#allocation2 + $0x11b0] sm:$0xff]
    %v627 = vld [vmem:[#allocation2 + $0x11b8] sm:$0xff]
    %v628 = vld [vmem:[#allocation2 + $0x11c0] sm:$0xff]
    %v629 = vld [vmem:[#allocation2 + $0x11c8] sm:$0xff]
    %v630 = vld [vmem:[#allocation2 + $0x11d0] sm:$0xff]
    %v631 = vld [vmem:[#allocation2 + $0x11d8] sm:$0xff]
    %v632 = vld [vmem:[#allocation2 + $0x11e0] sm:$0xff]
    %v633 = vld [vmem:[#allocation2 + $0x11e8] sm:$0xff]
    %v634 = vld [vmem:[#allocation2 + $0x11f0] sm:$0xff]
    %v635 = vld [vmem:[#allocation2 + $0x11f8] sm:$0xff]
    %v636 = vld [vmem:[#allocation2 + $0x1200] sm:$0xff]
    %v637 = vld [vmem:[#allocation2 + $0x1208] sm:$0xff]
    %v638 = vld [vmem:[#allocation2 + $0x1210] sm:$0xff]
    %v639 = vld [vmem:[#allocation2 + $0x1218] sm:$0xff]
    %v640 = vld [vmem:[#allocation2 + $0x1220] sm:$0xff]
    %v641 = vld [vmem:[#allocation2 + $0x1228] sm:$0xff]
    %v642 = vld [vmem:[#allocation2 + $0x1230] sm:$0xff]
    %v643 = vld [vmem:[#allocation2 + $0x1238] sm:$0xff]
    %v644 = vld [vmem:[#allocation2 + $0x1240] sm:$0xff]
    %v645 = vld [vmem:[#allocation2 + $0x1248] sm:$0xff]
    %v646 = vld [vmem:[#allocation2 + $0x1250] sm:$0xff]
    %v647 = vld [vmem:[#allocation2 + $0x1258] sm:$0xff]
    %v648 = vld [vmem:[#allocation2 + $0x1260] sm:$0xff]
    %v649 = vld [vmem:[#allocation2 + $0x1268] sm:$0xff]
    %v650 = vld [vmem:[#allocation2 + $0x1270] sm:$0xff]
    %v651 = vld [vmem:[#allocation2 + $0x1278] sm:$0xff]
    %v652 = vld [vmem:[#allocation2 + $0x1280] sm:$0xff]
    %v653 = vld [vmem:[#allocation2 + $0x1288] sm:$0xff]
    %v654 = vld [vmem:[#allocation2 + $0x1290] sm:$0xff]
    %v655 = vld [vmem:[#allocation2 + $0x1298] sm:$0xff]
    %v656 = vld [vmem:[#allocation2 + $0x12a0] sm:$0xff]
    %v657 = vld [vmem:[#allocation2 + $0x12a8] sm:$0xff]
    %v658 = vld [vmem:[#allocation2 + $0x12b0] sm:$0xff]
    %v659 = vld [vmem:[#allocation2 + $0x12b8] sm:$0xff]
    %v660 = vld [vmem:[#allocation2 + $0x12c0] sm:$0xff]
    %v661 = vld [vmem:[#allocation2 + $0x12c8] sm:$0xff]
    %v662 = vld [vmem:[#allocation2 + $0x12d0] sm:$0xff]
    %v663 = vld [vmem:[#allocation2 + $0x12d8] sm:$0xff]
    %v664 = vld [vmem:[#allocation2 + $0x12e0] sm:$0xff]
    %v665 = vld [vmem:[#allocation2 + $0x12e8] sm:$0xff]
    %v666 = vld [vmem:[#allocation2 + $0x12f0] sm:$0xff]
    %v667 = vld [vmem:[#allocation2 + $0x12f8] sm:$0xff]
    %v668 = vld [vmem:[#allocation2 + $0x1300] sm:$0xff]
    %v669 = vld [vmem:[#allocation2 + $0x1308] sm:$0xff]
    %v670 = vld [vmem:[#allocation2 + $0x1310] sm:$0xff]
    %v671 = vld [vmem:[#allocation2 + $0x1318] sm:$0xff]
    %v672 = vld [vmem:[#allocation2 + $0x1320] sm:$0xff]
    %v673 = vld [vmem:[#allocation2 + $0x1328] sm:$0xff]
    %v674 = vld [vmem:[#allocation2 + $0x1330] sm:$0xff]
    %v675 = vld [vmem:[#allocation2 + $0x1338] sm:$0xff]
    %v676 = vld [vmem:[#allocation2 + $0x1340] sm:$0xff]
    %v677 = vld [vmem:[#allocation2 + $0x1348] sm:$0xff]
    %v678 = vld [vmem:[#allocation2 + $0x1350] sm:$0xff]
    %v679 = vld [vmem:[#allocation2 + $0x1358] sm:$0xff]
    %v680 = vld [vmem:[#allocation2 + $0x1360] sm:$0xff]
    %v681 = vld [vmem:[#allocation2 + $0x1368] sm:$0xff]
    %v682 = vld [vmem:[#allocation2 + $0x1370] sm:$0xff]
    %v683 = vld [vmem:[#allocation2 + $0x1378] sm:$0xff]
    %v684 = vld [vmem:[#allocation2 + $0x1380] sm:$0xff]
    %v685 = vld [vmem:[#allocation2 + $0x1388] sm:$0xff]
    %v686 = vld [vmem:[#allocation2 + $0x1390] sm:$0xff]
    %v687 = vld [vmem:[#allocation2 + $0x1398] sm:$0xff]
    %v688 = vld [vmem:[#allocation2 + $0x13a0] sm:$0xff]
    %v689 = vld [vmem:[#allocation2 + $0x13a8] sm:$0xff]
    %v690 = vld [vmem:[#allocation2 + $0x13b0] sm:$0xff]
    %v691 = vld [vmem:[#allocation2 + $0x13b8] sm:$0xff]
    %v692 = vld [vmem:[#allocation2 + $0x13c0] sm:$0xff]
    %v693 = vld [vmem:[#allocation2 + $0x13c8] sm:$0xff]
    %v694 = vld [vmem:[#allocation2 + $0x13d0] sm:$0xff]
    %v695 = vld [vmem:[#allocation2 + $0x13d8] sm:$0xff]
    %v696 = vld [vmem:[#allocation2 + $0x13e0] sm:$0xff]
    %v697 = vld [vmem:[#allocation2 + $0x13e8] sm:$0xff]
    %v698 = vld [vmem:[#allocation2 + $0x13f0] sm:$0xff]
    %v699 = vld [vmem:[#allocation2 + $0x13f8] sm:$0xff]
    %v700 = vld [vmem:[#allocation2 + $0x1400] sm:$0xff]
    %v701 = vld [vmem:[#allocation2 + $0x1408] sm:$0xff]
    %v702 = vld [vmem:[#allocation2 + $0x1410] sm:$0xff]
    %v703 = vld [vmem:[#allocation2 + $0x1418] sm:$0xff]
    %v704 = vld [vmem:[#allocation2 + $0x1420] sm:$0xff]
    %v705 = vld [vmem:[#allocation2 + $0x1428] sm:$0xff]
    %v706 = vld [vmem:[#allocation2 + $0x1430] sm:$0xff]
    %v707 = vld [vmem:[#allocation2 + $0x1438] sm:$0xff]
    %v708 = vld [vmem:[#allocation2 + $0x1440] sm:$0xff]
    %v709 = vld [vmem:[#allocation2 + $0x1448] sm:$0xff]
    %v710 = vld [vmem:[#allocation2 + $0x1450] sm:$0xff]
    %v711 = vld [vmem:[#allocation2 + $0x1458] sm:$0xff]
    %v712 = vld [vmem:[#allocation2 + $0x1460] sm:$0xff]
    %v713 = vld [vmem:[#allocation2 + $0x1468] sm:$0xff]
    %v714 = vld [vmem:[#allocation2 + $0x1470] sm:$0xff]
    %v715 = vld [vmem:[#allocation2 + $0x1478] sm:$0xff]
    %v716 = vld [vmem:[#allocation2 + $0x1480] sm:$0xff]
    %v717 = vld [vmem:[#allocation2 + $0x1488] sm:$0xff]
    %v718 = vld [vmem:[#allocation2 + $0x1490] sm:$0xff]
    %v719 = vld [vmem:[#allocation2 + $0x1498] sm:$0xff]
    %v720 = vld [vmem:[#allocation2 + $0x14a0] sm:$0xff]
    %v721 = vld [vmem:[#allocation2 + $0x14a8] sm:$0xff]
    %v722 = vld [vmem:[#allocation2 + $0x14b0] sm:$0xff]
    %v723 = vld [vmem:[#allocation2 + $0x14b8] sm:$0xff]
    %v724 = vld [vmem:[#allocation2 + $0x14c0] sm:$0xff]
    %v725 = vld [vmem:[#allocation2 + $0x14c8] sm:$0xff]
    %v726 = vld [vmem:[#allocation2 + $0x14d0] sm:$0xff]
    %v727 = vld [vmem:[#allocation2 + $0x14d8] sm:$0xff]
    %v728 = vld [vmem:[#allocation2 + $0x14e0] sm:$0xff]
    %v729 = vld [vmem:[#allocation2 + $0x14e8] sm:$0xff]
    %v730 = vld [vmem:[#allocation2 + $0x14f0] sm:$0xff]
    %v731 = vld [vmem:[#allocation2 + $0x14f8] sm:$0xff]
    %v732 = vld [vmem:[#allocation2 + $0x1500] sm:$0xff]
    %v733 = vld [vmem:[#allocation2 + $0x1508] sm:$0xff]
    %v734 = vld [vmem:[#allocation2 + $0x1510] sm:$0xff]
    %v735 = vld [vmem:[#allocation2 + $0x1518] sm:$0xff]
    %v736 = vld [vmem:[#allocation2 + $0x1520] sm:$0xff]
    %v737 = vld [vmem:[#allocation2 + $0x1528] sm:$0xff]
    %v738 = vld [vmem:[#allocation2 + $0x1530] sm:$0xff]
    %v739 = vld [vmem:[#allocation2 + $0x1538] sm:$0xff]
    %v740 = vld [vmem:[#allocation2 + $0x1540] sm:$0xff]
    %v741 = vld [vmem:[#allocation2 + $0x1548] sm:$0xff]
    %v742 = vld [vmem:[#allocation2 + $0x1550] sm:$0xff]
    %v743 = vld [vmem:[#allocation2 + $0x1558] sm:$0xff]
    %v744 = vld [vmem:[#allocation2 + $0x1560] sm:$0xff]
    %v745 = vld [vmem:[#allocation2 + $0x1568] sm:$0xff]
    %v746 = vld [vmem:[#allocation2 + $0x1570] sm:$0xff]
    %v747 = vld [vmem:[#allocation2 + $0x1578] sm:$0xff]
    %v748 = vld [vmem:[#allocation2 + $0x1580] sm:$0xff]
    %v749 = vld [vmem:[#allocation2 + $0x1588] sm:$0xff]
    %v750 = vld [vmem:[#allocation2 + $0x1590] sm:$0xff]
    %v751 = vld [vmem:[#allocation2 + $0x1598] sm:$0xff]
    %v752 = vld [vmem:[#allocation2 + $0x15a0] sm:$0xff]
    %v753 = vld [vmem:[#allocation2 + $0x15a8] sm:$0xff]
    %v754 = vld [vmem:[#allocation2 + $0x15b0] sm:$0xff]
    %v755 = vld [vmem:[#allocation2 + $0x15b8] sm:$0xff]
    %v756 = vld [vmem:[#allocation2 + $0x15c0] sm:$0xff]
    %v757 = vld [vmem:[#allocation2 + $0x15c8] sm:$0xff]
    %v758 = vld [vmem:[#allocation2 + $0x15d0] sm:$0xff]
    %v759 = vld [vmem:[#allocation2 + $0x15d8] sm:$0xff]
    %v760 = vld [vmem:[#allocation2 + $0x15e0] sm:$0xff]
    %v761 = vld [vmem:[#allocation2 + $0x15e8] sm:$0xff]
    %v762 = vld [vmem:[#allocation2 + $0x15f0] sm:$0xff]
    %v763 = vld [vmem:[#allocation2 + $0x15f8] sm:$0xff]
    %v764 = vld [vmem:[#allocation2 + $0x1600] sm:$0xff]
    %v765 = vld [vmem:[#allocation2 + $0x1608] sm:$0xff]
    %v766 = vld [vmem:[#allocation2 + $0x1610] sm:$0xff]
    %v767 = vld [vmem:[#allocation2 + $0x1618] sm:$0xff]
    %v768 = vld [vmem:[#allocation2 + $0x1620] sm:$0xff]
    %v769 = vld [vmem:[#allocation2 + $0x1628] sm:$0xff]
    %v770 = vld [vmem:[#allocation2 + $0x1630] sm:$0xff]
    %v771 = vld [vmem:[#allocation2 + $0x1638] sm:$0xff]
    %v772 = vld [vmem:[#allocation2 + $0x1640] sm:$0xff]
    %v773 = vld [vmem:[#allocation2 + $0x1648] sm:$0xff]
    %v774 = vld [vmem:[#allocation2 + $0x1650] sm:$0xff]
    %v775 = vld [vmem:[#allocation2 + $0x1658] sm:$0xff]
    %v776 = vld [vmem:[#allocation2 + $0x1660] sm:$0xff]
    %v777 = vld [vmem:[#allocation2 + $0x1668] sm:$0xff]
    %v778 = vld [vmem:[#allocation2 + $0x1670] sm:$0xff]
    %v779 = vld [vmem:[#allocation2 + $0x1678] sm:$0xff]
    %v780 = vld [vmem:[#allocation2 + $0x1680] sm:$0xff]
    %v781 = vld [vmem:[#allocation2 + $0x1688] sm:$0xff]
    %v782 = vld [vmem:[#allocation2 + $0x1690] sm:$0xff]
    %v783 = vld [vmem:[#allocation2 + $0x1698] sm:$0xff]
    %v784 = vld [vmem:[#allocation2 + $0x16a0] sm:$0xff]
    %v785 = vld [vmem:[#allocation2 + $0x16a8] sm:$0xff]
    %v786 = vld [vmem:[#allocation2 + $0x16b0] sm:$0xff]
    %v787 = vld [vmem:[#allocation2 + $0x16b8] sm:$0xff]
    %v788 = vld [vmem:[#allocation2 + $0x16c0] sm:$0xff]
    %v789 = vld [vmem:[#allocation2 + $0x16c8] sm:$0xff]
    %v790 = vld [vmem:[#allocation2 + $0x16d0] sm:$0xff]
    %v791 = vld [vmem:[#allocation2 + $0x16d8] sm:$0xff]
    %v792 = vld [vmem:[#allocation2 + $0x16e0] sm:$0xff]
    %v793 = vld [vmem:[#allocation2 + $0x16e8] sm:$0xff]
    %v794 = vld [vmem:[#allocation2 + $0x16f0] sm:$0xff]
    %v795 = vld [vmem:[#allocation2 + $0x16f8] sm:$0xff]
    %v796 = vld [vmem:[#allocation2 + $0x1700] sm:$0xff]
    %v797 = vld [vmem:[#allocation2 + $0x1708] sm:$0xff]
    %v798 = vld [vmem:[#allocation2 + $0x1710] sm:$0xff]
    %v799 = vld [vmem:[#allocation2 + $0x1718] sm:$0xff]
    %v800 = vld [vmem:[#allocation2 + $0x1720] sm:$0xff]
    %v801 = vld [vmem:[#allocation2 + $0x1728] sm:$0xff]
    %v802 = vld [vmem:[#allocation2 + $0x1730] sm:$0xff]
    %v803 = vld [vmem:[#allocation2 + $0x1738] sm:$0xff]
    %v804 = vld [vmem:[#allocation2 + $0x1740] sm:$0xff]
    %v805 = vld [vmem:[#allocation2 + $0x1748] sm:$0xff]
    %v806 = vld [vmem:[#allocation2 + $0x1750] sm:$0xff]
    %v807 = vld [vmem:[#allocation2 + $0x1758] sm:$0xff]
    %v808 = vld [vmem:[#allocation2 + $0x1760] sm:$0xff]
    %v809 = vld [vmem:[#allocation2 + $0x1768] sm:$0xff]
    %v810 = vld [vmem:[#allocation2 + $0x1770] sm:$0xff]
    %v811 = vld [vmem:[#allocation2 + $0x1778] sm:$0xff]
    %v812 = vld [vmem:[#allocation2 + $0x1780] sm:$0xff]
    %v813 = vld [vmem:[#allocation2 + $0x1788] sm:$0xff]
    %v814 = vld [vmem:[#allocation2 + $0x1790] sm:$0xff]
    %v815 = vld [vmem:[#allocation2 + $0x1798] sm:$0xff]
    %v816 = vld [vmem:[#allocation2 + $0x17a0] sm:$0xff]
    %v817 = vld [vmem:[#allocation2 + $0x17a8] sm:$0xff]
    %v818 = vld [vmem:[#allocation2 + $0x17b0] sm:$0xff]
    %v819 = vld [vmem:[#allocation2 + $0x17b8] sm:$0xff]
    %v820 = vld [vmem:[#allocation2 + $0x17c0] sm:$0xff]
    %v821 = vld [vmem:[#allocation2 + $0x17c8] sm:$0xff]
    %v822 = vld [vmem:[#allocation2 + $0x17d0] sm:$0xff]
    %v823 = vld [vmem:[#allocation2 + $0x17d8] sm:$0xff]
    %v824 = vld [vmem:[#allocation2 + $0x17e0] sm:$0xff]
    %v825 = vld [vmem:[#allocation2 + $0x17e8] sm:$0xff]
    %v826 = vld [vmem:[#allocation2 + $0x17f0] sm:$0xff]
    %v827 = vld [vmem:[#allocation2 + $0x17f8] sm:$0xff]
    %v828 = vld [vmem:[#allocation2 + $0x1800] sm:$0xff]
    %v829 = vld [vmem:[#allocation2 + $0x1808] sm:$0xff]
    %v830 = vld [vmem:[#allocation2 + $0x1810] sm:$0xff]
    %v831 = vld [vmem:[#allocation2 + $0x1818] sm:$0xff]
    %v832 = vld [vmem:[#allocation2 + $0x1820] sm:$0xff]
    %v833 = vld [vmem:[#allocation2 + $0x1828] sm:$0xff]
    %v834 = vld [vmem:[#allocation2 + $0x1830] sm:$0xff]
    %v835 = vld [vmem:[#allocation2 + $0x1838] sm:$0xff]
    %v836 = vld [vmem:[#allocation2 + $0x1840] sm:$0xff]
    %v837 = vld [vmem:[#allocation2 + $0x1848] sm:$0xff]
    %v838 = vld [vmem:[#allocation2 + $0x1850] sm:$0xff]
    %v839 = vld [vmem:[#allocation2 + $0x1858] sm:$0xff]
    %v840 = vld [vmem:[#allocation2 + $0x1860] sm:$0xff]
    %v841 = vld [vmem:[#allocation2 + $0x1868] sm:$0xff]
    %v842 = vld [vmem:[#allocation2 + $0x1870] sm:$0xff]
    %v843 = vld [vmem:[#allocation2 + $0x1878] sm:$0xff]
    %v844 = vld [vmem:[#allocation2 + $0x1880] sm:$0xff]
    %v845 = vld [vmem:[#allocation2 + $0x1888] sm:$0xff]
    %v846 = vld [vmem:[#allocation2 + $0x1890] sm:$0xff]
    %v847 = vld [vmem:[#allocation2 + $0x1898] sm:$0xff]
    %v848 = vld [vmem:[#allocation2 + $0x18a0] sm:$0xff]
    %v849 = vld [vmem:[#allocation2 + $0x18a8] sm:$0xff]
    %v850 = vld [vmem:[#allocation2 + $0x18b0] sm:$0xff]
    %v851 = vld [vmem:[#allocation2 + $0x18b8] sm:$0xff]
    %v852 = vld [vmem:[#allocation2 + $0x18c0] sm:$0xff]
    %v853 = vld [vmem:[#allocation2 + $0x18c8] sm:$0xff]
    %v854 = vld [vmem:[#allocation2 + $0x18d0] sm:$0xff]
    %v855 = vld [vmem:[#allocation2 + $0x18d8] sm:$0xff]
    %v856 = vld [vmem:[#allocation2 + $0x18e0] sm:$0xff]
    %v857 = vld [vmem:[#allocation2 + $0x18e8] sm:$0xff]
    %v858 = vld [vmem:[#allocation2 + $0x18f0] sm:$0xff]
    %v859 = vld [vmem:[#allocation2 + $0x18f8] sm:$0xff]
    %v860 = vld [vmem:[#allocation2 + $0x1900] sm:$0xff]
    %v861 = vld [vmem:[#allocation2 + $0x1908] sm:$0xff]
    %v862 = vld [vmem:[#allocation2 + $0x1910] sm:$0xff]
    %v863 = vld [vmem:[#allocation2 + $0x1918] sm:$0xff]
    %v864 = vld [vmem:[#allocation2 + $0x1920] sm:$0xff]
    %v865 = vld [vmem:[#allocation2 + $0x1928] sm:$0xff]
    %v866 = vld [vmem:[#allocation2 + $0x1930] sm:$0xff]
    %v867 = vld [vmem:[#allocation2 + $0x1938] sm:$0xff]
    %v868 = vld [vmem:[#allocation2 + $0x1940] sm:$0xff]
    %v869 = vld [vmem:[#allocation2 + $0x1948] sm:$0xff]
    %v870 = vld [vmem:[#allocation2 + $0x1950] sm:$0xff]
    %v871 = vld [vmem:[#allocation2 + $0x1958] sm:$0xff]
    %v872 = vld [vmem:[#allocation2 + $0x1960] sm:$0xff]
    %v873 = vld [vmem:[#allocation2 + $0x1968] sm:$0xff]
    %v874 = vld [vmem:[#allocation2 + $0x1970] sm:$0xff]
    %v875 = vld [vmem:[#allocation2 + $0x1978] sm:$0xff]
    %v876 = vld [vmem:[#allocation2 + $0x1980] sm:$0xff]
    %v877 = vld [vmem:[#allocation2 + $0x1988] sm:$0xff]
    %v878 = vld [vmem:[#allocation2 + $0x1990] sm:$0xff]
    %v879 = vld [vmem:[#allocation2 + $0x1998] sm:$0xff]
    %v880 = vld [vmem:[#allocation2 + $0x19a0] sm:$0xff]
    %v881 = vld [vmem:[#allocation2 + $0x19a8] sm:$0xff]
    %v882 = vld [vmem:[#allocation2 + $0x19b0] sm:$0xff]
    %v883 = vld [vmem:[#allocation2 + $0x19b8] sm:$0xff]
    %v884 = vld [vmem:[#allocation2 + $0x19c0] sm:$0xff]
    %v885 = vld [vmem:[#allocation2 + $0x19c8] sm:$0xff]
    %v886 = vld [vmem:[#allocation2 + $0x19d0] sm:$0xff]
    %v887 = vld [vmem:[#allocation2 + $0x19d8] sm:$0xff]
    %v888 = vld [vmem:[#allocation2 + $0x19e0] sm:$0xff]
    %v889 = vld [vmem:[#allocation2 + $0x19e8] sm:$0xff]
    %v890 = vld [vmem:[#allocation2 + $0x19f0] sm:$0xff]
    %v891 = vld [vmem:[#allocation2 + $0x19f8] sm:$0xff]
    %v892 = vld [vmem:[#allocation2 + $0x1a00] sm:$0xff]
    %v893 = vld [vmem:[#allocation2 + $0x1a08] sm:$0xff]
    %v894 = vld [vmem:[#allocation2 + $0x1a10] sm:$0xff]
    %v895 = vld [vmem:[#allocation2 + $0x1a18] sm:$0xff]
    %v896 = vld [vmem:[#allocation2 + $0x1a20] sm:$0xff]
    %v897 = vld [vmem:[#allocation2 + $0x1a28] sm:$0xff]
    %v898 = vld [vmem:[#allocation2 + $0x1a30] sm:$0xff]
    %v899 = vld [vmem:[#allocation2 + $0x1a38] sm:$0xff]
    %v900 = vld [vmem:[#allocation2 + $0x1a40] sm:$0xff]
    %v901 = vld [vmem:[#allocation2 + $0x1a48] sm:$0xff]
    %v902 = vld [vmem:[#allocation2 + $0x1a50] sm:$0xff]
    %v903 = vld [vmem:[#allocation2 + $0x1a58] sm:$0xff]
    %v904 = vld [vmem:[#allocation2 + $0x1a60] sm:$0xff]
    %v905 = vld [vmem:[#allocation2 + $0x1a68] sm:$0xff]
    %v906 = vld [vmem:[#allocation2 + $0x1a70] sm:$0xff]
    %v907 = vld [vmem:[#allocation2 + $0x1a78] sm:$0xff]
    %v908 = vld [vmem:[#allocation2 + $0x1a80] sm:$0xff]
    %v909 = vld [vmem:[#allocation2 + $0x1a88] sm:$0xff]
    %v910 = vld [vmem:[#allocation2 + $0x1a90] sm:$0xff]
    %v911 = vld [vmem:[#allocation2 + $0x1a98] sm:$0xff]
    %v912 = vld [vmem:[#allocation2 + $0x1aa0] sm:$0xff]
    %v913 = vld [vmem:[#allocation2 + $0x1aa8] sm:$0xff]
    %v914 = vld [vmem:[#allocation2 + $0x1ab0] sm:$0xff]
    %v915 = vld [vmem:[#allocation2 + $0x1ab8] sm:$0xff]
    %v916 = vld [vmem:[#allocation2 + $0x1ac0] sm:$0xff]
    %v917 = vld [vmem:[#allocation2 + $0x1ac8] sm:$0xff]
    %v918 = vld [vmem:[#allocation2 + $0x1ad0] sm:$0xff]
    %v919 = vld [vmem:[#allocation2 + $0x1ad8] sm:$0xff]
    %v920 = vld [vmem:[#allocation2 + $0x1ae0] sm:$0xff]
    %v921 = vld [vmem:[#allocation2 + $0x1ae8] sm:$0xff]
    %v922 = vld [vmem:[#allocation2 + $0x1af0] sm:$0xff]
    %v923 = vld [vmem:[#allocation2 + $0x1af8] sm:$0xff]
    %v924 = vld [vmem:[#allocation2 + $0x1b00] sm:$0xff]
    %v925 = vld [vmem:[#allocation2 + $0x1b08] sm:$0xff]
    %v926 = vld [vmem:[#allocation2 + $0x1b10] sm:$0xff]
    %v927 = vld [vmem:[#allocation2 + $0x1b18] sm:$0xff]
    %v928 = vld [vmem:[#allocation2 + $0x1b20] sm:$0xff]
    %v929 = vld [vmem:[#allocation2 + $0x1b28] sm:$0xff]
    %v930 = vld [vmem:[#allocation2 + $0x1b30] sm:$0xff]
    %v931 = vld [vmem:[#allocation2 + $0x1b38] sm:$0xff]
    %v932 = vld [vmem:[#allocation2 + $0x1b40] sm:$0xff]
    %v933 = vld [vmem:[#allocation2 + $0x1b48] sm:$0xff]
    %v934 = vld [vmem:[#allocation2 + $0x1b50] sm:$0xff]
    %v935 = vld [vmem:[#allocation2 + $0x1b58] sm:$0xff]
    %v936 = vld [vmem:[#allocation2 + $0x1b60] sm:$0xff]
    %v937 = vld [vmem:[#allocation2 + $0x1b68] sm:$0xff]
    %v938 = vld [vmem:[#allocation2 + $0x1b70] sm:$0xff]
    %v939 = vld [vmem:[#allocation2 + $0x1b78] sm:$0xff]
    %v940 = vld [vmem:[#allocation2 + $0x1b80] sm:$0xff]
    %v941 = vld [vmem:[#allocation2 + $0x1b88] sm:$0xff]
    %v942 = vld [vmem:[#allocation2 + $0x1b90] sm:$0xff]
    %v943 = vld [vmem:[#allocation2 + $0x1b98] sm:$0xff]
    %v944 = vld [vmem:[#allocation2 + $0x1ba0] sm:$0xff]
    %v945 = vld [vmem:[#allocation2 + $0x1ba8] sm:$0xff]
    %v946 = vld [vmem:[#allocation2 + $0x1bb0] sm:$0xff]
    %v947 = vld [vmem:[#allocation2 + $0x1bb8] sm:$0xff]
    %v948 = vld [vmem:[#allocation2 + $0x1bc0] sm:$0xff]
    %v949 = vld [vmem:[#allocation2 + $0x1bc8] sm:$0xff]
    %v950 = vld [vmem:[#allocation2 + $0x1bd0] sm:$0xff]
    %v951 = vld [vmem:[#allocation2 + $0x1bd8] sm:$0xff]
    %v952 = vld [vmem:[#allocation2 + $0x1be0] sm:$0xff]
    %v953 = vld [vmem:[#allocation2 + $0x1be8] sm:$0xff]
    %v954 = vld [vmem:[#allocation2 + $0x1bf0] sm:$0xff]
    %v955 = vld [vmem:[#allocation2 + $0x1bf8] sm:$0xff]
    %v956 = vld [vmem:[#allocation2 + $0x1c00] sm:$0xff]
    %v957 = vld [vmem:[#allocation2 + $0x1c08] sm:$0xff]
    %v958 = vld [vmem:[#allocation2 + $0x1c10] sm:$0xff]
    %v959 = vld [vmem:[#allocation2 + $0x1c18] sm:$0xff]
    %v960 = vld [vmem:[#allocation2 + $0x1c20] sm:$0xff]
    %v961 = vld [vmem:[#allocation2 + $0x1c28] sm:$0xff]
    %v962 = vld [vmem:[#allocation2 + $0x1c30] sm:$0xff]
    %v963 = vld [vmem:[#allocation2 + $0x1c38] sm:$0xff]
    %v964 = vld [vmem:[#allocation2 + $0x1c40] sm:$0xff]
    %v965 = vld [vmem:[#allocation2 + $0x1c48] sm:$0xff]
    %v966 = vld [vmem:[#allocation2 + $0x1c50] sm:$0xff]
    %v967 = vld [vmem:[#allocation2 + $0x1c58] sm:$0xff]
    %v968 = vld [vmem:[#allocation2 + $0x1c60] sm:$0xff]
    %v969 = vld [vmem:[#allocation2 + $0x1c68] sm:$0xff]
    %v970 = vld [vmem:[#allocation2 + $0x1c70] sm:$0xff]
    %v971 = vld [vmem:[#allocation2 + $0x1c78] sm:$0xff]
    %v972 = vld [vmem:[#allocation2 + $0x1c80] sm:$0xff]
    %v973 = vld [vmem:[#allocation2 + $0x1c88] sm:$0xff]
    %v974 = vld [vmem:[#allocation2 + $0x1c90] sm:$0xff]
    %v975 = vld [vmem:[#allocation2 + $0x1c98] sm:$0xff]
    %v976 = vld [vmem:[#allocation2 + $0x1ca0] sm:$0xff]
    %v977 = vld [vmem:[#allocation2 + $0x1ca8] sm:$0xff]
    %v978 = vld [vmem:[#allocation2 + $0x1cb0] sm:$0xff]
    %v979 = vld [vmem:[#allocation2 + $0x1cb8] sm:$0xff]
    %v980 = vld [vmem:[#allocation2 + $0x1cc0] sm:$0xff]
    %v981 = vld [vmem:[#allocation2 + $0x1cc8] sm:$0xff]
    %v982 = vld [vmem:[#allocation2 + $0x1cd0] sm:$0xff]
    %v983 = vld [vmem:[#allocation2 + $0x1cd8] sm:$0xff]
    %v984 = vld [vmem:[#allocation2 + $0x1ce0] sm:$0xff]
    %v985 = vld [vmem:[#allocation2 + $0x1ce8] sm:$0xff]
    %v986 = vld [vmem:[#allocation2 + $0x1cf0] sm:$0xff]
    %v987 = vld [vmem:[#allocation2 + $0x1cf8] sm:$0xff]
    %v988 = vld [vmem:[#allocation2 + $0x1d00] sm:$0xff]
    %v989 = vld [vmem:[#allocation2 + $0x1d08] sm:$0xff]
    %v990 = vld [vmem:[#allocation2 + $0x1d10] sm:$0xff]
    %v991 = vld [vmem:[#allocation2 + $0x1d18] sm:$0xff]
    %v992 = vld [vmem:[#allocation2 + $0x1d20] sm:$0xff]
    %v993 = vld [vmem:[#allocation2 + $0x1d28] sm:$0xff]
    %v994 = vld [vmem:[#allocation2 + $0x1d30] sm:$0xff]
    %v995 = vld [vmem:[#allocation2 + $0x1d38] sm:$0xff]
    %v996 = vld [vmem:[#allocation2 + $0x1d40] sm:$0xff]
    %v997 = vld [vmem:[#allocation2 + $0x1d48] sm:$0xff]
    %v998 = vld [vmem:[#allocation2 + $0x1d50] sm:$0xff]
    %v999 = vld [vmem:[#allocation2 + $0x1d58] sm:$0xff]
    %v1000 = vld [vmem:[#allocation2 + $0x1d60] sm:$0xff]
    %v1001 = vld [vmem:[#allocation2 + $0x1d68] sm:$0xff]
    %v1002 = vld [vmem:[#allocation2 + $0x1d70] sm:$0xff]
    %v1003 = vld [vmem:[#allocation2 + $0x1d78] sm:$0xff]
    %v1004 = vld [vmem:[#allocation2 + $0x1d80] sm:$0xff]
    %v1005 = vld [vmem:[#allocation2 + $0x1d88] sm:$0xff]
    %v1006 = vld [vmem:[#allocation2 + $0x1d90] sm:$0xff]
    %v1007 = vld [vmem:[#allocation2 + $0x1d98] sm:$0xff]
    %v1008 = vld [vmem:[#allocation2 + $0x1da0] sm:$0xff]
    %v1009 = vld [vmem:[#allocation2 + $0x1da8] sm:$0xff]
    %v1010 = vld [vmem:[#allocation2 + $0x1db0] sm:$0xff]
    %v1011 = vld [vmem:[#allocation2 + $0x1db8] sm:$0xff]
    %v1012 = vld [vmem:[#allocation2 + $0x1dc0] sm:$0xff]
    %v1013 = vld [vmem:[#allocation2 + $0x1dc8] sm:$0xff]
    %v1014 = vld [vmem:[#allocation2 + $0x1dd0] sm:$0xff]
    %v1015 = vld [vmem:[#allocation2 + $0x1dd8] sm:$0xff]
    %v1016 = vld [vmem:[#allocation2 + $0x1de0] sm:$0xff]
    %v1017 = vld [vmem:[#allocation2 + $0x1de8] sm:$0xff]
    %v1018 = vld [vmem:[#allocation2 + $0x1df0] sm:$0xff]
    %v1019 = vld [vmem:[#allocation2 + $0x1df8] sm:$0xff]
    %v1020 = vld [vmem:[#allocation2 + $0x1e00] sm:$0xff]
    %v1021 = vld [vmem:[#allocation2 + $0x1e08] sm:$0xff]
    %v1022 = vld [vmem:[#allocation2 + $0x1e10] sm:$0xff]
    %v1023 = vld [vmem:[#allocation2 + $0x1e18] sm:$0xff]
    %v1024 = vld [vmem:[#allocation2 + $0x1e20] sm:$0xff]
    %v1025 = vld [vmem:[#allocation2 + $0x1e28] sm:$0xff]
    %v1026 = vld [vmem:[#allocation2 + $0x1e30] sm:$0xff]
    %v1027 = vld [vmem:[#allocation2 + $0x1e38] sm:$0xff]
    %v1028 = vld [vmem:[#allocation2 + $0x1e40] sm:$0xff]
    %v1029 = vld [vmem:[#allocation2 + $0x1e48] sm:$0xff]
    %v1030 = vld [vmem:[#allocation2 + $0x1e50] sm:$0xff]
    %v1031 = vld [vmem:[#allocation2 + $0x1e58] sm:$0xff]
    %v1032 = vld [vmem:[#allocation2 + $0x1e60] sm:$0xff]
    %v1033 = vld [vmem:[#allocation2 + $0x1e68] sm:$0xff]
    %v1034 = vld [vmem:[#allocation2 + $0x1e70] sm:$0xff]
    %v1035 = vld [vmem:[#allocation2 + $0x1e78] sm:$0xff]
    %v1036 = vld [vmem:[#allocation2 + $0x1e80] sm:$0xff]
    %v1037 = vld [vmem:[#allocation2 + $0x1e88] sm:$0xff]
    %v1038 = vld [vmem:[#allocation2 + $0x1e90] sm:$0xff]
    %v1039 = vld [vmem:[#allocation2 + $0x1e98] sm:$0xff]
    %v1040 = vld [vmem:[#allocation2 + $0x1ea0] sm:$0xff]
    %v1041 = vld [vmem:[#allocation2 + $0x1ea8] sm:$0xff]
    %v1042 = vld [vmem:[#allocation2 + $0x1eb0] sm:$0xff]
    %v1043 = vld [vmem:[#allocation2 + $0x1eb8] sm:$0xff]
    %v1044 = vld [vmem:[#allocation2 + $0x1ec0] sm:$0xff]
    %v1045 = vld [vmem:[#allocation2 + $0x1ec8] sm:$0xff]
    %v1046 = vld [vmem:[#allocation2 + $0x1ed0] sm:$0xff]
    %v1047 = vld [vmem:[#allocation2 + $0x1ed8] sm:$0xff]
    %v1048 = vld [vmem:[#allocation2 + $0x1ee0] sm:$0xff]
    %v1049 = vld [vmem:[#allocation2 + $0x1ee8] sm:$0xff]
    %v1050 = vld [vmem:[#allocation2 + $0x1ef0] sm:$0xff]
    %v1051 = vld [vmem:[#allocation2 + $0x1ef8] sm:$0xff]
    %v1052 = vld [vmem:[#allocation2 + $0x1f00] sm:$0xff]
    %v1053 = vld [vmem:[#allocation2 + $0x1f08] sm:$0xff]
    %v1054 = vld [vmem:[#allocation2 + $0x1f10] sm:$0xff]
    %v1055 = vld [vmem:[#allocation2 + $0x1f18] sm:$0xff]
    %v1056 = vld [vmem:[#allocation2 + $0x1f20] sm:$0xff]
    %v1057 = vld [vmem:[#allocation2 + $0x1f28] sm:$0xff]
    %v1058 = vld [vmem:[#allocation2 + $0x1f30] sm:$0xff]
    %v1059 = vld [vmem:[#allocation2 + $0x1f38] sm:$0xff]
    %v1060 = vld [vmem:[#allocation2 + $0x1f40] sm:$0xff]
    %v1061 = vld [vmem:[#allocation2 + $0x1f48] sm:$0xff]
    %v1062 = vld [vmem:[#allocation2 + $0x1f50] sm:$0xff]
    %v1063 = vld [vmem:[#allocation2 + $0x1f58] sm:$0xff]
    %v1064 = vld [vmem:[#allocation2 + $0x1f60] sm:$0xff]
    %v1065 = vld [vmem:[#allocation2 + $0x1f68] sm:$0xff]
    %v1066 = vld [vmem:[#allocation2 + $0x1f70] sm:$0xff]
    %v1067 = vld [vmem:[#allocation2 + $0x1f78] sm:$0xff]
    %v1068 = vld [vmem:[#allocation2 + $0x1f80] sm:$0xff]
    %v1069 = vld [vmem:[#allocation2 + $0x1f88] sm:$0xff]
    %v1070 = vld [vmem:[#allocation2 + $0x1f90] sm:$0xff]
    %v1071 = vld [vmem:[#allocation2 + $0x1f98] sm:$0xff]
    %v1072 = vld [vmem:[#allocation2 + $0x1fa0] sm:$0xff]
    %v1073 = vld [vmem:[#allocation2 + $0x1fa8] sm:$0xff]
    %v1074 = vld [vmem:[#allocation2 + $0x1fb0] sm:$0xff]
    %v1075 = vld [vmem:[#allocation2 + $0x1fb8] sm:$0xff]
    %v1076 = vld [vmem:[#allocation2 + $0x1fc0] sm:$0xff]
    %v1077 = vld [vmem:[#allocation2 + $0x1fc8] sm:$0xff]
    %v1078 = vld [vmem:[#allocation2 + $0x1fd0] sm:$0xff]
    %v1079 = vld [vmem:[#allocation2 + $0x1fd8] sm:$0xff]
    %v1080 = vld [vmem:[#allocation2 + $0x1fe0] sm:$0xff]
    %v1081 = vld [vmem:[#allocation2 + $0x1fe8] sm:$0xff]
    %v1082 = vld [vmem:[#allocation2 + $0x1ff0] sm:$0xff]
    %v1083 = vld [vmem:[#allocation2 + $0x1ff8] sm:$0xff]
    %v1084 = vld [vmem:[#allocation4] sm:$0xff]
    %v1086 = vperm.slane %v1084, 0
    %v1087 = vperm.slane %v1084, 1
    %v1088 = vperm.slane %v1084, 2
    %v1089 = vperm.slane %v1084, 3
    %v1090 = vperm.slane %v1084, 4
    %v1091 = vperm.slane %v1084, 5
    %v1092 = vperm.slane %v1084, 6
    %v1093 = vperm.slane %v1084, 7
    %v1118 = vunpack.c.l.b16 %v44
    %v1119 = vunpack.c.h.b16 %v44
    %v1120 = vunpack.c.l.b16 %v45
    %v1121 = vunpack.c.h.b16 %v45
    %v1122 = vunpack.c.l.b16 %v46
    %v1123 = vunpack.c.h.b16 %v46
    %v1124 = vunpack.c.l.b16 %v47
    %v1125 = vunpack.c.h.b16 %v47
    %v1126 = vunpack.c.l.b16 %v48
    %v1127 = vunpack.c.h.b16 %v48
    %v1128 = vunpack.c.l.b16 %v49
    %v1129 = vunpack.c.h.b16 %v49
    %v1130 = vunpack.c.l.b16 %v50
    %v1131 = vunpack.c.h.b16 %v50
    %v1132 = vunpack.c.l.b16 %v51
    %v1133 = vunpack.c.h.b16 %v51
    %v1134 = vunpack.c.l.b16 %v52
    %v1135 = vunpack.c.h.b16 %v52
    %v1136 = vunpack.c.l.b16 %v53
    %v1137 = vunpack.c.h.b16 %v53
    %v1138 = vunpack.c.l.b16 %v54
    %v1139 = vunpack.c.h.b16 %v54
    %v1140 = vunpack.c.l.b16 %v55
    %v1141 = vunpack.c.h.b16 %v55
    %v1142 = vunpack.c.l.b16 %v56
    %v1143 = vunpack.c.h.b16 %v56
    %v1144 = vunpack.c.l.b16 %v57
    %v1145 = vunpack.c.h.b16 %v57
    %v1146 = vunpack.c.l.b16 %v58
    %v1147 = vunpack.c.h.b16 %v58
    %v1148 = vunpack.c.l.b16 %v59
    %v1149 = vunpack.c.h.b16 %v59
    %v1150 = vpack.c.b16 %v1134, %v1118
    %v1151 = vpack.c.b16 %v1135, %v1119
    %v1152 = vpack.c.b16 %v1136, %v1120
    %v1153 = vpack.c.b16 %v1137, %v1121
    %v1154 = vpack.c.b16 %v1138, %v1122
    %v1155 = vpack.c.b16 %v1139, %v1123
    %v1156 = vpack.c.b16 %v1140, %v1124
    %v1157 = vpack.c.b16 %v1141, %v1125
    %v1158 = vpack.c.b16 %v1142, %v1126
    %v1159 = vpack.c.b16 %v1143, %v1127
    %v1160 = vpack.c.b16 %v1144, %v1128
    %v1161 = vpack.c.b16 %v1145, %v1129
    %v1162 = vpack.c.b16 %v1146, %v1130
    %v1163 = vpack.c.b16 %v1147, %v1131
    %v1164 = vpack.c.b16 %v1148, %v1132
    %v1165 = vpack.c.b16 %v1149, %v1133
    %v2206 = vunpack.c.l.b16 %v60
    %v2207 = vunpack.c.h.b16 %v60
    %v2208 = vunpack.c.l.b16 %v61
    %v2209 = vunpack.c.h.b16 %v61
    %v2210 = vunpack.c.l.b16 %v62
    %v2211 = vunpack.c.h.b16 %v62
    %v2212 = vunpack.c.l.b16 %v63
    %v2213 = vunpack.c.h.b16 %v63
    %v2214 = vunpack.c.l.b16 %v64
    %v2215 = vunpack.c.h.b16 %v64
    %v2216 = vunpack.c.l.b16 %v65
    %v2217 = vunpack.c.h.b16 %v65
    %v2218 = vunpack.c.l.b16 %v66
    %v2219 = vunpack.c.h.b16 %v66
    %v2220 = vunpack.c.l.b16 %v67
    %v2221 = vunpack.c.h.b16 %v67
    %v2222 = vunpack.c.l.b16 %v68
    %v2223 = vunpack.c.h.b16 %v68
    %v2224 = vunpack.c.l.b16 %v69
    %v2225 = vunpack.c.h.b16 %v69
    %v2226 = vunpack.c.l.b16 %v70
    %v2227 = vunpack.c.h.b16 %v70
    %v2228 = vunpack.c.l.b16 %v71
    %v2229 = vunpack.c.h.b16 %v71
    %v2230 = vunpack.c.l.b16 %v72
    %v2231 = vunpack.c.h.b16 %v72
    %v2232 = vunpack.c.l.b16 %v73
    %v2233 = vunpack.c.h.b16 %v73
    %v2234 = vunpack.c.l.b16 %v74
    %v2235 = vunpack.c.h.b16 %v74
    %v2236 = vunpack.c.l.b16 %v75
    %v2237 = vunpack.c.h.b16 %v75
    %v2238 = vunpack.c.l.b16 %v76
    %v2239 = vunpack.c.h.b16 %v76
    %v2240 = vunpack.c.l.b16 %v77
    %v2241 = vunpack.c.h.b16 %v77
    %v2242 = vunpack.c.l.b16 %v78
    %v2243 = vunpack.c.h.b16 %v78
    %v2244 = vunpack.c.l.b16 %v79
    %v2245 = vunpack.c.h.b16 %v79
    %v2246 = vunpack.c.l.b16 %v80
    %v2247 = vunpack.c.h.b16 %v80
    %v2248 = vunpack.c.l.b16 %v81
    %v2249 = vunpack.c.h.b16 %v81
    %v2250 = vunpack.c.l.b16 %v82
    %v2251 = vunpack.c.h.b16 %v82
    %v2252 = vunpack.c.l.b16 %v83
    %v2253 = vunpack.c.h.b16 %v83
    %v2254 = vunpack.c.l.b16 %v84
    %v2255 = vunpack.c.h.b16 %v84
    %v2256 = vunpack.c.l.b16 %v85
    %v2257 = vunpack.c.h.b16 %v85
    %v2258 = vunpack.c.l.b16 %v86
    %v2259 = vunpack.c.h.b16 %v86
    %v2260 = vunpack.c.l.b16 %v87
    %v2261 = vunpack.c.h.b16 %v87
    %v2262 = vunpack.c.l.b16 %v88
    %v2263 = vunpack.c.h.b16 %v88
    %v2264 = vunpack.c.l.b16 %v89
    %v2265 = vunpack.c.h.b16 %v89
    %v2266 = vunpack.c.l.b16 %v90
    %v2267 = vunpack.c.h.b16 %v90
    %v2268 = vunpack.c.l.b16 %v91
    %v2269 = vunpack.c.h.b16 %v91
    %v2270 = vunpack.c.l.b16 %v92
    %v2271 = vunpack.c.h.b16 %v92
    %v2272 = vunpack.c.l.b16 %v93
    %v2273 = vunpack.c.h.b16 %v93
    %v2274 = vunpack.c.l.b16 %v94
    %v2275 = vunpack.c.h.b16 %v94
    %v2276 = vunpack.c.l.b16 %v95
    %v2277 = vunpack.c.h.b16 %v95
    %v2278 = vunpack.c.l.b16 %v96
    %v2279 = vunpack.c.h.b16 %v96
    %v2280 = vunpack.c.l.b16 %v97
    %v2281 = vunpack.c.h.b16 %v97
    %v2282 = vunpack.c.l.b16 %v98
    %v2283 = vunpack.c.h.b16 %v98
    %v2284 = vunpack.c.l.b16 %v99
    %v2285 = vunpack.c.h.b16 %v99
    %v2286 = vunpack.c.l.b16 %v100
    %v2287 = vunpack.c.h.b16 %v100
    %v2288 = vunpack.c.l.b16 %v101
    %v2289 = vunpack.c.h.b16 %v101
    %v2290 = vunpack.c.l.b16 %v102
    %v2291 = vunpack.c.h.b16 %v102
    %v2292 = vunpack.c.l.b16 %v103
    %v2293 = vunpack.c.h.b16 %v103
    %v2294 = vunpack.c.l.b16 %v104
    %v2295 = vunpack.c.h.b16 %v104
    %v2296 = vunpack.c.l.b16 %v105
    %v2297 = vunpack.c.h.b16 %v105
    %v2298 = vunpack.c.l.b16 %v106
    %v2299 = vunpack.c.h.b16 %v106
    %v2300 = vunpack.c.l.b16 %v107
    %v2301 = vunpack.c.h.b16 %v107
    %v2302 = vunpack.c.l.b16 %v108
    %v2303 = vunpack.c.h.b16 %v108
    %v2304 = vunpack.c.l.b16 %v109
    %v2305 = vunpack.c.h.b16 %v109
    %v2306 = vunpack.c.l.b16 %v110
    %v2307 = vunpack.c.h.b16 %v110
    %v2308 = vunpack.c.l.b16 %v111
    %v2309 = vunpack.c.h.b16 %v111
    %v2310 = vunpack.c.l.b16 %v112
    %v2311 = vunpack.c.h.b16 %v112
    %v2312 = vunpack.c.l.b16 %v113
    %v2313 = vunpack.c.h.b16 %v113
    %v2314 = vunpack.c.l.b16 %v114
    %v2315 = vunpack.c.h.b16 %v114
    %v2316 = vunpack.c.l.b16 %v115
    %v2317 = vunpack.c.h.b16 %v115
    %v2318 = vunpack.c.l.b16 %v116
    %v2319 = vunpack.c.h.b16 %v116
    %v2320 = vunpack.c.l.b16 %v117
    %v2321 = vunpack.c.h.b16 %v117
    %v2322 = vunpack.c.l.b16 %v118
    %v2323 = vunpack.c.h.b16 %v118
    %v2324 = vunpack.c.l.b16 %v119
    %v2325 = vunpack.c.h.b16 %v119
    %v2326 = vunpack.c.l.b16 %v120
    %v2327 = vunpack.c.h.b16 %v120
    %v2328 = vunpack.c.l.b16 %v121
    %v2329 = vunpack.c.h.b16 %v121
    %v2330 = vunpack.c.l.b16 %v122
    %v2331 = vunpack.c.h.b16 %v122
    %v2332 = vunpack.c.l.b16 %v123
    %v2333 = vunpack.c.h.b16 %v123
    %v2334 = vunpack.c.l.b16 %v124
    %v2335 = vunpack.c.h.b16 %v124
    %v2336 = vunpack.c.l.b16 %v125
    %v2337 = vunpack.c.h.b16 %v125
    %v2338 = vunpack.c.l.b16 %v126
    %v2339 = vunpack.c.h.b16 %v126
    %v2340 = vunpack.c.l.b16 %v127
    %v2341 = vunpack.c.h.b16 %v127
    %v2342 = vunpack.c.l.b16 %v128
    %v2343 = vunpack.c.h.b16 %v128
    %v2344 = vunpack.c.l.b16 %v129
    %v2345 = vunpack.c.h.b16 %v129
    %v2346 = vunpack.c.l.b16 %v130
    %v2347 = vunpack.c.h.b16 %v130
    %v2348 = vunpack.c.l.b16 %v131
    %v2349 = vunpack.c.h.b16 %v131
    %v2350 = vunpack.c.l.b16 %v132
    %v2351 = vunpack.c.h.b16 %v132
    %v2352 = vunpack.c.l.b16 %v133
    %v2353 = vunpack.c.h.b16 %v133
    %v2354 = vunpack.c.l.b16 %v134
    %v2355 = vunpack.c.h.b16 %v134
    %v2356 = vunpack.c.l.b16 %v135
    %v2357 = vunpack.c.h.b16 %v135
    %v2358 = vunpack.c.l.b16 %v136
    %v2359 = vunpack.c.h.b16 %v136
    %v2360 = vunpack.c.l.b16 %v137
    %v2361 = vunpack.c.h.b16 %v137
    %v2362 = vunpack.c.l.b16 %v138
    %v2363 = vunpack.c.h.b16 %v138
    %v2364 = vunpack.c.l.b16 %v139
    %v2365 = vunpack.c.h.b16 %v139
    %v2366 = vunpack.c.l.b16 %v140
    %v2367 = vunpack.c.h.b16 %v140
    %v2368 = vunpack.c.l.b16 %v141
    %v2369 = vunpack.c.h.b16 %v141
    %v2370 = vunpack.c.l.b16 %v142
    %v2371 = vunpack.c.h.b16 %v142
    %v2372 = vunpack.c.l.b16 %v143
    %v2373 = vunpack.c.h.b16 %v143
    %v2374 = vunpack.c.l.b16 %v144
    %v2375 = vunpack.c.h.b16 %v144
    %v2376 = vunpack.c.l.b16 %v145
    %v2377 = vunpack.c.h.b16 %v145
    %v2378 = vunpack.c.l.b16 %v146
    %v2379 = vunpack.c.h.b16 %v146
    %v2380 = vunpack.c.l.b16 %v147
    %v2381 = vunpack.c.h.b16 %v147
    %v2382 = vunpack.c.l.b16 %v148
    %v2383 = vunpack.c.h.b16 %v148
    %v2384 = vunpack.c.l.b16 %v149
    %v2385 = vunpack.c.h.b16 %v149
    %v2386 = vunpack.c.l.b16 %v150
    %v2387 = vunpack.c.h.b16 %v150
    %v2388 = vunpack.c.l.b16 %v151
    %v2389 = vunpack.c.h.b16 %v151
    %v2390 = vunpack.c.l.b16 %v152
    %v2391 = vunpack.c.h.b16 %v152
    %v2392 = vunpack.c.l.b16 %v153
    %v2393 = vunpack.c.h.b16 %v153
    %v2394 = vunpack.c.l.b16 %v154
    %v2395 = vunpack.c.h.b16 %v154
    %v2396 = vunpack.c.l.b16 %v155
    %v2397 = vunpack.c.h.b16 %v155
    %v2398 = vunpack.c.l.b16 %v156
    %v2399 = vunpack.c.h.b16 %v156
    %v2400 = vunpack.c.l.b16 %v157
    %v2401 = vunpack.c.h.b16 %v157
    %v2402 = vunpack.c.l.b16 %v158
    %v2403 = vunpack.c.h.b16 %v158
    %v2404 = vunpack.c.l.b16 %v159
    %v2405 = vunpack.c.h.b16 %v159
    %v2406 = vunpack.c.l.b16 %v160
    %v2407 = vunpack.c.h.b16 %v160
    %v2408 = vunpack.c.l.b16 %v161
    %v2409 = vunpack.c.h.b16 %v161
    %v2410 = vunpack.c.l.b16 %v162
    %v2411 = vunpack.c.h.b16 %v162
    %v2412 = vunpack.c.l.b16 %v163
    %v2413 = vunpack.c.h.b16 %v163
    %v2414 = vunpack.c.l.b16 %v164
    %v2415 = vunpack.c.h.b16 %v164
    %v2416 = vunpack.c.l.b16 %v165
    %v2417 = vunpack.c.h.b16 %v165
    %v2418 = vunpack.c.l.b16 %v166
    %v2419 = vunpack.c.h.b16 %v166
    %v2420 = vunpack.c.l.b16 %v167
    %v2421 = vunpack.c.h.b16 %v167
    %v2422 = vunpack.c.l.b16 %v168
    %v2423 = vunpack.c.h.b16 %v168
    %v2424 = vunpack.c.l.b16 %v169
    %v2425 = vunpack.c.h.b16 %v169
    %v2426 = vunpack.c.l.b16 %v170
    %v2427 = vunpack.c.h.b16 %v170
    %v2428 = vunpack.c.l.b16 %v171
    %v2429 = vunpack.c.h.b16 %v171
    %v2430 = vunpack.c.l.b16 %v172
    %v2431 = vunpack.c.h.b16 %v172
    %v2432 = vunpack.c.l.b16 %v173
    %v2433 = vunpack.c.h.b16 %v173
    %v2434 = vunpack.c.l.b16 %v174
    %v2435 = vunpack.c.h.b16 %v174
    %v2436 = vunpack.c.l.b16 %v175
    %v2437 = vunpack.c.h.b16 %v175
    %v2438 = vunpack.c.l.b16 %v176
    %v2439 = vunpack.c.h.b16 %v176
    %v2440 = vunpack.c.l.b16 %v177
    %v2441 = vunpack.c.h.b16 %v177
    %v2442 = vunpack.c.l.b16 %v178
    %v2443 = vunpack.c.h.b16 %v178
    %v2444 = vunpack.c.l.b16 %v179
    %v2445 = vunpack.c.h.b16 %v179
    %v2446 = vunpack.c.l.b16 %v180
    %v2447 = vunpack.c.h.b16 %v180
    %v2448 = vunpack.c.l.b16 %v181
    %v2449 = vunpack.c.h.b16 %v181
    %v2450 = vunpack.c.l.b16 %v182
    %v2451 = vunpack.c.h.b16 %v182
    %v2452 = vunpack.c.l.b16 %v183
    %v2453 = vunpack.c.h.b16 %v183
    %v2454 = vunpack.c.l.b16 %v184
    %v2455 = vunpack.c.h.b16 %v184
    %v2456 = vunpack.c.l.b16 %v185
    %v2457 = vunpack.c.h.b16 %v185
    %v2458 = vunpack.c.l.b16 %v186
    %v2459 = vunpack.c.h.b16 %v186
    %v2460 = vunpack.c.l.b16 %v187
    %v2461 = vunpack.c.h.b16 %v187
    %v2462 = vunpack.c.l.b16 %v188
    %v2463 = vunpack.c.h.b16 %v188
    %v2464 = vunpack.c.l.b16 %v189
    %v2465 = vunpack.c.h.b16 %v189
    %v2466 = vunpack.c.l.b16 %v190
    %v2467 = vunpack.c.h.b16 %v190
    %v2468 = vunpack.c.l.b16 %v191
    %v2469 = vunpack.c.h.b16 %v191
    %v2470 = vunpack.c.l.b16 %v192
    %v2471 = vunpack.c.h.b16 %v192
    %v2472 = vunpack.c.l.b16 %v193
    %v2473 = vunpack.c.h.b16 %v193
    %v2474 = vunpack.c.l.b16 %v194
    %v2475 = vunpack.c.h.b16 %v194
    %v2476 = vunpack.c.l.b16 %v195
    %v2477 = vunpack.c.h.b16 %v195
    %v2478 = vunpack.c.l.b16 %v196
    %v2479 = vunpack.c.h.b16 %v196
    %v2480 = vunpack.c.l.b16 %v197
    %v2481 = vunpack.c.h.b16 %v197
    %v2482 = vunpack.c.l.b16 %v198
    %v2483 = vunpack.c.h.b16 %v198
    %v2484 = vunpack.c.l.b16 %v199
    %v2485 = vunpack.c.h.b16 %v199
    %v2486 = vunpack.c.l.b16 %v200
    %v2487 = vunpack.c.h.b16 %v200
    %v2488 = vunpack.c.l.b16 %v201
    %v2489 = vunpack.c.h.b16 %v201
    %v2490 = vunpack.c.l.b16 %v202
    %v2491 = vunpack.c.h.b16 %v202
    %v2492 = vunpack.c.l.b16 %v203
    %v2493 = vunpack.c.h.b16 %v203
    %v2494 = vunpack.c.l.b16 %v204
    %v2495 = vunpack.c.h.b16 %v204
    %v2496 = vunpack.c.l.b16 %v205
    %v2497 = vunpack.c.h.b16 %v205
    %v2498 = vunpack.c.l.b16 %v206
    %v2499 = vunpack.c.h.b16 %v206
    %v2500 = vunpack.c.l.b16 %v207
    %v2501 = vunpack.c.h.b16 %v207
    %v2502 = vunpack.c.l.b16 %v208
    %v2503 = vunpack.c.h.b16 %v208
    %v2504 = vunpack.c.l.b16 %v209
    %v2505 = vunpack.c.h.b16 %v209
    %v2506 = vunpack.c.l.b16 %v210
    %v2507 = vunpack.c.h.b16 %v210
    %v2508 = vunpack.c.l.b16 %v211
    %v2509 = vunpack.c.h.b16 %v211
    %v2510 = vunpack.c.l.b16 %v212
    %v2511 = vunpack.c.h.b16 %v212
    %v2512 = vunpack.c.l.b16 %v213
    %v2513 = vunpack.c.h.b16 %v213
    %v2514 = vunpack.c.l.b16 %v214
    %v2515 = vunpack.c.h.b16 %v214
    %v2516 = vunpack.c.l.b16 %v215
    %v2517 = vunpack.c.h.b16 %v215
    %v2518 = vunpack.c.l.b16 %v216
    %v2519 = vunpack.c.h.b16 %v216
    %v2520 = vunpack.c.l.b16 %v217
    %v2521 = vunpack.c.h.b16 %v217
    %v2522 = vunpack.c.l.b16 %v218
    %v2523 = vunpack.c.h.b16 %v218
    %v2524 = vunpack.c.l.b16 %v219
    %v2525 = vunpack.c.h.b16 %v219
    %v2526 = vunpack.c.l.b16 %v220
    %v2527 = vunpack.c.h.b16 %v220
    %v2528 = vunpack.c.l.b16 %v221
    %v2529 = vunpack.c.h.b16 %v221
    %v2530 = vunpack.c.l.b16 %v222
    %v2531 = vunpack.c.h.b16 %v222
    %v2532 = vunpack.c.l.b16 %v223
    %v2533 = vunpack.c.h.b16 %v223
    %v2534 = vunpack.c.l.b16 %v224
    %v2535 = vunpack.c.h.b16 %v224
    %v2536 = vunpack.c.l.b16 %v225
    %v2537 = vunpack.c.h.b16 %v225
    %v2538 = vunpack.c.l.b16 %v226
    %v2539 = vunpack.c.h.b16 %v226
    %v2540 = vunpack.c.l.b16 %v227
    %v2541 = vunpack.c.h.b16 %v227
    %v2542 = vunpack.c.l.b16 %v228
    %v2543 = vunpack.c.h.b16 %v228
    %v2544 = vunpack.c.l.b16 %v229
    %v2545 = vunpack.c.h.b16 %v229
    %v2546 = vunpack.c.l.b16 %v230
    %v2547 = vunpack.c.h.b16 %v230
    %v2548 = vunpack.c.l.b16 %v231
    %v2549 = vunpack.c.h.b16 %v231
    %v2550 = vunpack.c.l.b16 %v232
    %v2551 = vunpack.c.h.b16 %v232
    %v2552 = vunpack.c.l.b16 %v233
    %v2553 = vunpack.c.h.b16 %v233
    %v2554 = vunpack.c.l.b16 %v234
    %v2555 = vunpack.c.h.b16 %v234
    %v2556 = vunpack.c.l.b16 %v235
    %v2557 = vunpack.c.h.b16 %v235
    %v2558 = vunpack.c.l.b16 %v236
    %v2559 = vunpack.c.h.b16 %v236
    %v2560 = vunpack.c.l.b16 %v237
    %v2561 = vunpack.c.h.b16 %v237
    %v2562 = vunpack.c.l.b16 %v238
    %v2563 = vunpack.c.h.b16 %v238
    %v2564 = vunpack.c.l.b16 %v239
    %v2565 = vunpack.c.h.b16 %v239
    %v2566 = vunpack.c.l.b16 %v240
    %v2567 = vunpack.c.h.b16 %v240
    %v2568 = vunpack.c.l.b16 %v241
    %v2569 = vunpack.c.h.b16 %v241
    %v2570 = vunpack.c.l.b16 %v242
    %v2571 = vunpack.c.h.b16 %v242
    %v2572 = vunpack.c.l.b16 %v243
    %v2573 = vunpack.c.h.b16 %v243
    %v2574 = vunpack.c.l.b16 %v244
    %v2575 = vunpack.c.h.b16 %v244
    %v2576 = vunpack.c.l.b16 %v245
    %v2577 = vunpack.c.h.b16 %v245
    %v2578 = vunpack.c.l.b16 %v246
    %v2579 = vunpack.c.h.b16 %v246
    %v2580 = vunpack.c.l.b16 %v247
    %v2581 = vunpack.c.h.b16 %v247
    %v2582 = vunpack.c.l.b16 %v248
    %v2583 = vunpack.c.h.b16 %v248
    %v2584 = vunpack.c.l.b16 %v249
    %v2585 = vunpack.c.h.b16 %v249
    %v2586 = vunpack.c.l.b16 %v250
    %v2587 = vunpack.c.h.b16 %v250
    %v2588 = vunpack.c.l.b16 %v251
    %v2589 = vunpack.c.h.b16 %v251
    %v2590 = vunpack.c.l.b16 %v252
    %v2591 = vunpack.c.h.b16 %v252
    %v2592 = vunpack.c.l.b16 %v253
    %v2593 = vunpack.c.h.b16 %v253
    %v2594 = vunpack.c.l.b16 %v254
    %v2595 = vunpack.c.h.b16 %v254
    %v2596 = vunpack.c.l.b16 %v255
    %v2597 = vunpack.c.h.b16 %v255
    %v2598 = vunpack.c.l.b16 %v256
    %v2599 = vunpack.c.h.b16 %v256
    %v2600 = vunpack.c.l.b16 %v257
    %v2601 = vunpack.c.h.b16 %v257
    %v2602 = vunpack.c.l.b16 %v258
    %v2603 = vunpack.c.h.b16 %v258
    %v2604 = vunpack.c.l.b16 %v259
    %v2605 = vunpack.c.h.b16 %v259
    %v2606 = vunpack.c.l.b16 %v260
    %v2607 = vunpack.c.h.b16 %v260
    %v2608 = vunpack.c.l.b16 %v261
    %v2609 = vunpack.c.h.b16 %v261
    %v2610 = vunpack.c.l.b16 %v262
    %v2611 = vunpack.c.h.b16 %v262
    %v2612 = vunpack.c.l.b16 %v263
    %v2613 = vunpack.c.h.b16 %v263
    %v2614 = vunpack.c.l.b16 %v264
    %v2615 = vunpack.c.h.b16 %v264
    %v2616 = vunpack.c.l.b16 %v265
    %v2617 = vunpack.c.h.b16 %v265
    %v2618 = vunpack.c.l.b16 %v266
    %v2619 = vunpack.c.h.b16 %v266
    %v2620 = vunpack.c.l.b16 %v267
    %v2621 = vunpack.c.h.b16 %v267
    %v2622 = vunpack.c.l.b16 %v268
    %v2623 = vunpack.c.h.b16 %v268
    %v2624 = vunpack.c.l.b16 %v269
    %v2625 = vunpack.c.h.b16 %v269
    %v2626 = vunpack.c.l.b16 %v270
    %v2627 = vunpack.c.h.b16 %v270
    %v2628 = vunpack.c.l.b16 %v271
    %v2629 = vunpack.c.h.b16 %v271
    %v2630 = vunpack.c.l.b16 %v272
    %v2631 = vunpack.c.h.b16 %v272
    %v2632 = vunpack.c.l.b16 %v273
    %v2633 = vunpack.c.h.b16 %v273
    %v2634 = vunpack.c.l.b16 %v274
    %v2635 = vunpack.c.h.b16 %v274
    %v2636 = vunpack.c.l.b16 %v275
    %v2637 = vunpack.c.h.b16 %v275
    %v2638 = vunpack.c.l.b16 %v276
    %v2639 = vunpack.c.h.b16 %v276
    %v2640 = vunpack.c.l.b16 %v277
    %v2641 = vunpack.c.h.b16 %v277
    %v2642 = vunpack.c.l.b16 %v278
    %v2643 = vunpack.c.h.b16 %v278
    %v2644 = vunpack.c.l.b16 %v279
    %v2645 = vunpack.c.h.b16 %v279
    %v2646 = vunpack.c.l.b16 %v280
    %v2647 = vunpack.c.h.b16 %v280
    %v2648 = vunpack.c.l.b16 %v281
    %v2649 = vunpack.c.h.b16 %v281
    %v2650 = vunpack.c.l.b16 %v282
    %v2651 = vunpack.c.h.b16 %v282
    %v2652 = vunpack.c.l.b16 %v283
    %v2653 = vunpack.c.h.b16 %v283
    %v2654 = vunpack.c.l.b16 %v284
    %v2655 = vunpack.c.h.b16 %v284
    %v2656 = vunpack.c.l.b16 %v285
    %v2657 = vunpack.c.h.b16 %v285
    %v2658 = vunpack.c.l.b16 %v286
    %v2659 = vunpack.c.h.b16 %v286
    %v2660 = vunpack.c.l.b16 %v287
    %v2661 = vunpack.c.h.b16 %v287
    %v2662 = vunpack.c.l.b16 %v288
    %v2663 = vunpack.c.h.b16 %v288
    %v2664 = vunpack.c.l.b16 %v289
    %v2665 = vunpack.c.h.b16 %v289
    %v2666 = vunpack.c.l.b16 %v290
    %v2667 = vunpack.c.h.b16 %v290
    %v2668 = vunpack.c.l.b16 %v291
    %v2669 = vunpack.c.h.b16 %v291
    %v2670 = vunpack.c.l.b16 %v292
    %v2671 = vunpack.c.h.b16 %v292
    %v2672 = vunpack.c.l.b16 %v293
    %v2673 = vunpack.c.h.b16 %v293
    %v2674 = vunpack.c.l.b16 %v294
    %v2675 = vunpack.c.h.b16 %v294
    %v2676 = vunpack.c.l.b16 %v295
    %v2677 = vunpack.c.h.b16 %v295
    %v2678 = vunpack.c.l.b16 %v296
    %v2679 = vunpack.c.h.b16 %v296
    %v2680 = vunpack.c.l.b16 %v297
    %v2681 = vunpack.c.h.b16 %v297
    %v2682 = vunpack.c.l.b16 %v298
    %v2683 = vunpack.c.h.b16 %v298
    %v2684 = vunpack.c.l.b16 %v299
    %v2685 = vunpack.c.h.b16 %v299
    %v2686 = vunpack.c.l.b16 %v300
    %v2687 = vunpack.c.h.b16 %v300
    %v2688 = vunpack.c.l.b16 %v301
    %v2689 = vunpack.c.h.b16 %v301
    %v2690 = vunpack.c.l.b16 %v302
    %v2691 = vunpack.c.h.b16 %v302
    %v2692 = vunpack.c.l.b16 %v303
    %v2693 = vunpack.c.h.b16 %v303
    %v2694 = vunpack.c.l.b16 %v304
    %v2695 = vunpack.c.h.b16 %v304
    %v2696 = vunpack.c.l.b16 %v305
    %v2697 = vunpack.c.h.b16 %v305
    %v2698 = vunpack.c.l.b16 %v306
    %v2699 = vunpack.c.h.b16 %v306
    %v2700 = vunpack.c.l.b16 %v307
    %v2701 = vunpack.c.h.b16 %v307
    %v2702 = vunpack.c.l.b16 %v308
    %v2703 = vunpack.c.h.b16 %v308
    %v2704 = vunpack.c.l.b16 %v309
    %v2705 = vunpack.c.h.b16 %v309
    %v2706 = vunpack.c.l.b16 %v310
    %v2707 = vunpack.c.h.b16 %v310
    %v2708 = vunpack.c.l.b16 %v311
    %v2709 = vunpack.c.h.b16 %v311
    %v2710 = vunpack.c.l.b16 %v312
    %v2711 = vunpack.c.h.b16 %v312
    %v2712 = vunpack.c.l.b16 %v313
    %v2713 = vunpack.c.h.b16 %v313
    %v2714 = vunpack.c.l.b16 %v314
    %v2715 = vunpack.c.h.b16 %v314
    %v2716 = vunpack.c.l.b16 %v315
    %v2717 = vunpack.c.h.b16 %v315
    %v2718 = vunpack.c.l.b16 %v316
    %v2719 = vunpack.c.h.b16 %v316
    %v2720 = vunpack.c.l.b16 %v317
    %v2721 = vunpack.c.h.b16 %v317
    %v2722 = vunpack.c.l.b16 %v318
    %v2723 = vunpack.c.h.b16 %v318
    %v2724 = vunpack.c.l.b16 %v319
    %v2725 = vunpack.c.h.b16 %v319
    %v2726 = vunpack.c.l.b16 %v320
    %v2727 = vunpack.c.h.b16 %v320
    %v2728 = vunpack.c.l.b16 %v321
    %v2729 = vunpack.c.h.b16 %v321
    %v2730 = vunpack.c.l.b16 %v322
    %v2731 = vunpack.c.h.b16 %v322
    %v2732 = vunpack.c.l.b16 %v323
    %v2733 = vunpack.c.h.b16 %v323
    %v2734 = vunpack.c.l.b16 %v324
    %v2735 = vunpack.c.h.b16 %v324
    %v2736 = vunpack.c.l.b16 %v325
    %v2737 = vunpack.c.h.b16 %v325
    %v2738 = vunpack.c.l.b16 %v326
    %v2739 = vunpack.c.h.b16 %v326
    %v2740 = vunpack.c.l.b16 %v327
    %v2741 = vunpack.c.h.b16 %v327
    %v2742 = vunpack.c.l.b16 %v328
    %v2743 = vunpack.c.h.b16 %v328
    %v2744 = vunpack.c.l.b16 %v329
    %v2745 = vunpack.c.h.b16 %v329
    %v2746 = vunpack.c.l.b16 %v330
    %v2747 = vunpack.c.h.b16 %v330
    %v2748 = vunpack.c.l.b16 %v331
    %v2749 = vunpack.c.h.b16 %v331
    %v2750 = vunpack.c.l.b16 %v332
    %v2751 = vunpack.c.h.b16 %v332
    %v2752 = vunpack.c.l.b16 %v333
    %v2753 = vunpack.c.h.b16 %v333
    %v2754 = vunpack.c.l.b16 %v334
    %v2755 = vunpack.c.h.b16 %v334
    %v2756 = vunpack.c.l.b16 %v335
    %v2757 = vunpack.c.h.b16 %v335
    %v2758 = vunpack.c.l.b16 %v336
    %v2759 = vunpack.c.h.b16 %v336
    %v2760 = vunpack.c.l.b16 %v337
    %v2761 = vunpack.c.h.b16 %v337
    %v2762 = vunpack.c.l.b16 %v338
    %v2763 = vunpack.c.h.b16 %v338
    %v2764 = vunpack.c.l.b16 %v339
    %v2765 = vunpack.c.h.b16 %v339
    %v2766 = vunpack.c.l.b16 %v340
    %v2767 = vunpack.c.h.b16 %v340
    %v2768 = vunpack.c.l.b16 %v341
    %v2769 = vunpack.c.h.b16 %v341
    %v2770 = vunpack.c.l.b16 %v342
    %v2771 = vunpack.c.h.b16 %v342
    %v2772 = vunpack.c.l.b16 %v343
    %v2773 = vunpack.c.h.b16 %v343
    %v2774 = vunpack.c.l.b16 %v344
    %v2775 = vunpack.c.h.b16 %v344
    %v2776 = vunpack.c.l.b16 %v345
    %v2777 = vunpack.c.h.b16 %v345
    %v2778 = vunpack.c.l.b16 %v346
    %v2779 = vunpack.c.h.b16 %v346
    %v2780 = vunpack.c.l.b16 %v347
    %v2781 = vunpack.c.h.b16 %v347
    %v2782 = vunpack.c.l.b16 %v348
    %v2783 = vunpack.c.h.b16 %v348
    %v2784 = vunpack.c.l.b16 %v349
    %v2785 = vunpack.c.h.b16 %v349
    %v2786 = vunpack.c.l.b16 %v350
    %v2787 = vunpack.c.h.b16 %v350
    %v2788 = vunpack.c.l.b16 %v351
    %v2789 = vunpack.c.h.b16 %v351
    %v2790 = vunpack.c.l.b16 %v352
    %v2791 = vunpack.c.h.b16 %v352
    %v2792 = vunpack.c.l.b16 %v353
    %v2793 = vunpack.c.h.b16 %v353
    %v2794 = vunpack.c.l.b16 %v354
    %v2795 = vunpack.c.h.b16 %v354
    %v2796 = vunpack.c.l.b16 %v355
    %v2797 = vunpack.c.h.b16 %v355
    %v2798 = vunpack.c.l.b16 %v356
    %v2799 = vunpack.c.h.b16 %v356
    %v2800 = vunpack.c.l.b16 %v357
    %v2801 = vunpack.c.h.b16 %v357
    %v2802 = vunpack.c.l.b16 %v358
    %v2803 = vunpack.c.h.b16 %v358
    %v2804 = vunpack.c.l.b16 %v359
    %v2805 = vunpack.c.h.b16 %v359
    %v2806 = vunpack.c.l.b16 %v360
    %v2807 = vunpack.c.h.b16 %v360
    %v2808 = vunpack.c.l.b16 %v361
    %v2809 = vunpack.c.h.b16 %v361
    %v2810 = vunpack.c.l.b16 %v362
    %v2811 = vunpack.c.h.b16 %v362
    %v2812 = vunpack.c.l.b16 %v363
    %v2813 = vunpack.c.h.b16 %v363
    %v2814 = vunpack.c.l.b16 %v364
    %v2815 = vunpack.c.h.b16 %v364
    %v2816 = vunpack.c.l.b16 %v365
    %v2817 = vunpack.c.h.b16 %v365
    %v2818 = vunpack.c.l.b16 %v366
    %v2819 = vunpack.c.h.b16 %v366
    %v2820 = vunpack.c.l.b16 %v367
    %v2821 = vunpack.c.h.b16 %v367
    %v2822 = vunpack.c.l.b16 %v368
    %v2823 = vunpack.c.h.b16 %v368
    %v2824 = vunpack.c.l.b16 %v369
    %v2825 = vunpack.c.h.b16 %v369
    %v2826 = vunpack.c.l.b16 %v370
    %v2827 = vunpack.c.h.b16 %v370
    %v2828 = vunpack.c.l.b16 %v371
    %v2829 = vunpack.c.h.b16 %v371
    %v2830 = vunpack.c.l.b16 %v372
    %v2831 = vunpack.c.h.b16 %v372
    %v2832 = vunpack.c.l.b16 %v373
    %v2833 = vunpack.c.h.b16 %v373
    %v2834 = vunpack.c.l.b16 %v374
    %v2835 = vunpack.c.h.b16 %v374
    %v2836 = vunpack.c.l.b16 %v375
    %v2837 = vunpack.c.h.b16 %v375
    %v2838 = vunpack.c.l.b16 %v376
    %v2839 = vunpack.c.h.b16 %v376
    %v2840 = vunpack.c.l.b16 %v377
    %v2841 = vunpack.c.h.b16 %v377
    %v2842 = vunpack.c.l.b16 %v378
    %v2843 = vunpack.c.h.b16 %v378
    %v2844 = vunpack.c.l.b16 %v379
    %v2845 = vunpack.c.h.b16 %v379
    %v2846 = vunpack.c.l.b16 %v380
    %v2847 = vunpack.c.h.b16 %v380
    %v2848 = vunpack.c.l.b16 %v381
    %v2849 = vunpack.c.h.b16 %v381
    %v2850 = vunpack.c.l.b16 %v382
    %v2851 = vunpack.c.h.b16 %v382
    %v2852 = vunpack.c.l.b16 %v383
    %v2853 = vunpack.c.h.b16 %v383
    %v2854 = vunpack.c.l.b16 %v384
    %v2855 = vunpack.c.h.b16 %v384
    %v2856 = vunpack.c.l.b16 %v385
    %v2857 = vunpack.c.h.b16 %v385
    %v2858 = vunpack.c.l.b16 %v386
    %v2859 = vunpack.c.h.b16 %v386
    %v2860 = vunpack.c.l.b16 %v387
    %v2861 = vunpack.c.h.b16 %v387
    %v2862 = vunpack.c.l.b16 %v388
    %v2863 = vunpack.c.h.b16 %v388
    %v2864 = vunpack.c.l.b16 %v389
    %v2865 = vunpack.c.h.b16 %v389
    %v2866 = vunpack.c.l.b16 %v390
    %v2867 = vunpack.c.h.b16 %v390
    %v2868 = vunpack.c.l.b16 %v391
    %v2869 = vunpack.c.h.b16 %v391
    %v2870 = vunpack.c.l.b16 %v392
    %v2871 = vunpack.c.h.b16 %v392
    %v2872 = vunpack.c.l.b16 %v393
    %v2873 = vunpack.c.h.b16 %v393
    %v2874 = vunpack.c.l.b16 %v394
    %v2875 = vunpack.c.h.b16 %v394
    %v2876 = vunpack.c.l.b16 %v395
    %v2877 = vunpack.c.h.b16 %v395
    %v2878 = vunpack.c.l.b16 %v396
    %v2879 = vunpack.c.h.b16 %v396
    %v2880 = vunpack.c.l.b16 %v397
    %v2881 = vunpack.c.h.b16 %v397
    %v2882 = vunpack.c.l.b16 %v398
    %v2883 = vunpack.c.h.b16 %v398
    %v2884 = vunpack.c.l.b16 %v399
    %v2885 = vunpack.c.h.b16 %v399
    %v2886 = vunpack.c.l.b16 %v400
    %v2887 = vunpack.c.h.b16 %v400
    %v2888 = vunpack.c.l.b16 %v401
    %v2889 = vunpack.c.h.b16 %v401
    %v2890 = vunpack.c.l.b16 %v402
    %v2891 = vunpack.c.h.b16 %v402
    %v2892 = vunpack.c.l.b16 %v403
    %v2893 = vunpack.c.h.b16 %v403
    %v2894 = vunpack.c.l.b16 %v404
    %v2895 = vunpack.c.h.b16 %v404
    %v2896 = vunpack.c.l.b16 %v405
    %v2897 = vunpack.c.h.b16 %v405
    %v2898 = vunpack.c.l.b16 %v406
    %v2899 = vunpack.c.h.b16 %v406
    %v2900 = vunpack.c.l.b16 %v407
    %v2901 = vunpack.c.h.b16 %v407
    %v2902 = vunpack.c.l.b16 %v408
    %v2903 = vunpack.c.h.b16 %v408
    %v2904 = vunpack.c.l.b16 %v409
    %v2905 = vunpack.c.h.b16 %v409
    %v2906 = vunpack.c.l.b16 %v410
    %v2907 = vunpack.c.h.b16 %v410
    %v2908 = vunpack.c.l.b16 %v411
    %v2909 = vunpack.c.h.b16 %v411
    %v2910 = vunpack.c.l.b16 %v412
    %v2911 = vunpack.c.h.b16 %v412
    %v2912 = vunpack.c.l.b16 %v413
    %v2913 = vunpack.c.h.b16 %v413
    %v2914 = vunpack.c.l.b16 %v414
    %v2915 = vunpack.c.h.b16 %v414
    %v2916 = vunpack.c.l.b16 %v415
    %v2917 = vunpack.c.h.b16 %v415
    %v2918 = vunpack.c.l.b16 %v416
    %v2919 = vunpack.c.h.b16 %v416
    %v2920 = vunpack.c.l.b16 %v417
    %v2921 = vunpack.c.h.b16 %v417
    %v2922 = vunpack.c.l.b16 %v418
    %v2923 = vunpack.c.h.b16 %v418
    %v2924 = vunpack.c.l.b16 %v419
    %v2925 = vunpack.c.h.b16 %v419
    %v2926 = vunpack.c.l.b16 %v420
    %v2927 = vunpack.c.h.b16 %v420
    %v2928 = vunpack.c.l.b16 %v421
    %v2929 = vunpack.c.h.b16 %v421
    %v2930 = vunpack.c.l.b16 %v422
    %v2931 = vunpack.c.h.b16 %v422
    %v2932 = vunpack.c.l.b16 %v423
    %v2933 = vunpack.c.h.b16 %v423
    %v2934 = vunpack.c.l.b16 %v424
    %v2935 = vunpack.c.h.b16 %v424
    %v2936 = vunpack.c.l.b16 %v425
    %v2937 = vunpack.c.h.b16 %v425
    %v2938 = vunpack.c.l.b16 %v426
    %v2939 = vunpack.c.h.b16 %v426
    %v2940 = vunpack.c.l.b16 %v427
    %v2941 = vunpack.c.h.b16 %v427
    %v2942 = vunpack.c.l.b16 %v428
    %v2943 = vunpack.c.h.b16 %v428
    %v2944 = vunpack.c.l.b16 %v429
    %v2945 = vunpack.c.h.b16 %v429
    %v2946 = vunpack.c.l.b16 %v430
    %v2947 = vunpack.c.h.b16 %v430
    %v2948 = vunpack.c.l.b16 %v431
    %v2949 = vunpack.c.h.b16 %v431
    %v2950 = vunpack.c.l.b16 %v432
    %v2951 = vunpack.c.h.b16 %v432
    %v2952 = vunpack.c.l.b16 %v433
    %v2953 = vunpack.c.h.b16 %v433
    %v2954 = vunpack.c.l.b16 %v434
    %v2955 = vunpack.c.h.b16 %v434
    %v2956 = vunpack.c.l.b16 %v435
    %v2957 = vunpack.c.h.b16 %v435
    %v2958 = vunpack.c.l.b16 %v436
    %v2959 = vunpack.c.h.b16 %v436
    %v2960 = vunpack.c.l.b16 %v437
    %v2961 = vunpack.c.h.b16 %v437
    %v2962 = vunpack.c.l.b16 %v438
    %v2963 = vunpack.c.h.b16 %v438
    %v2964 = vunpack.c.l.b16 %v439
    %v2965 = vunpack.c.h.b16 %v439
    %v2966 = vunpack.c.l.b16 %v440
    %v2967 = vunpack.c.h.b16 %v440
    %v2968 = vunpack.c.l.b16 %v441
    %v2969 = vunpack.c.h.b16 %v441
    %v2970 = vunpack.c.l.b16 %v442
    %v2971 = vunpack.c.h.b16 %v442
    %v2972 = vunpack.c.l.b16 %v443
    %v2973 = vunpack.c.h.b16 %v443
    %v2974 = vunpack.c.l.b16 %v444
    %v2975 = vunpack.c.h.b16 %v444
    %v2976 = vunpack.c.l.b16 %v445
    %v2977 = vunpack.c.h.b16 %v445
    %v2978 = vunpack.c.l.b16 %v446
    %v2979 = vunpack.c.h.b16 %v446
    %v2980 = vunpack.c.l.b16 %v447
    %v2981 = vunpack.c.h.b16 %v447
    %v2982 = vunpack.c.l.b16 %v448
    %v2983 = vunpack.c.h.b16 %v448
    %v2984 = vunpack.c.l.b16 %v449
    %v2985 = vunpack.c.h.b16 %v449
    %v2986 = vunpack.c.l.b16 %v450
    %v2987 = vunpack.c.h.b16 %v450
    %v2988 = vunpack.c.l.b16 %v451
    %v2989 = vunpack.c.h.b16 %v451
    %v2990 = vunpack.c.l.b16 %v452
    %v2991 = vunpack.c.h.b16 %v452
    %v2992 = vunpack.c.l.b16 %v453
    %v2993 = vunpack.c.h.b16 %v453
    %v2994 = vunpack.c.l.b16 %v454
    %v2995 = vunpack.c.h.b16 %v454
    %v2996 = vunpack.c.l.b16 %v455
    %v2997 = vunpack.c.h.b16 %v455
    %v2998 = vunpack.c.l.b16 %v456
    %v2999 = vunpack.c.h.b16 %v456
    %v3000 = vunpack.c.l.b16 %v457
    %v3001 = vunpack.c.h.b16 %v457
    %v3002 = vunpack.c.l.b16 %v458
    %v3003 = vunpack.c.h.b16 %v458
    %v3004 = vunpack.c.l.b16 %v459
    %v3005 = vunpack.c.h.b16 %v459
    %v3006 = vunpack.c.l.b16 %v460
    %v3007 = vunpack.c.h.b16 %v460
    %v3008 = vunpack.c.l.b16 %v461
    %v3009 = vunpack.c.h.b16 %v461
    %v3010 = vunpack.c.l.b16 %v462
    %v3011 = vunpack.c.h.b16 %v462
    %v3012 = vunpack.c.l.b16 %v463
    %v3013 = vunpack.c.h.b16 %v463
    %v3014 = vunpack.c.l.b16 %v464
    %v3015 = vunpack.c.h.b16 %v464
    %v3016 = vunpack.c.l.b16 %v465
    %v3017 = vunpack.c.h.b16 %v465
    %v3018 = vunpack.c.l.b16 %v466
    %v3019 = vunpack.c.h.b16 %v466
    %v3020 = vunpack.c.l.b16 %v467
    %v3021 = vunpack.c.h.b16 %v467
    %v3022 = vunpack.c.l.b16 %v468
    %v3023 = vunpack.c.h.b16 %v468
    %v3024 = vunpack.c.l.b16 %v469
    %v3025 = vunpack.c.h.b16 %v469
    %v3026 = vunpack.c.l.b16 %v470
    %v3027 = vunpack.c.h.b16 %v470
    %v3028 = vunpack.c.l.b16 %v471
    %v3029 = vunpack.c.h.b16 %v471
    %v3030 = vunpack.c.l.b16 %v472
    %v3031 = vunpack.c.h.b16 %v472
    %v3032 = vunpack.c.l.b16 %v473
    %v3033 = vunpack.c.h.b16 %v473
    %v3034 = vunpack.c.l.b16 %v474
    %v3035 = vunpack.c.h.b16 %v474
    %v3036 = vunpack.c.l.b16 %v475
    %v3037 = vunpack.c.h.b16 %v475
    %v3038 = vunpack.c.l.b16 %v476
    %v3039 = vunpack.c.h.b16 %v476
    %v3040 = vunpack.c.l.b16 %v477
    %v3041 = vunpack.c.h.b16 %v477
    %v3042 = vunpack.c.l.b16 %v478
    %v3043 = vunpack.c.h.b16 %v478
    %v3044 = vunpack.c.l.b16 %v479
    %v3045 = vunpack.c.h.b16 %v479
    %v3046 = vunpack.c.l.b16 %v480
    %v3047 = vunpack.c.h.b16 %v480
    %v3048 = vunpack.c.l.b16 %v481
    %v3049 = vunpack.c.h.b16 %v481
    %v3050 = vunpack.c.l.b16 %v482
    %v3051 = vunpack.c.h.b16 %v482
    %v3052 = vunpack.c.l.b16 %v483
    %v3053 = vunpack.c.h.b16 %v483
    %v3054 = vunpack.c.l.b16 %v484
    %v3055 = vunpack.c.h.b16 %v484
    %v3056 = vunpack.c.l.b16 %v485
    %v3057 = vunpack.c.h.b16 %v485
    %v3058 = vunpack.c.l.b16 %v486
    %v3059 = vunpack.c.h.b16 %v486
    %v3060 = vunpack.c.l.b16 %v487
    %v3061 = vunpack.c.h.b16 %v487
    %v3062 = vunpack.c.l.b16 %v488
    %v3063 = vunpack.c.h.b16 %v488
    %v3064 = vunpack.c.l.b16 %v489
    %v3065 = vunpack.c.h.b16 %v489
    %v3066 = vunpack.c.l.b16 %v490
    %v3067 = vunpack.c.h.b16 %v490
    %v3068 = vunpack.c.l.b16 %v491
    %v3069 = vunpack.c.h.b16 %v491
    %v3070 = vunpack.c.l.b16 %v492
    %v3071 = vunpack.c.h.b16 %v492
    %v3072 = vunpack.c.l.b16 %v493
    %v3073 = vunpack.c.h.b16 %v493
    %v3074 = vunpack.c.l.b16 %v494
    %v3075 = vunpack.c.h.b16 %v494
    %v3076 = vunpack.c.l.b16 %v495
    %v3077 = vunpack.c.h.b16 %v495
    %v3078 = vunpack.c.l.b16 %v496
    %v3079 = vunpack.c.h.b16 %v496
    %v3080 = vunpack.c.l.b16 %v497
    %v3081 = vunpack.c.h.b16 %v497
    %v3082 = vunpack.c.l.b16 %v498
    %v3083 = vunpack.c.h.b16 %v498
    %v3084 = vunpack.c.l.b16 %v499
    %v3085 = vunpack.c.h.b16 %v499
    %v3086 = vunpack.c.l.b16 %v500
    %v3087 = vunpack.c.h.b16 %v500
    %v3088 = vunpack.c.l.b16 %v501
    %v3089 = vunpack.c.h.b16 %v501
    %v3090 = vunpack.c.l.b16 %v502
    %v3091 = vunpack.c.h.b16 %v502
    %v3092 = vunpack.c.l.b16 %v503
    %v3093 = vunpack.c.h.b16 %v503
    %v3094 = vunpack.c.l.b16 %v504
    %v3095 = vunpack.c.h.b16 %v504
    %v3096 = vunpack.c.l.b16 %v505
    %v3097 = vunpack.c.h.b16 %v505
    %v3098 = vunpack.c.l.b16 %v506
    %v3099 = vunpack.c.h.b16 %v506
    %v3100 = vunpack.c.l.b16 %v507
    %v3101 = vunpack.c.h.b16 %v507
    %v3102 = vunpack.c.l.b16 %v508
    %v3103 = vunpack.c.h.b16 %v508
    %v3104 = vunpack.c.l.b16 %v509
    %v3105 = vunpack.c.h.b16 %v509
    %v3106 = vunpack.c.l.b16 %v510
    %v3107 = vunpack.c.h.b16 %v510
    %v3108 = vunpack.c.l.b16 %v511
    %v3109 = vunpack.c.h.b16 %v511
    %v3110 = vunpack.c.l.b16 %v512
    %v3111 = vunpack.c.h.b16 %v512
    %v3112 = vunpack.c.l.b16 %v513
    %v3113 = vunpack.c.h.b16 %v513
    %v3114 = vunpack.c.l.b16 %v514
    %v3115 = vunpack.c.h.b16 %v514
    %v3116 = vunpack.c.l.b16 %v515
    %v3117 = vunpack.c.h.b16 %v515
    %v3118 = vunpack.c.l.b16 %v516
    %v3119 = vunpack.c.h.b16 %v516
    %v3120 = vunpack.c.l.b16 %v517
    %v3121 = vunpack.c.h.b16 %v517
    %v3122 = vunpack.c.l.b16 %v518
    %v3123 = vunpack.c.h.b16 %v518
    %v3124 = vunpack.c.l.b16 %v519
    %v3125 = vunpack.c.h.b16 %v519
    %v3126 = vunpack.c.l.b16 %v520
    %v3127 = vunpack.c.h.b16 %v520
    %v3128 = vunpack.c.l.b16 %v521
    %v3129 = vunpack.c.h.b16 %v521
    %v3130 = vunpack.c.l.b16 %v522
    %v3131 = vunpack.c.h.b16 %v522
    %v3132 = vunpack.c.l.b16 %v523
    %v3133 = vunpack.c.h.b16 %v523
    %v3134 = vunpack.c.l.b16 %v524
    %v3135 = vunpack.c.h.b16 %v524
    %v3136 = vunpack.c.l.b16 %v525
    %v3137 = vunpack.c.h.b16 %v525
    %v3138 = vunpack.c.l.b16 %v526
    %v3139 = vunpack.c.h.b16 %v526
    %v3140 = vunpack.c.l.b16 %v527
    %v3141 = vunpack.c.h.b16 %v527
    %v3142 = vunpack.c.l.b16 %v528
    %v3143 = vunpack.c.h.b16 %v528
    %v3144 = vunpack.c.l.b16 %v529
    %v3145 = vunpack.c.h.b16 %v529
    %v3146 = vunpack.c.l.b16 %v530
    %v3147 = vunpack.c.h.b16 %v530
    %v3148 = vunpack.c.l.b16 %v531
    %v3149 = vunpack.c.h.b16 %v531
    %v3150 = vunpack.c.l.b16 %v532
    %v3151 = vunpack.c.h.b16 %v532
    %v3152 = vunpack.c.l.b16 %v533
    %v3153 = vunpack.c.h.b16 %v533
    %v3154 = vunpack.c.l.b16 %v534
    %v3155 = vunpack.c.h.b16 %v534
    %v3156 = vunpack.c.l.b16 %v535
    %v3157 = vunpack.c.h.b16 %v535
    %v3158 = vunpack.c.l.b16 %v536
    %v3159 = vunpack.c.h.b16 %v536
    %v3160 = vunpack.c.l.b16 %v537
    %v3161 = vunpack.c.h.b16 %v537
    %v3162 = vunpack.c.l.b16 %v538
    %v3163 = vunpack.c.h.b16 %v538
    %v3164 = vunpack.c.l.b16 %v539
    %v3165 = vunpack.c.h.b16 %v539
    %v3166 = vunpack.c.l.b16 %v540
    %v3167 = vunpack.c.h.b16 %v540
    %v3168 = vunpack.c.l.b16 %v541
    %v3169 = vunpack.c.h.b16 %v541
    %v3170 = vunpack.c.l.b16 %v542
    %v3171 = vunpack.c.h.b16 %v542
    %v3172 = vunpack.c.l.b16 %v543
    %v3173 = vunpack.c.h.b16 %v543
    %v3174 = vunpack.c.l.b16 %v544
    %v3175 = vunpack.c.h.b16 %v544
    %v3176 = vunpack.c.l.b16 %v545
    %v3177 = vunpack.c.h.b16 %v545
    %v3178 = vunpack.c.l.b16 %v546
    %v3179 = vunpack.c.h.b16 %v546
    %v3180 = vunpack.c.l.b16 %v547
    %v3181 = vunpack.c.h.b16 %v547
    %v3182 = vunpack.c.l.b16 %v548
    %v3183 = vunpack.c.h.b16 %v548
    %v3184 = vunpack.c.l.b16 %v549
    %v3185 = vunpack.c.h.b16 %v549
    %v3186 = vunpack.c.l.b16 %v550
    %v3187 = vunpack.c.h.b16 %v550
    %v3188 = vunpack.c.l.b16 %v551
    %v3189 = vunpack.c.h.b16 %v551
    %v3190 = vunpack.c.l.b16 %v552
    %v3191 = vunpack.c.h.b16 %v552
    %v3192 = vunpack.c.l.b16 %v553
    %v3193 = vunpack.c.h.b16 %v553
    %v3194 = vunpack.c.l.b16 %v554
    %v3195 = vunpack.c.h.b16 %v554
    %v3196 = vunpack.c.l.b16 %v555
    %v3197 = vunpack.c.h.b16 %v555
    %v3198 = vunpack.c.l.b16 %v556
    %v3199 = vunpack.c.h.b16 %v556
    %v3200 = vunpack.c.l.b16 %v557
    %v3201 = vunpack.c.h.b16 %v557
    %v3202 = vunpack.c.l.b16 %v558
    %v3203 = vunpack.c.h.b16 %v558
    %v3204 = vunpack.c.l.b16 %v559
    %v3205 = vunpack.c.h.b16 %v559
    %v3206 = vunpack.c.l.b16 %v560
    %v3207 = vunpack.c.h.b16 %v560
    %v3208 = vunpack.c.l.b16 %v561
    %v3209 = vunpack.c.h.b16 %v561
    %v3210 = vunpack.c.l.b16 %v562
    %v3211 = vunpack.c.h.b16 %v562
    %v3212 = vunpack.c.l.b16 %v563
    %v3213 = vunpack.c.h.b16 %v563
    %v3214 = vunpack.c.l.b16 %v564
    %v3215 = vunpack.c.h.b16 %v564
    %v3216 = vunpack.c.l.b16 %v565
    %v3217 = vunpack.c.h.b16 %v565
    %v3218 = vunpack.c.l.b16 %v566
    %v3219 = vunpack.c.h.b16 %v566
    %v3220 = vunpack.c.l.b16 %v567
    %v3221 = vunpack.c.h.b16 %v567
    %v3222 = vunpack.c.l.b16 %v568
    %v3223 = vunpack.c.h.b16 %v568
    %v3224 = vunpack.c.l.b16 %v569
    %v3225 = vunpack.c.h.b16 %v569
    %v3226 = vunpack.c.l.b16 %v570
    %v3227 = vunpack.c.h.b16 %v570
    %v3228 = vunpack.c.l.b16 %v571
    %v3229 = vunpack.c.h.b16 %v571
    %v3230 = vunpack.c.l.b16 %v572
    %v3231 = vunpack.c.h.b16 %v572
    %v3232 = vunpack.c.l.b16 %v573
    %v3233 = vunpack.c.h.b16 %v573
    %v3234 = vunpack.c.l.b16 %v574
    %v3235 = vunpack.c.h.b16 %v574
    %v3236 = vunpack.c.l.b16 %v575
    %v3237 = vunpack.c.h.b16 %v575
    %v3238 = vunpack.c.l.b16 %v576
    %v3239 = vunpack.c.h.b16 %v576
    %v3240 = vunpack.c.l.b16 %v577
    %v3241 = vunpack.c.h.b16 %v577
    %v3242 = vunpack.c.l.b16 %v578
    %v3243 = vunpack.c.h.b16 %v578
    %v3244 = vunpack.c.l.b16 %v579
    %v3245 = vunpack.c.h.b16 %v579
    %v3246 = vunpack.c.l.b16 %v580
    %v3247 = vunpack.c.h.b16 %v580
    %v3248 = vunpack.c.l.b16 %v581
    %v3249 = vunpack.c.h.b16 %v581
    %v3250 = vunpack.c.l.b16 %v582
    %v3251 = vunpack.c.h.b16 %v582
    %v3252 = vunpack.c.l.b16 %v583
    %v3253 = vunpack.c.h.b16 %v583
    %v3254 = vunpack.c.l.b16 %v584
    %v3255 = vunpack.c.h.b16 %v584
    %v3256 = vunpack.c.l.b16 %v585
    %v3257 = vunpack.c.h.b16 %v585
    %v3258 = vunpack.c.l.b16 %v586
    %v3259 = vunpack.c.h.b16 %v586
    %v3260 = vunpack.c.l.b16 %v587
    %v3261 = vunpack.c.h.b16 %v587
    %v3262 = vunpack.c.l.b16 %v588
    %v3263 = vunpack.c.h.b16 %v588
    %v3264 = vunpack.c.l.b16 %v589
    %v3265 = vunpack.c.h.b16 %v589
    %v3266 = vunpack.c.l.b16 %v590
    %v3267 = vunpack.c.h.b16 %v590
    %v3268 = vunpack.c.l.b16 %v591
    %v3269 = vunpack.c.h.b16 %v591
    %v3270 = vunpack.c.l.b16 %v592
    %v3271 = vunpack.c.h.b16 %v592
    %v3272 = vunpack.c.l.b16 %v593
    %v3273 = vunpack.c.h.b16 %v593
    %v3274 = vunpack.c.l.b16 %v594
    %v3275 = vunpack.c.h.b16 %v594
    %v3276 = vunpack.c.l.b16 %v595
    %v3277 = vunpack.c.h.b16 %v595
    %v3278 = vunpack.c.l.b16 %v596
    %v3279 = vunpack.c.h.b16 %v596
    %v3280 = vunpack.c.l.b16 %v597
    %v3281 = vunpack.c.h.b16 %v597
    %v3282 = vunpack.c.l.b16 %v598
    %v3283 = vunpack.c.h.b16 %v598
    %v3284 = vunpack.c.l.b16 %v599
    %v3285 = vunpack.c.h.b16 %v599
    %v3286 = vunpack.c.l.b16 %v600
    %v3287 = vunpack.c.h.b16 %v600
    %v3288 = vunpack.c.l.b16 %v601
    %v3289 = vunpack.c.h.b16 %v601
    %v3290 = vunpack.c.l.b16 %v602
    %v3291 = vunpack.c.h.b16 %v602
    %v3292 = vunpack.c.l.b16 %v603
    %v3293 = vunpack.c.h.b16 %v603
    %v3294 = vunpack.c.l.b16 %v604
    %v3295 = vunpack.c.h.b16 %v604
    %v3296 = vunpack.c.l.b16 %v605
    %v3297 = vunpack.c.h.b16 %v605
    %v3298 = vunpack.c.l.b16 %v606
    %v3299 = vunpack.c.h.b16 %v606
    %v3300 = vunpack.c.l.b16 %v607
    %v3301 = vunpack.c.h.b16 %v607
    %v3302 = vunpack.c.l.b16 %v608
    %v3303 = vunpack.c.h.b16 %v608
    %v3304 = vunpack.c.l.b16 %v609
    %v3305 = vunpack.c.h.b16 %v609
    %v3306 = vunpack.c.l.b16 %v610
    %v3307 = vunpack.c.h.b16 %v610
    %v3308 = vunpack.c.l.b16 %v611
    %v3309 = vunpack.c.h.b16 %v611
    %v3310 = vunpack.c.l.b16 %v612
    %v3311 = vunpack.c.h.b16 %v612
    %v3312 = vunpack.c.l.b16 %v613
    %v3313 = vunpack.c.h.b16 %v613
    %v3314 = vunpack.c.l.b16 %v614
    %v3315 = vunpack.c.h.b16 %v614
    %v3316 = vunpack.c.l.b16 %v615
    %v3317 = vunpack.c.h.b16 %v615
    %v3318 = vunpack.c.l.b16 %v616
    %v3319 = vunpack.c.h.b16 %v616
    %v3320 = vunpack.c.l.b16 %v617
    %v3321 = vunpack.c.h.b16 %v617
    %v3322 = vunpack.c.l.b16 %v618
    %v3323 = vunpack.c.h.b16 %v618
    %v3324 = vunpack.c.l.b16 %v619
    %v3325 = vunpack.c.h.b16 %v619
    %v3326 = vunpack.c.l.b16 %v620
    %v3327 = vunpack.c.h.b16 %v620
    %v3328 = vunpack.c.l.b16 %v621
    %v3329 = vunpack.c.h.b16 %v621
    %v3330 = vunpack.c.l.b16 %v622
    %v3331 = vunpack.c.h.b16 %v622
    %v3332 = vunpack.c.l.b16 %v623
    %v3333 = vunpack.c.h.b16 %v623
    %v3334 = vunpack.c.l.b16 %v624
    %v3335 = vunpack.c.h.b16 %v624
    %v3336 = vunpack.c.l.b16 %v625
    %v3337 = vunpack.c.h.b16 %v625
    %v3338 = vunpack.c.l.b16 %v626
    %v3339 = vunpack.c.h.b16 %v626
    %v3340 = vunpack.c.l.b16 %v627
    %v3341 = vunpack.c.h.b16 %v627
    %v3342 = vunpack.c.l.b16 %v628
    %v3343 = vunpack.c.h.b16 %v628
    %v3344 = vunpack.c.l.b16 %v629
    %v3345 = vunpack.c.h.b16 %v629
    %v3346 = vunpack.c.l.b16 %v630
    %v3347 = vunpack.c.h.b16 %v630
    %v3348 = vunpack.c.l.b16 %v631
    %v3349 = vunpack.c.h.b16 %v631
    %v3350 = vunpack.c.l.b16 %v632
    %v3351 = vunpack.c.h.b16 %v632
    %v3352 = vunpack.c.l.b16 %v633
    %v3353 = vunpack.c.h.b16 %v633
    %v3354 = vunpack.c.l.b16 %v634
    %v3355 = vunpack.c.h.b16 %v634
    %v3356 = vunpack.c.l.b16 %v635
    %v3357 = vunpack.c.h.b16 %v635
    %v3358 = vunpack.c.l.b16 %v636
    %v3359 = vunpack.c.h.b16 %v636
    %v3360 = vunpack.c.l.b16 %v637
    %v3361 = vunpack.c.h.b16 %v637
    %v3362 = vunpack.c.l.b16 %v638
    %v3363 = vunpack.c.h.b16 %v638
    %v3364 = vunpack.c.l.b16 %v639
    %v3365 = vunpack.c.h.b16 %v639
    %v3366 = vunpack.c.l.b16 %v640
    %v3367 = vunpack.c.h.b16 %v640
    %v3368 = vunpack.c.l.b16 %v641
    %v3369 = vunpack.c.h.b16 %v641
    %v3370 = vunpack.c.l.b16 %v642
    %v3371 = vunpack.c.h.b16 %v642
    %v3372 = vunpack.c.l.b16 %v643
    %v3373 = vunpack.c.h.b16 %v643
    %v3374 = vunpack.c.l.b16 %v644
    %v3375 = vunpack.c.h.b16 %v644
    %v3376 = vunpack.c.l.b16 %v645
    %v3377 = vunpack.c.h.b16 %v645
    %v3378 = vunpack.c.l.b16 %v646
    %v3379 = vunpack.c.h.b16 %v646
    %v3380 = vunpack.c.l.b16 %v647
    %v3381 = vunpack.c.h.b16 %v647
    %v3382 = vunpack.c.l.b16 %v648
    %v3383 = vunpack.c.h.b16 %v648
    %v3384 = vunpack.c.l.b16 %v649
    %v3385 = vunpack.c.h.b16 %v649
    %v3386 = vunpack.c.l.b16 %v650
    %v3387 = vunpack.c.h.b16 %v650
    %v3388 = vunpack.c.l.b16 %v651
    %v3389 = vunpack.c.h.b16 %v651
    %v3390 = vunpack.c.l.b16 %v652
    %v3391 = vunpack.c.h.b16 %v652
    %v3392 = vunpack.c.l.b16 %v653
    %v3393 = vunpack.c.h.b16 %v653
    %v3394 = vunpack.c.l.b16 %v654
    %v3395 = vunpack.c.h.b16 %v654
    %v3396 = vunpack.c.l.b16 %v655
    %v3397 = vunpack.c.h.b16 %v655
    %v3398 = vunpack.c.l.b16 %v656
    %v3399 = vunpack.c.h.b16 %v656
    %v3400 = vunpack.c.l.b16 %v657
    %v3401 = vunpack.c.h.b16 %v657
    %v3402 = vunpack.c.l.b16 %v658
    %v3403 = vunpack.c.h.b16 %v658
    %v3404 = vunpack.c.l.b16 %v659
    %v3405 = vunpack.c.h.b16 %v659
    %v3406 = vunpack.c.l.b16 %v660
    %v3407 = vunpack.c.h.b16 %v660
    %v3408 = vunpack.c.l.b16 %v661
    %v3409 = vunpack.c.h.b16 %v661
    %v3410 = vunpack.c.l.b16 %v662
    %v3411 = vunpack.c.h.b16 %v662
    %v3412 = vunpack.c.l.b16 %v663
    %v3413 = vunpack.c.h.b16 %v663
    %v3414 = vunpack.c.l.b16 %v664
    %v3415 = vunpack.c.h.b16 %v664
    %v3416 = vunpack.c.l.b16 %v665
    %v3417 = vunpack.c.h.b16 %v665
    %v3418 = vunpack.c.l.b16 %v666
    %v3419 = vunpack.c.h.b16 %v666
    %v3420 = vunpack.c.l.b16 %v667
    %v3421 = vunpack.c.h.b16 %v667
    %v3422 = vunpack.c.l.b16 %v668
    %v3423 = vunpack.c.h.b16 %v668
    %v3424 = vunpack.c.l.b16 %v669
    %v3425 = vunpack.c.h.b16 %v669
    %v3426 = vunpack.c.l.b16 %v670
    %v3427 = vunpack.c.h.b16 %v670
    %v3428 = vunpack.c.l.b16 %v671
    %v3429 = vunpack.c.h.b16 %v671
    %v3430 = vunpack.c.l.b16 %v672
    %v3431 = vunpack.c.h.b16 %v672
    %v3432 = vunpack.c.l.b16 %v673
    %v3433 = vunpack.c.h.b16 %v673
    %v3434 = vunpack.c.l.b16 %v674
    %v3435 = vunpack.c.h.b16 %v674
    %v3436 = vunpack.c.l.b16 %v675
    %v3437 = vunpack.c.h.b16 %v675
    %v3438 = vunpack.c.l.b16 %v676
    %v3439 = vunpack.c.h.b16 %v676
    %v3440 = vunpack.c.l.b16 %v677
    %v3441 = vunpack.c.h.b16 %v677
    %v3442 = vunpack.c.l.b16 %v678
    %v3443 = vunpack.c.h.b16 %v678
    %v3444 = vunpack.c.l.b16 %v679
    %v3445 = vunpack.c.h.b16 %v679
    %v3446 = vunpack.c.l.b16 %v680
    %v3447 = vunpack.c.h.b16 %v680
    %v3448 = vunpack.c.l.b16 %v681
    %v3449 = vunpack.c.h.b16 %v681
    %v3450 = vunpack.c.l.b16 %v682
    %v3451 = vunpack.c.h.b16 %v682
    %v3452 = vunpack.c.l.b16 %v683
    %v3453 = vunpack.c.h.b16 %v683
    %v3454 = vunpack.c.l.b16 %v684
    %v3455 = vunpack.c.h.b16 %v684
    %v3456 = vunpack.c.l.b16 %v685
    %v3457 = vunpack.c.h.b16 %v685
    %v3458 = vunpack.c.l.b16 %v686
    %v3459 = vunpack.c.h.b16 %v686
    %v3460 = vunpack.c.l.b16 %v687
    %v3461 = vunpack.c.h.b16 %v687
    %v3462 = vunpack.c.l.b16 %v688
    %v3463 = vunpack.c.h.b16 %v688
    %v3464 = vunpack.c.l.b16 %v689
    %v3465 = vunpack.c.h.b16 %v689
    %v3466 = vunpack.c.l.b16 %v690
    %v3467 = vunpack.c.h.b16 %v690
    %v3468 = vunpack.c.l.b16 %v691
    %v3469 = vunpack.c.h.b16 %v691
    %v3470 = vunpack.c.l.b16 %v692
    %v3471 = vunpack.c.h.b16 %v692
    %v3472 = vunpack.c.l.b16 %v693
    %v3473 = vunpack.c.h.b16 %v693
    %v3474 = vunpack.c.l.b16 %v694
    %v3475 = vunpack.c.h.b16 %v694
    %v3476 = vunpack.c.l.b16 %v695
    %v3477 = vunpack.c.h.b16 %v695
    %v3478 = vunpack.c.l.b16 %v696
    %v3479 = vunpack.c.h.b16 %v696
    %v3480 = vunpack.c.l.b16 %v697
    %v3481 = vunpack.c.h.b16 %v697
    %v3482 = vunpack.c.l.b16 %v698
    %v3483 = vunpack.c.h.b16 %v698
    %v3484 = vunpack.c.l.b16 %v699
    %v3485 = vunpack.c.h.b16 %v699
    %v3486 = vunpack.c.l.b16 %v700
    %v3487 = vunpack.c.h.b16 %v700
    %v3488 = vunpack.c.l.b16 %v701
    %v3489 = vunpack.c.h.b16 %v701
    %v3490 = vunpack.c.l.b16 %v702
    %v3491 = vunpack.c.h.b16 %v702
    %v3492 = vunpack.c.l.b16 %v703
    %v3493 = vunpack.c.h.b16 %v703
    %v3494 = vunpack.c.l.b16 %v704
    %v3495 = vunpack.c.h.b16 %v704
    %v3496 = vunpack.c.l.b16 %v705
    %v3497 = vunpack.c.h.b16 %v705
    %v3498 = vunpack.c.l.b16 %v706
    %v3499 = vunpack.c.h.b16 %v706
    %v3500 = vunpack.c.l.b16 %v707
    %v3501 = vunpack.c.h.b16 %v707
    %v3502 = vunpack.c.l.b16 %v708
    %v3503 = vunpack.c.h.b16 %v708
    %v3504 = vunpack.c.l.b16 %v709
    %v3505 = vunpack.c.h.b16 %v709
    %v3506 = vunpack.c.l.b16 %v710
    %v3507 = vunpack.c.h.b16 %v710
    %v3508 = vunpack.c.l.b16 %v711
    %v3509 = vunpack.c.h.b16 %v711
    %v3510 = vunpack.c.l.b16 %v712
    %v3511 = vunpack.c.h.b16 %v712
    %v3512 = vunpack.c.l.b16 %v713
    %v3513 = vunpack.c.h.b16 %v713
    %v3514 = vunpack.c.l.b16 %v714
    %v3515 = vunpack.c.h.b16 %v714
    %v3516 = vunpack.c.l.b16 %v715
    %v3517 = vunpack.c.h.b16 %v715
    %v3518 = vunpack.c.l.b16 %v716
    %v3519 = vunpack.c.h.b16 %v716
    %v3520 = vunpack.c.l.b16 %v717
    %v3521 = vunpack.c.h.b16 %v717
    %v3522 = vunpack.c.l.b16 %v718
    %v3523 = vunpack.c.h.b16 %v718
    %v3524 = vunpack.c.l.b16 %v719
    %v3525 = vunpack.c.h.b16 %v719
    %v3526 = vunpack.c.l.b16 %v720
    %v3527 = vunpack.c.h.b16 %v720
    %v3528 = vunpack.c.l.b16 %v721
    %v3529 = vunpack.c.h.b16 %v721
    %v3530 = vunpack.c.l.b16 %v722
    %v3531 = vunpack.c.h.b16 %v722
    %v3532 = vunpack.c.l.b16 %v723
    %v3533 = vunpack.c.h.b16 %v723
    %v3534 = vunpack.c.l.b16 %v724
    %v3535 = vunpack.c.h.b16 %v724
    %v3536 = vunpack.c.l.b16 %v725
    %v3537 = vunpack.c.h.b16 %v725
    %v3538 = vunpack.c.l.b16 %v726
    %v3539 = vunpack.c.h.b16 %v726
    %v3540 = vunpack.c.l.b16 %v727
    %v3541 = vunpack.c.h.b16 %v727
    %v3542 = vunpack.c.l.b16 %v728
    %v3543 = vunpack.c.h.b16 %v728
    %v3544 = vunpack.c.l.b16 %v729
    %v3545 = vunpack.c.h.b16 %v729
    %v3546 = vunpack.c.l.b16 %v730
    %v3547 = vunpack.c.h.b16 %v730
    %v3548 = vunpack.c.l.b16 %v731
    %v3549 = vunpack.c.h.b16 %v731
    %v3550 = vunpack.c.l.b16 %v732
    %v3551 = vunpack.c.h.b16 %v732
    %v3552 = vunpack.c.l.b16 %v733
    %v3553 = vunpack.c.h.b16 %v733
    %v3554 = vunpack.c.l.b16 %v734
    %v3555 = vunpack.c.h.b16 %v734
    %v3556 = vunpack.c.l.b16 %v735
    %v3557 = vunpack.c.h.b16 %v735
    %v3558 = vunpack.c.l.b16 %v736
    %v3559 = vunpack.c.h.b16 %v736
    %v3560 = vunpack.c.l.b16 %v737
    %v3561 = vunpack.c.h.b16 %v737
    %v3562 = vunpack.c.l.b16 %v738
    %v3563 = vunpack.c.h.b16 %v738
    %v3564 = vunpack.c.l.b16 %v739
    %v3565 = vunpack.c.h.b16 %v739
    %v3566 = vunpack.c.l.b16 %v740
    %v3567 = vunpack.c.h.b16 %v740
    %v3568 = vunpack.c.l.b16 %v741
    %v3569 = vunpack.c.h.b16 %v741
    %v3570 = vunpack.c.l.b16 %v742
    %v3571 = vunpack.c.h.b16 %v742
    %v3572 = vunpack.c.l.b16 %v743
    %v3573 = vunpack.c.h.b16 %v743
    %v3574 = vunpack.c.l.b16 %v744
    %v3575 = vunpack.c.h.b16 %v744
    %v3576 = vunpack.c.l.b16 %v745
    %v3577 = vunpack.c.h.b16 %v745
    %v3578 = vunpack.c.l.b16 %v746
    %v3579 = vunpack.c.h.b16 %v746
    %v3580 = vunpack.c.l.b16 %v747
    %v3581 = vunpack.c.h.b16 %v747
    %v3582 = vunpack.c.l.b16 %v748
    %v3583 = vunpack.c.h.b16 %v748
    %v3584 = vunpack.c.l.b16 %v749
    %v3585 = vunpack.c.h.b16 %v749
    %v3586 = vunpack.c.l.b16 %v750
    %v3587 = vunpack.c.h.b16 %v750
    %v3588 = vunpack.c.l.b16 %v751
    %v3589 = vunpack.c.h.b16 %v751
    %v3590 = vunpack.c.l.b16 %v752
    %v3591 = vunpack.c.h.b16 %v752
    %v3592 = vunpack.c.l.b16 %v753
    %v3593 = vunpack.c.h.b16 %v753
    %v3594 = vunpack.c.l.b16 %v754
    %v3595 = vunpack.c.h.b16 %v754
    %v3596 = vunpack.c.l.b16 %v755
    %v3597 = vunpack.c.h.b16 %v755
    %v3598 = vunpack.c.l.b16 %v756
    %v3599 = vunpack.c.h.b16 %v756
    %v3600 = vunpack.c.l.b16 %v757
    %v3601 = vunpack.c.h.b16 %v757
    %v3602 = vunpack.c.l.b16 %v758
    %v3603 = vunpack.c.h.b16 %v758
    %v3604 = vunpack.c.l.b16 %v759
    %v3605 = vunpack.c.h.b16 %v759
    %v3606 = vunpack.c.l.b16 %v760
    %v3607 = vunpack.c.h.b16 %v760
    %v3608 = vunpack.c.l.b16 %v761
    %v3609 = vunpack.c.h.b16 %v761
    %v3610 = vunpack.c.l.b16 %v762
    %v3611 = vunpack.c.h.b16 %v762
    %v3612 = vunpack.c.l.b16 %v763
    %v3613 = vunpack.c.h.b16 %v763
    %v3614 = vunpack.c.l.b16 %v764
    %v3615 = vunpack.c.h.b16 %v764
    %v3616 = vunpack.c.l.b16 %v765
    %v3617 = vunpack.c.h.b16 %v765
    %v3618 = vunpack.c.l.b16 %v766
    %v3619 = vunpack.c.h.b16 %v766
    %v3620 = vunpack.c.l.b16 %v767
    %v3621 = vunpack.c.h.b16 %v767
    %v3622 = vunpack.c.l.b16 %v768
    %v3623 = vunpack.c.h.b16 %v768
    %v3624 = vunpack.c.l.b16 %v769
    %v3625 = vunpack.c.h.b16 %v769
    %v3626 = vunpack.c.l.b16 %v770
    %v3627 = vunpack.c.h.b16 %v770
    %v3628 = vunpack.c.l.b16 %v771
    %v3629 = vunpack.c.h.b16 %v771
    %v3630 = vunpack.c.l.b16 %v772
    %v3631 = vunpack.c.h.b16 %v772
    %v3632 = vunpack.c.l.b16 %v773
    %v3633 = vunpack.c.h.b16 %v773
    %v3634 = vunpack.c.l.b16 %v774
    %v3635 = vunpack.c.h.b16 %v774
    %v3636 = vunpack.c.l.b16 %v775
    %v3637 = vunpack.c.h.b16 %v775
    %v3638 = vunpack.c.l.b16 %v776
    %v3639 = vunpack.c.h.b16 %v776
    %v3640 = vunpack.c.l.b16 %v777
    %v3641 = vunpack.c.h.b16 %v777
    %v3642 = vunpack.c.l.b16 %v778
    %v3643 = vunpack.c.h.b16 %v778
    %v3644 = vunpack.c.l.b16 %v779
    %v3645 = vunpack.c.h.b16 %v779
    %v3646 = vunpack.c.l.b16 %v780
    %v3647 = vunpack.c.h.b16 %v780
    %v3648 = vunpack.c.l.b16 %v781
    %v3649 = vunpack.c.h.b16 %v781
    %v3650 = vunpack.c.l.b16 %v782
    %v3651 = vunpack.c.h.b16 %v782
    %v3652 = vunpack.c.l.b16 %v783
    %v3653 = vunpack.c.h.b16 %v783
    %v3654 = vunpack.c.l.b16 %v784
    %v3655 = vunpack.c.h.b16 %v784
    %v3656 = vunpack.c.l.b16 %v785
    %v3657 = vunpack.c.h.b16 %v785
    %v3658 = vunpack.c.l.b16 %v786
    %v3659 = vunpack.c.h.b16 %v786
    %v3660 = vunpack.c.l.b16 %v787
    %v3661 = vunpack.c.h.b16 %v787
    %v3662 = vunpack.c.l.b16 %v788
    %v3663 = vunpack.c.h.b16 %v788
    %v3664 = vunpack.c.l.b16 %v789
    %v3665 = vunpack.c.h.b16 %v789
    %v3666 = vunpack.c.l.b16 %v790
    %v3667 = vunpack.c.h.b16 %v790
    %v3668 = vunpack.c.l.b16 %v791
    %v3669 = vunpack.c.h.b16 %v791
    %v3670 = vunpack.c.l.b16 %v792
    %v3671 = vunpack.c.h.b16 %v792
    %v3672 = vunpack.c.l.b16 %v793
    %v3673 = vunpack.c.h.b16 %v793
    %v3674 = vunpack.c.l.b16 %v794
    %v3675 = vunpack.c.h.b16 %v794
    %v3676 = vunpack.c.l.b16 %v795
    %v3677 = vunpack.c.h.b16 %v795
    %v3678 = vunpack.c.l.b16 %v796
    %v3679 = vunpack.c.h.b16 %v796
    %v3680 = vunpack.c.l.b16 %v797
    %v3681 = vunpack.c.h.b16 %v797
    %v3682 = vunpack.c.l.b16 %v798
    %v3683 = vunpack.c.h.b16 %v798
    %v3684 = vunpack.c.l.b16 %v799
    %v3685 = vunpack.c.h.b16 %v799
    %v3686 = vunpack.c.l.b16 %v800
    %v3687 = vunpack.c.h.b16 %v800
    %v3688 = vunpack.c.l.b16 %v801
    %v3689 = vunpack.c.h.b16 %v801
    %v3690 = vunpack.c.l.b16 %v802
    %v3691 = vunpack.c.h.b16 %v802
    %v3692 = vunpack.c.l.b16 %v803
    %v3693 = vunpack.c.h.b16 %v803
    %v3694 = vunpack.c.l.b16 %v804
    %v3695 = vunpack.c.h.b16 %v804
    %v3696 = vunpack.c.l.b16 %v805
    %v3697 = vunpack.c.h.b16 %v805
    %v3698 = vunpack.c.l.b16 %v806
    %v3699 = vunpack.c.h.b16 %v806
    %v3700 = vunpack.c.l.b16 %v807
    %v3701 = vunpack.c.h.b16 %v807
    %v3702 = vunpack.c.l.b16 %v808
    %v3703 = vunpack.c.h.b16 %v808
    %v3704 = vunpack.c.l.b16 %v809
    %v3705 = vunpack.c.h.b16 %v809
    %v3706 = vunpack.c.l.b16 %v810
    %v3707 = vunpack.c.h.b16 %v810
    %v3708 = vunpack.c.l.b16 %v811
    %v3709 = vunpack.c.h.b16 %v811
    %v3710 = vunpack.c.l.b16 %v812
    %v3711 = vunpack.c.h.b16 %v812
    %v3712 = vunpack.c.l.b16 %v813
    %v3713 = vunpack.c.h.b16 %v813
    %v3714 = vunpack.c.l.b16 %v814
    %v3715 = vunpack.c.h.b16 %v814
    %v3716 = vunpack.c.l.b16 %v815
    %v3717 = vunpack.c.h.b16 %v815
    %v3718 = vunpack.c.l.b16 %v816
    %v3719 = vunpack.c.h.b16 %v816
    %v3720 = vunpack.c.l.b16 %v817
    %v3721 = vunpack.c.h.b16 %v817
    %v3722 = vunpack.c.l.b16 %v818
    %v3723 = vunpack.c.h.b16 %v818
    %v3724 = vunpack.c.l.b16 %v819
    %v3725 = vunpack.c.h.b16 %v819
    %v3726 = vunpack.c.l.b16 %v820
    %v3727 = vunpack.c.h.b16 %v820
    %v3728 = vunpack.c.l.b16 %v821
    %v3729 = vunpack.c.h.b16 %v821
    %v3730 = vunpack.c.l.b16 %v822
    %v3731 = vunpack.c.h.b16 %v822
    %v3732 = vunpack.c.l.b16 %v823
    %v3733 = vunpack.c.h.b16 %v823
    %v3734 = vunpack.c.l.b16 %v824
    %v3735 = vunpack.c.h.b16 %v824
    %v3736 = vunpack.c.l.b16 %v825
    %v3737 = vunpack.c.h.b16 %v825
    %v3738 = vunpack.c.l.b16 %v826
    %v3739 = vunpack.c.h.b16 %v826
    %v3740 = vunpack.c.l.b16 %v827
    %v3741 = vunpack.c.h.b16 %v827
    %v3742 = vunpack.c.l.b16 %v828
    %v3743 = vunpack.c.h.b16 %v828
    %v3744 = vunpack.c.l.b16 %v829
    %v3745 = vunpack.c.h.b16 %v829
    %v3746 = vunpack.c.l.b16 %v830
    %v3747 = vunpack.c.h.b16 %v830
    %v3748 = vunpack.c.l.b16 %v831
    %v3749 = vunpack.c.h.b16 %v831
    %v3750 = vunpack.c.l.b16 %v832
    %v3751 = vunpack.c.h.b16 %v832
    %v3752 = vunpack.c.l.b16 %v833
    %v3753 = vunpack.c.h.b16 %v833
    %v3754 = vunpack.c.l.b16 %v834
    %v3755 = vunpack.c.h.b16 %v834
    %v3756 = vunpack.c.l.b16 %v835
    %v3757 = vunpack.c.h.b16 %v835
    %v3758 = vunpack.c.l.b16 %v836
    %v3759 = vunpack.c.h.b16 %v836
    %v3760 = vunpack.c.l.b16 %v837
    %v3761 = vunpack.c.h.b16 %v837
    %v3762 = vunpack.c.l.b16 %v838
    %v3763 = vunpack.c.h.b16 %v838
    %v3764 = vunpack.c.l.b16 %v839
    %v3765 = vunpack.c.h.b16 %v839
    %v3766 = vunpack.c.l.b16 %v840
    %v3767 = vunpack.c.h.b16 %v840
    %v3768 = vunpack.c.l.b16 %v841
    %v3769 = vunpack.c.h.b16 %v841
    %v3770 = vunpack.c.l.b16 %v842
    %v3771 = vunpack.c.h.b16 %v842
    %v3772 = vunpack.c.l.b16 %v843
    %v3773 = vunpack.c.h.b16 %v843
    %v3774 = vunpack.c.l.b16 %v844
    %v3775 = vunpack.c.h.b16 %v844
    %v3776 = vunpack.c.l.b16 %v845
    %v3777 = vunpack.c.h.b16 %v845
    %v3778 = vunpack.c.l.b16 %v846
    %v3779 = vunpack.c.h.b16 %v846
    %v3780 = vunpack.c.l.b16 %v847
    %v3781 = vunpack.c.h.b16 %v847
    %v3782 = vunpack.c.l.b16 %v848
    %v3783 = vunpack.c.h.b16 %v848
    %v3784 = vunpack.c.l.b16 %v849
    %v3785 = vunpack.c.h.b16 %v849
    %v3786 = vunpack.c.l.b16 %v850
    %v3787 = vunpack.c.h.b16 %v850
    %v3788 = vunpack.c.l.b16 %v851
    %v3789 = vunpack.c.h.b16 %v851
    %v3790 = vunpack.c.l.b16 %v852
    %v3791 = vunpack.c.h.b16 %v852
    %v3792 = vunpack.c.l.b16 %v853
    %v3793 = vunpack.c.h.b16 %v853
    %v3794 = vunpack.c.l.b16 %v854
    %v3795 = vunpack.c.h.b16 %v854
    %v3796 = vunpack.c.l.b16 %v855
    %v3797 = vunpack.c.h.b16 %v855
    %v3798 = vunpack.c.l.b16 %v856
    %v3799 = vunpack.c.h.b16 %v856
    %v3800 = vunpack.c.l.b16 %v857
    %v3801 = vunpack.c.h.b16 %v857
    %v3802 = vunpack.c.l.b16 %v858
    %v3803 = vunpack.c.h.b16 %v858
    %v3804 = vunpack.c.l.b16 %v859
    %v3805 = vunpack.c.h.b16 %v859
    %v3806 = vunpack.c.l.b16 %v860
    %v3807 = vunpack.c.h.b16 %v860
    %v3808 = vunpack.c.l.b16 %v861
    %v3809 = vunpack.c.h.b16 %v861
    %v3810 = vunpack.c.l.b16 %v862
    %v3811 = vunpack.c.h.b16 %v862
    %v3812 = vunpack.c.l.b16 %v863
    %v3813 = vunpack.c.h.b16 %v863
    %v3814 = vunpack.c.l.b16 %v864
    %v3815 = vunpack.c.h.b16 %v864
    %v3816 = vunpack.c.l.b16 %v865
    %v3817 = vunpack.c.h.b16 %v865
    %v3818 = vunpack.c.l.b16 %v866
    %v3819 = vunpack.c.h.b16 %v866
    %v3820 = vunpack.c.l.b16 %v867
    %v3821 = vunpack.c.h.b16 %v867
    %v3822 = vunpack.c.l.b16 %v868
    %v3823 = vunpack.c.h.b16 %v868
    %v3824 = vunpack.c.l.b16 %v869
    %v3825 = vunpack.c.h.b16 %v869
    %v3826 = vunpack.c.l.b16 %v870
    %v3827 = vunpack.c.h.b16 %v870
    %v3828 = vunpack.c.l.b16 %v871
    %v3829 = vunpack.c.h.b16 %v871
    %v3830 = vunpack.c.l.b16 %v872
    %v3831 = vunpack.c.h.b16 %v872
    %v3832 = vunpack.c.l.b16 %v873
    %v3833 = vunpack.c.h.b16 %v873
    %v3834 = vunpack.c.l.b16 %v874
    %v3835 = vunpack.c.h.b16 %v874
    %v3836 = vunpack.c.l.b16 %v875
    %v3837 = vunpack.c.h.b16 %v875
    %v3838 = vunpack.c.l.b16 %v876
    %v3839 = vunpack.c.h.b16 %v876
    %v3840 = vunpack.c.l.b16 %v877
    %v3841 = vunpack.c.h.b16 %v877
    %v3842 = vunpack.c.l.b16 %v878
    %v3843 = vunpack.c.h.b16 %v878
    %v3844 = vunpack.c.l.b16 %v879
    %v3845 = vunpack.c.h.b16 %v879
    %v3846 = vunpack.c.l.b16 %v880
    %v3847 = vunpack.c.h.b16 %v880
    %v3848 = vunpack.c.l.b16 %v881
    %v3849 = vunpack.c.h.b16 %v881
    %v3850 = vunpack.c.l.b16 %v882
    %v3851 = vunpack.c.h.b16 %v882
    %v3852 = vunpack.c.l.b16 %v883
    %v3853 = vunpack.c.h.b16 %v883
    %v3854 = vunpack.c.l.b16 %v884
    %v3855 = vunpack.c.h.b16 %v884
    %v3856 = vunpack.c.l.b16 %v885
    %v3857 = vunpack.c.h.b16 %v885
    %v3858 = vunpack.c.l.b16 %v886
    %v3859 = vunpack.c.h.b16 %v886
    %v3860 = vunpack.c.l.b16 %v887
    %v3861 = vunpack.c.h.b16 %v887
    %v3862 = vunpack.c.l.b16 %v888
    %v3863 = vunpack.c.h.b16 %v888
    %v3864 = vunpack.c.l.b16 %v889
    %v3865 = vunpack.c.h.b16 %v889
    %v3866 = vunpack.c.l.b16 %v890
    %v3867 = vunpack.c.h.b16 %v890
    %v3868 = vunpack.c.l.b16 %v891
    %v3869 = vunpack.c.h.b16 %v891
    %v3870 = vunpack.c.l.b16 %v892
    %v3871 = vunpack.c.h.b16 %v892
    %v3872 = vunpack.c.l.b16 %v893
    %v3873 = vunpack.c.h.b16 %v893
    %v3874 = vunpack.c.l.b16 %v894
    %v3875 = vunpack.c.h.b16 %v894
    %v3876 = vunpack.c.l.b16 %v895
    %v3877 = vunpack.c.h.b16 %v895
    %v3878 = vunpack.c.l.b16 %v896
    %v3879 = vunpack.c.h.b16 %v896
    %v3880 = vunpack.c.l.b16 %v897
    %v3881 = vunpack.c.h.b16 %v897
    %v3882 = vunpack.c.l.b16 %v898
    %v3883 = vunpack.c.h.b16 %v898
    %v3884 = vunpack.c.l.b16 %v899
    %v3885 = vunpack.c.h.b16 %v899
    %v3886 = vunpack.c.l.b16 %v900
    %v3887 = vunpack.c.h.b16 %v900
    %v3888 = vunpack.c.l.b16 %v901
    %v3889 = vunpack.c.h.b16 %v901
    %v3890 = vunpack.c.l.b16 %v902
    %v3891 = vunpack.c.h.b16 %v902
    %v3892 = vunpack.c.l.b16 %v903
    %v3893 = vunpack.c.h.b16 %v903
    %v3894 = vunpack.c.l.b16 %v904
    %v3895 = vunpack.c.h.b16 %v904
    %v3896 = vunpack.c.l.b16 %v905
    %v3897 = vunpack.c.h.b16 %v905
    %v3898 = vunpack.c.l.b16 %v906
    %v3899 = vunpack.c.h.b16 %v906
    %v3900 = vunpack.c.l.b16 %v907
    %v3901 = vunpack.c.h.b16 %v907
    %v3902 = vunpack.c.l.b16 %v908
    %v3903 = vunpack.c.h.b16 %v908
    %v3904 = vunpack.c.l.b16 %v909
    %v3905 = vunpack.c.h.b16 %v909
    %v3906 = vunpack.c.l.b16 %v910
    %v3907 = vunpack.c.h.b16 %v910
    %v3908 = vunpack.c.l.b16 %v911
    %v3909 = vunpack.c.h.b16 %v911
    %v3910 = vunpack.c.l.b16 %v912
    %v3911 = vunpack.c.h.b16 %v912
    %v3912 = vunpack.c.l.b16 %v913
    %v3913 = vunpack.c.h.b16 %v913
    %v3914 = vunpack.c.l.b16 %v914
    %v3915 = vunpack.c.h.b16 %v914
    %v3916 = vunpack.c.l.b16 %v915
    %v3917 = vunpack.c.h.b16 %v915
    %v3918 = vunpack.c.l.b16 %v916
    %v3919 = vunpack.c.h.b16 %v916
    %v3920 = vunpack.c.l.b16 %v917
    %v3921 = vunpack.c.h.b16 %v917
    %v3922 = vunpack.c.l.b16 %v918
    %v3923 = vunpack.c.h.b16 %v918
    %v3924 = vunpack.c.l.b16 %v919
    %v3925 = vunpack.c.h.b16 %v919
    %v3926 = vunpack.c.l.b16 %v920
    %v3927 = vunpack.c.h.b16 %v920
    %v3928 = vunpack.c.l.b16 %v921
    %v3929 = vunpack.c.h.b16 %v921
    %v3930 = vunpack.c.l.b16 %v922
    %v3931 = vunpack.c.h.b16 %v922
    %v3932 = vunpack.c.l.b16 %v923
    %v3933 = vunpack.c.h.b16 %v923
    %v3934 = vunpack.c.l.b16 %v924
    %v3935 = vunpack.c.h.b16 %v924
    %v3936 = vunpack.c.l.b16 %v925
    %v3937 = vunpack.c.h.b16 %v925
    %v3938 = vunpack.c.l.b16 %v926
    %v3939 = vunpack.c.h.b16 %v926
    %v3940 = vunpack.c.l.b16 %v927
    %v3941 = vunpack.c.h.b16 %v927
    %v3942 = vunpack.c.l.b16 %v928
    %v3943 = vunpack.c.h.b16 %v928
    %v3944 = vunpack.c.l.b16 %v929
    %v3945 = vunpack.c.h.b16 %v929
    %v3946 = vunpack.c.l.b16 %v930
    %v3947 = vunpack.c.h.b16 %v930
    %v3948 = vunpack.c.l.b16 %v931
    %v3949 = vunpack.c.h.b16 %v931
    %v3950 = vunpack.c.l.b16 %v932
    %v3951 = vunpack.c.h.b16 %v932
    %v3952 = vunpack.c.l.b16 %v933
    %v3953 = vunpack.c.h.b16 %v933
    %v3954 = vunpack.c.l.b16 %v934
    %v3955 = vunpack.c.h.b16 %v934
    %v3956 = vunpack.c.l.b16 %v935
    %v3957 = vunpack.c.h.b16 %v935
    %v3958 = vunpack.c.l.b16 %v936
    %v3959 = vunpack.c.h.b16 %v936
    %v3960 = vunpack.c.l.b16 %v937
    %v3961 = vunpack.c.h.b16 %v937
    %v3962 = vunpack.c.l.b16 %v938
    %v3963 = vunpack.c.h.b16 %v938
    %v3964 = vunpack.c.l.b16 %v939
    %v3965 = vunpack.c.h.b16 %v939
    %v3966 = vunpack.c.l.b16 %v940
    %v3967 = vunpack.c.h.b16 %v940
    %v3968 = vunpack.c.l.b16 %v941
    %v3969 = vunpack.c.h.b16 %v941
    %v3970 = vunpack.c.l.b16 %v942
    %v3971 = vunpack.c.h.b16 %v942
    %v3972 = vunpack.c.l.b16 %v943
    %v3973 = vunpack.c.h.b16 %v943
    %v3974 = vunpack.c.l.b16 %v944
    %v3975 = vunpack.c.h.b16 %v944
    %v3976 = vunpack.c.l.b16 %v945
    %v3977 = vunpack.c.h.b16 %v945
    %v3978 = vunpack.c.l.b16 %v946
    %v3979 = vunpack.c.h.b16 %v946
    %v3980 = vunpack.c.l.b16 %v947
    %v3981 = vunpack.c.h.b16 %v947
    %v3982 = vunpack.c.l.b16 %v948
    %v3983 = vunpack.c.h.b16 %v948
    %v3984 = vunpack.c.l.b16 %v949
    %v3985 = vunpack.c.h.b16 %v949
    %v3986 = vunpack.c.l.b16 %v950
    %v3987 = vunpack.c.h.b16 %v950
    %v3988 = vunpack.c.l.b16 %v951
    %v3989 = vunpack.c.h.b16 %v951
    %v3990 = vunpack.c.l.b16 %v952
    %v3991 = vunpack.c.h.b16 %v952
    %v3992 = vunpack.c.l.b16 %v953
    %v3993 = vunpack.c.h.b16 %v953
    %v3994 = vunpack.c.l.b16 %v954
    %v3995 = vunpack.c.h.b16 %v954
    %v3996 = vunpack.c.l.b16 %v955
    %v3997 = vunpack.c.h.b16 %v955
    %v3998 = vunpack.c.l.b16 %v956
    %v3999 = vunpack.c.h.b16 %v956
    %v4000 = vunpack.c.l.b16 %v957
    %v4001 = vunpack.c.h.b16 %v957
    %v4002 = vunpack.c.l.b16 %v958
    %v4003 = vunpack.c.h.b16 %v958
    %v4004 = vunpack.c.l.b16 %v959
    %v4005 = vunpack.c.h.b16 %v959
    %v4006 = vunpack.c.l.b16 %v960
    %v4007 = vunpack.c.h.b16 %v960
    %v4008 = vunpack.c.l.b16 %v961
    %v4009 = vunpack.c.h.b16 %v961
    %v4010 = vunpack.c.l.b16 %v962
    %v4011 = vunpack.c.h.b16 %v962
    %v4012 = vunpack.c.l.b16 %v963
    %v4013 = vunpack.c.h.b16 %v963
    %v4014 = vunpack.c.l.b16 %v964
    %v4015 = vunpack.c.h.b16 %v964
    %v4016 = vunpack.c.l.b16 %v965
    %v4017 = vunpack.c.h.b16 %v965
    %v4018 = vunpack.c.l.b16 %v966
    %v4019 = vunpack.c.h.b16 %v966
    %v4020 = vunpack.c.l.b16 %v967
    %v4021 = vunpack.c.h.b16 %v967
    %v4022 = vunpack.c.l.b16 %v968
    %v4023 = vunpack.c.h.b16 %v968
    %v4024 = vunpack.c.l.b16 %v969
    %v4025 = vunpack.c.h.b16 %v969
    %v4026 = vunpack.c.l.b16 %v970
    %v4027 = vunpack.c.h.b16 %v970
    %v4028 = vunpack.c.l.b16 %v971
    %v4029 = vunpack.c.h.b16 %v971
    %v4030 = vunpack.c.l.b16 %v972
    %v4031 = vunpack.c.h.b16 %v972
    %v4032 = vunpack.c.l.b16 %v973
    %v4033 = vunpack.c.h.b16 %v973
    %v4034 = vunpack.c.l.b16 %v974
    %v4035 = vunpack.c.h.b16 %v974
    %v4036 = vunpack.c.l.b16 %v975
    %v4037 = vunpack.c.h.b16 %v975
    %v4038 = vunpack.c.l.b16 %v976
    %v4039 = vunpack.c.h.b16 %v976
    %v4040 = vunpack.c.l.b16 %v977
    %v4041 = vunpack.c.h.b16 %v977
    %v4042 = vunpack.c.l.b16 %v978
    %v4043 = vunpack.c.h.b16 %v978
    %v4044 = vunpack.c.l.b16 %v979
    %v4045 = vunpack.c.h.b16 %v979
    %v4046 = vunpack.c.l.b16 %v980
    %v4047 = vunpack.c.h.b16 %v980
    %v4048 = vunpack.c.l.b16 %v981
    %v4049 = vunpack.c.h.b16 %v981
    %v4050 = vunpack.c.l.b16 %v982
    %v4051 = vunpack.c.h.b16 %v982
    %v4052 = vunpack.c.l.b16 %v983
    %v4053 = vunpack.c.h.b16 %v983
    %v4054 = vunpack.c.l.b16 %v984
    %v4055 = vunpack.c.h.b16 %v984
    %v4056 = vunpack.c.l.b16 %v985
    %v4057 = vunpack.c.h.b16 %v985
    %v4058 = vunpack.c.l.b16 %v986
    %v4059 = vunpack.c.h.b16 %v986
    %v4060 = vunpack.c.l.b16 %v987
    %v4061 = vunpack.c.h.b16 %v987
    %v4062 = vunpack.c.l.b16 %v988
    %v4063 = vunpack.c.h.b16 %v988
    %v4064 = vunpack.c.l.b16 %v989
    %v4065 = vunpack.c.h.b16 %v989
    %v4066 = vunpack.c.l.b16 %v990
    %v4067 = vunpack.c.h.b16 %v990
    %v4068 = vunpack.c.l.b16 %v991
    %v4069 = vunpack.c.h.b16 %v991
    %v4070 = vunpack.c.l.b16 %v992
    %v4071 = vunpack.c.h.b16 %v992
    %v4072 = vunpack.c.l.b16 %v993
    %v4073 = vunpack.c.h.b16 %v993
    %v4074 = vunpack.c.l.b16 %v994
    %v4075 = vunpack.c.h.b16 %v994
    %v4076 = vunpack.c.l.b16 %v995
    %v4077 = vunpack.c.h.b16 %v995
    %v4078 = vunpack.c.l.b16 %v996
    %v4079 = vunpack.c.h.b16 %v996
    %v4080 = vunpack.c.l.b16 %v997
    %v4081 = vunpack.c.h.b16 %v997
    %v4082 = vunpack.c.l.b16 %v998
    %v4083 = vunpack.c.h.b16 %v998
    %v4084 = vunpack.c.l.b16 %v999
    %v4085 = vunpack.c.h.b16 %v999
    %v4086 = vunpack.c.l.b16 %v1000
    %v4087 = vunpack.c.h.b16 %v1000
    %v4088 = vunpack.c.l.b16 %v1001
    %v4089 = vunpack.c.h.b16 %v1001
    %v4090 = vunpack.c.l.b16 %v1002
    %v4091 = vunpack.c.h.b16 %v1002
    %v4092 = vunpack.c.l.b16 %v1003
    %v4093 = vunpack.c.h.b16 %v1003
    %v4094 = vunpack.c.l.b16 %v1004
    %v4095 = vunpack.c.h.b16 %v1004
    %v4096 = vunpack.c.l.b16 %v1005
    %v4097 = vunpack.c.h.b16 %v1005
    %v4098 = vunpack.c.l.b16 %v1006
    %v4099 = vunpack.c.h.b16 %v1006
    %v4100 = vunpack.c.l.b16 %v1007
    %v4101 = vunpack.c.h.b16 %v1007
    %v4102 = vunpack.c.l.b16 %v1008
    %v4103 = vunpack.c.h.b16 %v1008
    %v4104 = vunpack.c.l.b16 %v1009
    %v4105 = vunpack.c.h.b16 %v1009
    %v4106 = vunpack.c.l.b16 %v1010
    %v4107 = vunpack.c.h.b16 %v1010
    %v4108 = vunpack.c.l.b16 %v1011
    %v4109 = vunpack.c.h.b16 %v1011
    %v4110 = vunpack.c.l.b16 %v1012
    %v4111 = vunpack.c.h.b16 %v1012
    %v4112 = vunpack.c.l.b16 %v1013
    %v4113 = vunpack.c.h.b16 %v1013
    %v4114 = vunpack.c.l.b16 %v1014
    %v4115 = vunpack.c.h.b16 %v1014
    %v4116 = vunpack.c.l.b16 %v1015
    %v4117 = vunpack.c.h.b16 %v1015
    %v4118 = vunpack.c.l.b16 %v1016
    %v4119 = vunpack.c.h.b16 %v1016
    %v4120 = vunpack.c.l.b16 %v1017
    %v4121 = vunpack.c.h.b16 %v1017
    %v4122 = vunpack.c.l.b16 %v1018
    %v4123 = vunpack.c.h.b16 %v1018
    %v4124 = vunpack.c.l.b16 %v1019
    %v4125 = vunpack.c.h.b16 %v1019
    %v4126 = vunpack.c.l.b16 %v1020
    %v4127 = vunpack.c.h.b16 %v1020
    %v4128 = vunpack.c.l.b16 %v1021
    %v4129 = vunpack.c.h.b16 %v1021
    %v4130 = vunpack.c.l.b16 %v1022
    %v4131 = vunpack.c.h.b16 %v1022
    %v4132 = vunpack.c.l.b16 %v1023
    %v4133 = vunpack.c.h.b16 %v1023
    %v4134 = vunpack.c.l.b16 %v1024
    %v4135 = vunpack.c.h.b16 %v1024
    %v4136 = vunpack.c.l.b16 %v1025
    %v4137 = vunpack.c.h.b16 %v1025
    %v4138 = vunpack.c.l.b16 %v1026
    %v4139 = vunpack.c.h.b16 %v1026
    %v4140 = vunpack.c.l.b16 %v1027
    %v4141 = vunpack.c.h.b16 %v1027
    %v4142 = vunpack.c.l.b16 %v1028
    %v4143 = vunpack.c.h.b16 %v1028
    %v4144 = vunpack.c.l.b16 %v1029
    %v4145 = vunpack.c.h.b16 %v1029
    %v4146 = vunpack.c.l.b16 %v1030
    %v4147 = vunpack.c.h.b16 %v1030
    %v4148 = vunpack.c.l.b16 %v1031
    %v4149 = vunpack.c.h.b16 %v1031
    %v4150 = vunpack.c.l.b16 %v1032
    %v4151 = vunpack.c.h.b16 %v1032
    %v4152 = vunpack.c.l.b16 %v1033
    %v4153 = vunpack.c.h.b16 %v1033
    %v4154 = vunpack.c.l.b16 %v1034
    %v4155 = vunpack.c.h.b16 %v1034
    %v4156 = vunpack.c.l.b16 %v1035
    %v4157 = vunpack.c.h.b16 %v1035
    %v4158 = vunpack.c.l.b16 %v1036
    %v4159 = vunpack.c.h.b16 %v1036
    %v4160 = vunpack.c.l.b16 %v1037
    %v4161 = vunpack.c.h.b16 %v1037
    %v4162 = vunpack.c.l.b16 %v1038
    %v4163 = vunpack.c.h.b16 %v1038
    %v4164 = vunpack.c.l.b16 %v1039
    %v4165 = vunpack.c.h.b16 %v1039
    %v4166 = vunpack.c.l.b16 %v1040
    %v4167 = vunpack.c.h.b16 %v1040
    %v4168 = vunpack.c.l.b16 %v1041
    %v4169 = vunpack.c.h.b16 %v1041
    %v4170 = vunpack.c.l.b16 %v1042
    %v4171 = vunpack.c.h.b16 %v1042
    %v4172 = vunpack.c.l.b16 %v1043
    %v4173 = vunpack.c.h.b16 %v1043
    %v4174 = vunpack.c.l.b16 %v1044
    %v4175 = vunpack.c.h.b16 %v1044
    %v4176 = vunpack.c.l.b16 %v1045
    %v4177 = vunpack.c.h.b16 %v1045
    %v4178 = vunpack.c.l.b16 %v1046
    %v4179 = vunpack.c.h.b16 %v1046
    %v4180 = vunpack.c.l.b16 %v1047
    %v4181 = vunpack.c.h.b16 %v1047
    %v4182 = vunpack.c.l.b16 %v1048
    %v4183 = vunpack.c.h.b16 %v1048
    %v4184 = vunpack.c.l.b16 %v1049
    %v4185 = vunpack.c.h.b16 %v1049
    %v4186 = vunpack.c.l.b16 %v1050
    %v4187 = vunpack.c.h.b16 %v1050
    %v4188 = vunpack.c.l.b16 %v1051
    %v4189 = vunpack.c.h.b16 %v1051
    %v4190 = vunpack.c.l.b16 %v1052
    %v4191 = vunpack.c.h.b16 %v1052
    %v4192 = vunpack.c.l.b16 %v1053
    %v4193 = vunpack.c.h.b16 %v1053
    %v4194 = vunpack.c.l.b16 %v1054
    %v4195 = vunpack.c.h.b16 %v1054
    %v4196 = vunpack.c.l.b16 %v1055
    %v4197 = vunpack.c.h.b16 %v1055
    %v4198 = vunpack.c.l.b16 %v1056
    %v4199 = vunpack.c.h.b16 %v1056
    %v4200 = vunpack.c.l.b16 %v1057
    %v4201 = vunpack.c.h.b16 %v1057
    %v4202 = vunpack.c.l.b16 %v1058
    %v4203 = vunpack.c.h.b16 %v1058
    %v4204 = vunpack.c.l.b16 %v1059
    %v4205 = vunpack.c.h.b16 %v1059
    %v4206 = vunpack.c.l.b16 %v1060
    %v4207 = vunpack.c.h.b16 %v1060
    %v4208 = vunpack.c.l.b16 %v1061
    %v4209 = vunpack.c.h.b16 %v1061
    %v4210 = vunpack.c.l.b16 %v1062
    %v4211 = vunpack.c.h.b16 %v1062
    %v4212 = vunpack.c.l.b16 %v1063
    %v4213 = vunpack.c.h.b16 %v1063
    %v4214 = vunpack.c.l.b16 %v1064
    %v4215 = vunpack.c.h.b16 %v1064
    %v4216 = vunpack.c.l.b16 %v1065
    %v4217 = vunpack.c.h.b16 %v1065
    %v4218 = vunpack.c.l.b16 %v1066
    %v4219 = vunpack.c.h.b16 %v1066
    %v4220 = vunpack.c.l.b16 %v1067
    %v4221 = vunpack.c.h.b16 %v1067
    %v4222 = vunpack.c.l.b16 %v1068
    %v4223 = vunpack.c.h.b16 %v1068
    %v4224 = vunpack.c.l.b16 %v1069
    %v4225 = vunpack.c.h.b16 %v1069
    %v4226 = vunpack.c.l.b16 %v1070
    %v4227 = vunpack.c.h.b16 %v1070
    %v4228 = vunpack.c.l.b16 %v1071
    %v4229 = vunpack.c.h.b16 %v1071
    %v4230 = vunpack.c.l.b16 %v1072
    %v4231 = vunpack.c.h.b16 %v1072
    %v4232 = vunpack.c.l.b16 %v1073
    %v4233 = vunpack.c.h.b16 %v1073
    %v4234 = vunpack.c.l.b16 %v1074
    %v4235 = vunpack.c.h.b16 %v1074
    %v4236 = vunpack.c.l.b16 %v1075
    %v4237 = vunpack.c.h.b16 %v1075
    %v4238 = vunpack.c.l.b16 %v1076
    %v4239 = vunpack.c.h.b16 %v1076
    %v4240 = vunpack.c.l.b16 %v1077
    %v4241 = vunpack.c.h.b16 %v1077
    %v4242 = vunpack.c.l.b16 %v1078
    %v4243 = vunpack.c.h.b16 %v1078
    %v4244 = vunpack.c.l.b16 %v1079
    %v4245 = vunpack.c.h.b16 %v1079
    %v4246 = vunpack.c.l.b16 %v1080
    %v4247 = vunpack.c.h.b16 %v1080
    %v4248 = vunpack.c.l.b16 %v1081
    %v4249 = vunpack.c.h.b16 %v1081
    %v4250 = vunpack.c.l.b16 %v1082
    %v4251 = vunpack.c.h.b16 %v1082
    %v4252 = vunpack.c.l.b16 %v1083
    %v4253 = vunpack.c.h.b16 %v1083
    %v4254 = vpack.c.b16 %v2214, %v2206
    %v4255 = vpack.c.b16 %v2215, %v2207
    %v4256 = vpack.c.b16 %v2216, %v2208
    %v4257 = vpack.c.b16 %v2217, %v2209
    %v4258 = vpack.c.b16 %v2218, %v2210
    %v4259 = vpack.c.b16 %v2219, %v2211
    %v4260 = vpack.c.b16 %v2220, %v2212
    %v4261 = vpack.c.b16 %v2221, %v2213
    %v4262 = vpack.c.b16 %v2230, %v2222
    %v4263 = vpack.c.b16 %v2231, %v2223
    %v4264 = vpack.c.b16 %v2232, %v2224
    %v4265 = vpack.c.b16 %v2233, %v2225
    %v4266 = vpack.c.b16 %v2234, %v2226
    %v4267 = vpack.c.b16 %v2235, %v2227
    %v4268 = vpack.c.b16 %v2236, %v2228
    %v4269 = vpack.c.b16 %v2237, %v2229
    %v4270 = vpack.c.b16 %v2246, %v2238
    %v4271 = vpack.c.b16 %v2247, %v2239
    %v4272 = vpack.c.b16 %v2248, %v2240
    %v4273 = vpack.c.b16 %v2249, %v2241
    %v4274 = vpack.c.b16 %v2250, %v2242
    %v4275 = vpack.c.b16 %v2251, %v2243
    %v4276 = vpack.c.b16 %v2252, %v2244
    %v4277 = vpack.c.b16 %v2253, %v2245
    %v4278 = vpack.c.b16 %v2262, %v2254
    %v4279 = vpack.c.b16 %v2263, %v2255
    %v4280 = vpack.c.b16 %v2264, %v2256
    %v4281 = vpack.c.b16 %v2265, %v2257
    %v4282 = vpack.c.b16 %v2266, %v2258
    %v4283 = vpack.c.b16 %v2267, %v2259
    %v4284 = vpack.c.b16 %v2268, %v2260
    %v4285 = vpack.c.b16 %v2269, %v2261
    %v4286 = vpack.c.b16 %v2278, %v2270
    %v4287 = vpack.c.b16 %v2279, %v2271
    %v4288 = vpack.c.b16 %v2280, %v2272
    %v4289 = vpack.c.b16 %v2281, %v2273
    %v4290 = vpack.c.b16 %v2282, %v2274
    %v4291 = vpack.c.b16 %v2283, %v2275
    %v4292 = vpack.c.b16 %v2284, %v2276
    %v4293 = vpack.c.b16 %v2285, %v2277
    %v4294 = vpack.c.b16 %v2294, %v2286
    %v4295 = vpack.c.b16 %v2295, %v2287
    %v4296 = vpack.c.b16 %v2296, %v2288
    %v4297 = vpack.c.b16 %v2297, %v2289
    %v4298 = vpack.c.b16 %v2298, %v2290
    %v4299 = vpack.c.b16 %v2299, %v2291
    %v4300 = vpack.c.b16 %v2300, %v2292
    %v4301 = vpack.c.b16 %v2301, %v2293
    %v4302 = vpack.c.b16 %v2310, %v2302
    %v4303 = vpack.c.b16 %v2311, %v2303
    %v4304 = vpack.c.b16 %v2312, %v2304
    %v4305 = vpack.c.b16 %v2313, %v2305
    %v4306 = vpack.c.b16 %v2314, %v2306
    %v4307 = vpack.c.b16 %v2315, %v2307
    %v4308 = vpack.c.b16 %v2316, %v2308
    %v4309 = vpack.c.b16 %v2317, %v2309
    %v4310 = vpack.c.b16 %v2326, %v2318
    %v4311 = vpack.c.b16 %v2327, %v2319
    %v4312 = vpack.c.b16 %v2328, %v2320
    %v4313 = vpack.c.b16 %v2329, %v2321
    %v4314 = vpack.c.b16 %v2330, %v2322
    %v4315 = vpack.c.b16 %v2331, %v2323
    %v4316 = vpack.c.b16 %v2332, %v2324
    %v4317 = vpack.c.b16 %v2333, %v2325
    %v4318 = vpack.c.b16 %v2342, %v2334
    %v4319 = vpack.c.b16 %v2343, %v2335
    %v4320 = vpack.c.b16 %v2344, %v2336
    %v4321 = vpack.c.b16 %v2345, %v2337
    %v4322 = vpack.c.b16 %v2346, %v2338
    %v4323 = vpack.c.b16 %v2347, %v2339
    %v4324 = vpack.c.b16 %v2348, %v2340
    %v4325 = vpack.c.b16 %v2349, %v2341
    %v4326 = vpack.c.b16 %v2358, %v2350
    %v4327 = vpack.c.b16 %v2359, %v2351
    %v4328 = vpack.c.b16 %v2360, %v2352
    %v4329 = vpack.c.b16 %v2361, %v2353
    %v4330 = vpack.c.b16 %v2362, %v2354
    %v4331 = vpack.c.b16 %v2363, %v2355
    %v4332 = vpack.c.b16 %v2364, %v2356
    %v4333 = vpack.c.b16 %v2365, %v2357
    %v4334 = vpack.c.b16 %v2374, %v2366
    %v4335 = vpack.c.b16 %v2375, %v2367
    %v4336 = vpack.c.b16 %v2376, %v2368
    %v4337 = vpack.c.b16 %v2377, %v2369
    %v4338 = vpack.c.b16 %v2378, %v2370
    %v4339 = vpack.c.b16 %v2379, %v2371
    %v4340 = vpack.c.b16 %v2380, %v2372
    %v4341 = vpack.c.b16 %v2381, %v2373
    %v4342 = vpack.c.b16 %v2390, %v2382
    %v4343 = vpack.c.b16 %v2391, %v2383
    %v4344 = vpack.c.b16 %v2392, %v2384
    %v4345 = vpack.c.b16 %v2393, %v2385
    %v4346 = vpack.c.b16 %v2394, %v2386
    %v4347 = vpack.c.b16 %v2395, %v2387
    %v4348 = vpack.c.b16 %v2396, %v2388
    %v4349 = vpack.c.b16 %v2397, %v2389
    %v4350 = vpack.c.b16 %v2406, %v2398
    %v4351 = vpack.c.b16 %v2407, %v2399
    %v4352 = vpack.c.b16 %v2408, %v2400
    %v4353 = vpack.c.b16 %v2409, %v2401
    %v4354 = vpack.c.b16 %v2410, %v2402
    %v4355 = vpack.c.b16 %v2411, %v2403
    %v4356 = vpack.c.b16 %v2412, %v2404
    %v4357 = vpack.c.b16 %v2413, %v2405
    %v4358 = vpack.c.b16 %v2422, %v2414
    %v4359 = vpack.c.b16 %v2423, %v2415
    %v4360 = vpack.c.b16 %v2424, %v2416
    %v4361 = vpack.c.b16 %v2425, %v2417
    %v4362 = vpack.c.b16 %v2426, %v2418
    %v4363 = vpack.c.b16 %v2427, %v2419
    %v4364 = vpack.c.b16 %v2428, %v2420
    %v4365 = vpack.c.b16 %v2429, %v2421
    %v4366 = vpack.c.b16 %v2438, %v2430
    %v4367 = vpack.c.b16 %v2439, %v2431
    %v4368 = vpack.c.b16 %v2440, %v2432
    %v4369 = vpack.c.b16 %v2441, %v2433
    %v4370 = vpack.c.b16 %v2442, %v2434
    %v4371 = vpack.c.b16 %v2443, %v2435
    %v4372 = vpack.c.b16 %v2444, %v2436
    %v4373 = vpack.c.b16 %v2445, %v2437
    %v4374 = vpack.c.b16 %v2454, %v2446
    %v4375 = vpack.c.b16 %v2455, %v2447
    %v4376 = vpack.c.b16 %v2456, %v2448
    %v4377 = vpack.c.b16 %v2457, %v2449
    %v4378 = vpack.c.b16 %v2458, %v2450
    %v4379 = vpack.c.b16 %v2459, %v2451
    %v4380 = vpack.c.b16 %v2460, %v2452
    %v4381 = vpack.c.b16 %v2461, %v2453
    %v4382 = vpack.c.b16 %v2470, %v2462
    %v4383 = vpack.c.b16 %v2471, %v2463
    %v4384 = vpack.c.b16 %v2472, %v2464
    %v4385 = vpack.c.b16 %v2473, %v2465
    %v4386 = vpack.c.b16 %v2474, %v2466
    %v4387 = vpack.c.b16 %v2475, %v2467
    %v4388 = vpack.c.b16 %v2476, %v2468
    %v4389 = vpack.c.b16 %v2477, %v2469
    %v4390 = vpack.c.b16 %v2486, %v2478
    %v4391 = vpack.c.b16 %v2487, %v2479
    %v4392 = vpack.c.b16 %v2488, %v2480
    %v4393 = vpack.c.b16 %v2489, %v2481
    %v4394 = vpack.c.b16 %v2490, %v2482
    %v4395 = vpack.c.b16 %v2491, %v2483
    %v4396 = vpack.c.b16 %v2492, %v2484
    %v4397 = vpack.c.b16 %v2493, %v2485
    %v4398 = vpack.c.b16 %v2502, %v2494
    %v4399 = vpack.c.b16 %v2503, %v2495
    %v4400 = vpack.c.b16 %v2504, %v2496
    %v4401 = vpack.c.b16 %v2505, %v2497
    %v4402 = vpack.c.b16 %v2506, %v2498
    %v4403 = vpack.c.b16 %v2507, %v2499
    %v4404 = vpack.c.b16 %v2508, %v2500
    %v4405 = vpack.c.b16 %v2509, %v2501
    %v4406 = vpack.c.b16 %v2518, %v2510
    %v4407 = vpack.c.b16 %v2519, %v2511
    %v4408 = vpack.c.b16 %v2520, %v2512
    %v4409 = vpack.c.b16 %v2521, %v2513
    %v4410 = vpack.c.b16 %v2522, %v2514
    %v4411 = vpack.c.b16 %v2523, %v2515
    %v4412 = vpack.c.b16 %v2524, %v2516
    %v4413 = vpack.c.b16 %v2525, %v2517
    %v4414 = vpack.c.b16 %v2534, %v2526
    %v4415 = vpack.c.b16 %v2535, %v2527
    %v4416 = vpack.c.b16 %v2536, %v2528
    %v4417 = vpack.c.b16 %v2537, %v2529
    %v4418 = vpack.c.b16 %v2538, %v2530
    %v4419 = vpack.c.b16 %v2539, %v2531
    %v4420 = vpack.c.b16 %v2540, %v2532
    %v4421 = vpack.c.b16 %v2541, %v2533
    %v4422 = vpack.c.b16 %v2550, %v2542
    %v4423 = vpack.c.b16 %v2551, %v2543
    %v4424 = vpack.c.b16 %v2552, %v2544
    %v4425 = vpack.c.b16 %v2553, %v2545
    %v4426 = vpack.c.b16 %v2554, %v2546
    %v4427 = vpack.c.b16 %v2555, %v2547
    %v4428 = vpack.c.b16 %v2556, %v2548
    %v4429 = vpack.c.b16 %v2557, %v2549
    %v4430 = vpack.c.b16 %v2566, %v2558
    %v4431 = vpack.c.b16 %v2567, %v2559
    %v4432 = vpack.c.b16 %v2568, %v2560
    %v4433 = vpack.c.b16 %v2569, %v2561
    %v4434 = vpack.c.b16 %v2570, %v2562
    %v4435 = vpack.c.b16 %v2571, %v2563
    %v4436 = vpack.c.b16 %v2572, %v2564
    %v4437 = vpack.c.b16 %v2573, %v2565
    %v4438 = vpack.c.b16 %v2582, %v2574
    %v4439 = vpack.c.b16 %v2583, %v2575
    %v4440 = vpack.c.b16 %v2584, %v2576
    %v4441 = vpack.c.b16 %v2585, %v2577
    %v4442 = vpack.c.b16 %v2586, %v2578
    %v4443 = vpack.c.b16 %v2587, %v2579
    %v4444 = vpack.c.b16 %v2588, %v2580
    %v4445 = vpack.c.b16 %v2589, %v2581
    %v4446 = vpack.c.b16 %v2598, %v2590
    %v4447 = vpack.c.b16 %v2599, %v2591
    %v4448 = vpack.c.b16 %v2600, %v2592
    %v4449 = vpack.c.b16 %v2601, %v2593
    %v4450 = vpack.c.b16 %v2602, %v2594
    %v4451 = vpack.c.b16 %v2603, %v2595
    %v4452 = vpack.c.b16 %v2604, %v2596
    %v4453 = vpack.c.b16 %v2605, %v2597
    %v4454 = vpack.c.b16 %v2614, %v2606
    %v4455 = vpack.c.b16 %v2615, %v2607
    %v4456 = vpack.c.b16 %v2616, %v2608
    %v4457 = vpack.c.b16 %v2617, %v2609
    %v4458 = vpack.c.b16 %v2618, %v2610
    %v4459 = vpack.c.b16 %v2619, %v2611
    %v4460 = vpack.c.b16 %v2620, %v2612
    %v4461 = vpack.c.b16 %v2621, %v2613
    %v4462 = vpack.c.b16 %v2630, %v2622
    %v4463 = vpack.c.b16 %v2631, %v2623
    %v4464 = vpack.c.b16 %v2632, %v2624
    %v4465 = vpack.c.b16 %v2633, %v2625
    %v4466 = vpack.c.b16 %v2634, %v2626
    %v4467 = vpack.c.b16 %v2635, %v2627
    %v4468 = vpack.c.b16 %v2636, %v2628
    %v4469 = vpack.c.b16 %v2637, %v2629
    %v4470 = vpack.c.b16 %v2646, %v2638
    %v4471 = vpack.c.b16 %v2647, %v2639
    %v4472 = vpack.c.b16 %v2648, %v2640
    %v4473 = vpack.c.b16 %v2649, %v2641
    %v4474 = vpack.c.b16 %v2650, %v2642
    %v4475 = vpack.c.b16 %v2651, %v2643
    %v4476 = vpack.c.b16 %v2652, %v2644
    %v4477 = vpack.c.b16 %v2653, %v2645
    %v4478 = vpack.c.b16 %v2662, %v2654
    %v4479 = vpack.c.b16 %v2663, %v2655
    %v4480 = vpack.c.b16 %v2664, %v2656
    %v4481 = vpack.c.b16 %v2665, %v2657
    %v4482 = vpack.c.b16 %v2666, %v2658
    %v4483 = vpack.c.b16 %v2667, %v2659
    %v4484 = vpack.c.b16 %v2668, %v2660
    %v4485 = vpack.c.b16 %v2669, %v2661
    %v4486 = vpack.c.b16 %v2678, %v2670
    %v4487 = vpack.c.b16 %v2679, %v2671
    %v4488 = vpack.c.b16 %v2680, %v2672
    %v4489 = vpack.c.b16 %v2681, %v2673
    %v4490 = vpack.c.b16 %v2682, %v2674
    %v4491 = vpack.c.b16 %v2683, %v2675
    %v4492 = vpack.c.b16 %v2684, %v2676
    %v4493 = vpack.c.b16 %v2685, %v2677
    %v4494 = vpack.c.b16 %v2694, %v2686
    %v4495 = vpack.c.b16 %v2695, %v2687
    %v4496 = vpack.c.b16 %v2696, %v2688
    %v4497 = vpack.c.b16 %v2697, %v2689
    %v4498 = vpack.c.b16 %v2698, %v2690
    %v4499 = vpack.c.b16 %v2699, %v2691
    %v4500 = vpack.c.b16 %v2700, %v2692
    %v4501 = vpack.c.b16 %v2701, %v2693
    %v4502 = vpack.c.b16 %v2710, %v2702
    %v4503 = vpack.c.b16 %v2711, %v2703
    %v4504 = vpack.c.b16 %v2712, %v2704
    %v4505 = vpack.c.b16 %v2713, %v2705
    %v4506 = vpack.c.b16 %v2714, %v2706
    %v4507 = vpack.c.b16 %v2715, %v2707
    %v4508 = vpack.c.b16 %v2716, %v2708
    %v4509 = vpack.c.b16 %v2717, %v2709
    %v4510 = vpack.c.b16 %v2726, %v2718
    %v4511 = vpack.c.b16 %v2727, %v2719
    %v4512 = vpack.c.b16 %v2728, %v2720
    %v4513 = vpack.c.b16 %v2729, %v2721
    %v4514 = vpack.c.b16 %v2730, %v2722
    %v4515 = vpack.c.b16 %v2731, %v2723
    %v4516 = vpack.c.b16 %v2732, %v2724
    %v4517 = vpack.c.b16 %v2733, %v2725
    %v4518 = vpack.c.b16 %v2742, %v2734
    %v4519 = vpack.c.b16 %v2743, %v2735
    %v4520 = vpack.c.b16 %v2744, %v2736
    %v4521 = vpack.c.b16 %v2745, %v2737
    %v4522 = vpack.c.b16 %v2746, %v2738
    %v4523 = vpack.c.b16 %v2747, %v2739
    %v4524 = vpack.c.b16 %v2748, %v2740
    %v4525 = vpack.c.b16 %v2749, %v2741
    %v4526 = vpack.c.b16 %v2758, %v2750
    %v4527 = vpack.c.b16 %v2759, %v2751
    %v4528 = vpack.c.b16 %v2760, %v2752
    %v4529 = vpack.c.b16 %v2761, %v2753
    %v4530 = vpack.c.b16 %v2762, %v2754
    %v4531 = vpack.c.b16 %v2763, %v2755
    %v4532 = vpack.c.b16 %v2764, %v2756
    %v4533 = vpack.c.b16 %v2765, %v2757
    %v4534 = vpack.c.b16 %v2774, %v2766
    %v4535 = vpack.c.b16 %v2775, %v2767
    %v4536 = vpack.c.b16 %v2776, %v2768
    %v4537 = vpack.c.b16 %v2777, %v2769
    %v4538 = vpack.c.b16 %v2778, %v2770
    %v4539 = vpack.c.b16 %v2779, %v2771
    %v4540 = vpack.c.b16 %v2780, %v2772
    %v4541 = vpack.c.b16 %v2781, %v2773
    %v4542 = vpack.c.b16 %v2790, %v2782
    %v4543 = vpack.c.b16 %v2791, %v2783
    %v4544 = vpack.c.b16 %v2792, %v2784
    %v4545 = vpack.c.b16 %v2793, %v2785
    %v4546 = vpack.c.b16 %v2794, %v2786
    %v4547 = vpack.c.b16 %v2795, %v2787
    %v4548 = vpack.c.b16 %v2796, %v2788
    %v4549 = vpack.c.b16 %v2797, %v2789
    %v4550 = vpack.c.b16 %v2806, %v2798
    %v4551 = vpack.c.b16 %v2807, %v2799
    %v4552 = vpack.c.b16 %v2808, %v2800
    %v4553 = vpack.c.b16 %v2809, %v2801
    %v4554 = vpack.c.b16 %v2810, %v2802
    %v4555 = vpack.c.b16 %v2811, %v2803
    %v4556 = vpack.c.b16 %v2812, %v2804
    %v4557 = vpack.c.b16 %v2813, %v2805
    %v4558 = vpack.c.b16 %v2822, %v2814
    %v4559 = vpack.c.b16 %v2823, %v2815
    %v4560 = vpack.c.b16 %v2824, %v2816
    %v4561 = vpack.c.b16 %v2825, %v2817
    %v4562 = vpack.c.b16 %v2826, %v2818
    %v4563 = vpack.c.b16 %v2827, %v2819
    %v4564 = vpack.c.b16 %v2828, %v2820
    %v4565 = vpack.c.b16 %v2829, %v2821
    %v4566 = vpack.c.b16 %v2838, %v2830
    %v4567 = vpack.c.b16 %v2839, %v2831
    %v4568 = vpack.c.b16 %v2840, %v2832
    %v4569 = vpack.c.b16 %v2841, %v2833
    %v4570 = vpack.c.b16 %v2842, %v2834
    %v4571 = vpack.c.b16 %v2843, %v2835
    %v4572 = vpack.c.b16 %v2844, %v2836
    %v4573 = vpack.c.b16 %v2845, %v2837
    %v4574 = vpack.c.b16 %v2854, %v2846
    %v4575 = vpack.c.b16 %v2855, %v2847
    %v4576 = vpack.c.b16 %v2856, %v2848
    %v4577 = vpack.c.b16 %v2857, %v2849
    %v4578 = vpack.c.b16 %v2858, %v2850
    %v4579 = vpack.c.b16 %v2859, %v2851
    %v4580 = vpack.c.b16 %v2860, %v2852
    %v4581 = vpack.c.b16 %v2861, %v2853
    %v4582 = vpack.c.b16 %v2870, %v2862
    %v4583 = vpack.c.b16 %v2871, %v2863
    %v4584 = vpack.c.b16 %v2872, %v2864
    %v4585 = vpack.c.b16 %v2873, %v2865
    %v4586 = vpack.c.b16 %v2874, %v2866
    %v4587 = vpack.c.b16 %v2875, %v2867
    %v4588 = vpack.c.b16 %v2876, %v2868
    %v4589 = vpack.c.b16 %v2877, %v2869
    %v4590 = vpack.c.b16 %v2886, %v2878
    %v4591 = vpack.c.b16 %v2887, %v2879
    %v4592 = vpack.c.b16 %v2888, %v2880
    %v4593 = vpack.c.b16 %v2889, %v2881
    %v4594 = vpack.c.b16 %v2890, %v2882
    %v4595 = vpack.c.b16 %v2891, %v2883
    %v4596 = vpack.c.b16 %v2892, %v2884
    %v4597 = vpack.c.b16 %v2893, %v2885
    %v4598 = vpack.c.b16 %v2902, %v2894
    %v4599 = vpack.c.b16 %v2903, %v2895
    %v4600 = vpack.c.b16 %v2904, %v2896
    %v4601 = vpack.c.b16 %v2905, %v2897
    %v4602 = vpack.c.b16 %v2906, %v2898
    %v4603 = vpack.c.b16 %v2907, %v2899
    %v4604 = vpack.c.b16 %v2908, %v2900
    %v4605 = vpack.c.b16 %v2909, %v2901
    %v4606 = vpack.c.b16 %v2918, %v2910
    %v4607 = vpack.c.b16 %v2919, %v2911
    %v4608 = vpack.c.b16 %v2920, %v2912
    %v4609 = vpack.c.b16 %v2921, %v2913
    %v4610 = vpack.c.b16 %v2922, %v2914
    %v4611 = vpack.c.b16 %v2923, %v2915
    %v4612 = vpack.c.b16 %v2924, %v2916
    %v4613 = vpack.c.b16 %v2925, %v2917
    %v4614 = vpack.c.b16 %v2934, %v2926
    %v4615 = vpack.c.b16 %v2935, %v2927
    %v4616 = vpack.c.b16 %v2936, %v2928
    %v4617 = vpack.c.b16 %v2937, %v2929
    %v4618 = vpack.c.b16 %v2938, %v2930
    %v4619 = vpack.c.b16 %v2939, %v2931
    %v4620 = vpack.c.b16 %v2940, %v2932
    %v4621 = vpack.c.b16 %v2941, %v2933
    %v4622 = vpack.c.b16 %v2950, %v2942
    %v4623 = vpack.c.b16 %v2951, %v2943
    %v4624 = vpack.c.b16 %v2952, %v2944
    %v4625 = vpack.c.b16 %v2953, %v2945
    %v4626 = vpack.c.b16 %v2954, %v2946
    %v4627 = vpack.c.b16 %v2955, %v2947
    %v4628 = vpack.c.b16 %v2956, %v2948
    %v4629 = vpack.c.b16 %v2957, %v2949
    %v4630 = vpack.c.b16 %v2966, %v2958
    %v4631 = vpack.c.b16 %v2967, %v2959
    %v4632 = vpack.c.b16 %v2968, %v2960
    %v4633 = vpack.c.b16 %v2969, %v2961
    %v4634 = vpack.c.b16 %v2970, %v2962
    %v4635 = vpack.c.b16 %v2971, %v2963
    %v4636 = vpack.c.b16 %v2972, %v2964
    %v4637 = vpack.c.b16 %v2973, %v2965
    %v4638 = vpack.c.b16 %v2982, %v2974
    %v4639 = vpack.c.b16 %v2983, %v2975
    %v4640 = vpack.c.b16 %v2984, %v2976
    %v4641 = vpack.c.b16 %v2985, %v2977
    %v4642 = vpack.c.b16 %v2986, %v2978
    %v4643 = vpack.c.b16 %v2987, %v2979
    %v4644 = vpack.c.b16 %v2988, %v2980
    %v4645 = vpack.c.b16 %v2989, %v2981
    %v4646 = vpack.c.b16 %v2998, %v2990
    %v4647 = vpack.c.b16 %v2999, %v2991
    %v4648 = vpack.c.b16 %v3000, %v2992
    %v4649 = vpack.c.b16 %v3001, %v2993
    %v4650 = vpack.c.b16 %v3002, %v2994
    %v4651 = vpack.c.b16 %v3003, %v2995
    %v4652 = vpack.c.b16 %v3004, %v2996
    %v4653 = vpack.c.b16 %v3005, %v2997
    %v4654 = vpack.c.b16 %v3014, %v3006
    %v4655 = vpack.c.b16 %v3015, %v3007
    %v4656 = vpack.c.b16 %v3016, %v3008
    %v4657 = vpack.c.b16 %v3017, %v3009
    %v4658 = vpack.c.b16 %v3018, %v3010
    %v4659 = vpack.c.b16 %v3019, %v3011
    %v4660 = vpack.c.b16 %v3020, %v3012
    %v4661 = vpack.c.b16 %v3021, %v3013
    %v4662 = vpack.c.b16 %v3030, %v3022
    %v4663 = vpack.c.b16 %v3031, %v3023
    %v4664 = vpack.c.b16 %v3032, %v3024
    %v4665 = vpack.c.b16 %v3033, %v3025
    %v4666 = vpack.c.b16 %v3034, %v3026
    %v4667 = vpack.c.b16 %v3035, %v3027
    %v4668 = vpack.c.b16 %v3036, %v3028
    %v4669 = vpack.c.b16 %v3037, %v3029
    %v4670 = vpack.c.b16 %v3046, %v3038
    %v4671 = vpack.c.b16 %v3047, %v3039
    %v4672 = vpack.c.b16 %v3048, %v3040
    %v4673 = vpack.c.b16 %v3049, %v3041
    %v4674 = vpack.c.b16 %v3050, %v3042
    %v4675 = vpack.c.b16 %v3051, %v3043
    %v4676 = vpack.c.b16 %v3052, %v3044
    %v4677 = vpack.c.b16 %v3053, %v3045
    %v4678 = vpack.c.b16 %v3062, %v3054
    %v4679 = vpack.c.b16 %v3063, %v3055
    %v4680 = vpack.c.b16 %v3064, %v3056
    %v4681 = vpack.c.b16 %v3065, %v3057
    %v4682 = vpack.c.b16 %v3066, %v3058
    %v4683 = vpack.c.b16 %v3067, %v3059
    %v4684 = vpack.c.b16 %v3068, %v3060
    %v4685 = vpack.c.b16 %v3069, %v3061
    %v4686 = vpack.c.b16 %v3078, %v3070
    %v4687 = vpack.c.b16 %v3079, %v3071
    %v4688 = vpack.c.b16 %v3080, %v3072
    %v4689 = vpack.c.b16 %v3081, %v3073
    %v4690 = vpack.c.b16 %v3082, %v3074
    %v4691 = vpack.c.b16 %v3083, %v3075
    %v4692 = vpack.c.b16 %v3084, %v3076
    %v4693 = vpack.c.b16 %v3085, %v3077
    %v4694 = vpack.c.b16 %v3094, %v3086
    %v4695 = vpack.c.b16 %v3095, %v3087
    %v4696 = vpack.c.b16 %v3096, %v3088
    %v4697 = vpack.c.b16 %v3097, %v3089
    %v4698 = vpack.c.b16 %v3098, %v3090
    %v4699 = vpack.c.b16 %v3099, %v3091
    %v4700 = vpack.c.b16 %v3100, %v3092
    %v4701 = vpack.c.b16 %v3101, %v3093
    %v4702 = vpack.c.b16 %v3110, %v3102
    %v4703 = vpack.c.b16 %v3111, %v3103
    %v4704 = vpack.c.b16 %v3112, %v3104
    %v4705 = vpack.c.b16 %v3113, %v3105
    %v4706 = vpack.c.b16 %v3114, %v3106
    %v4707 = vpack.c.b16 %v3115, %v3107
    %v4708 = vpack.c.b16 %v3116, %v3108
    %v4709 = vpack.c.b16 %v3117, %v3109
    %v4710 = vpack.c.b16 %v3126, %v3118
    %v4711 = vpack.c.b16 %v3127, %v3119
    %v4712 = vpack.c.b16 %v3128, %v3120
    %v4713 = vpack.c.b16 %v3129, %v3121
    %v4714 = vpack.c.b16 %v3130, %v3122
    %v4715 = vpack.c.b16 %v3131, %v3123
    %v4716 = vpack.c.b16 %v3132, %v3124
    %v4717 = vpack.c.b16 %v3133, %v3125
    %v4718 = vpack.c.b16 %v3142, %v3134
    %v4719 = vpack.c.b16 %v3143, %v3135
    %v4720 = vpack.c.b16 %v3144, %v3136
    %v4721 = vpack.c.b16 %v3145, %v3137
    %v4722 = vpack.c.b16 %v3146, %v3138
    %v4723 = vpack.c.b16 %v3147, %v3139
    %v4724 = vpack.c.b16 %v3148, %v3140
    %v4725 = vpack.c.b16 %v3149, %v3141
    %v4726 = vpack.c.b16 %v3158, %v3150
    %v4727 = vpack.c.b16 %v3159, %v3151
    %v4728 = vpack.c.b16 %v3160, %v3152
    %v4729 = vpack.c.b16 %v3161, %v3153
    %v4730 = vpack.c.b16 %v3162, %v3154
    %v4731 = vpack.c.b16 %v3163, %v3155
    %v4732 = vpack.c.b16 %v3164, %v3156
    %v4733 = vpack.c.b16 %v3165, %v3157
    %v4734 = vpack.c.b16 %v3174, %v3166
    %v4735 = vpack.c.b16 %v3175, %v3167
    %v4736 = vpack.c.b16 %v3176, %v3168
    %v4737 = vpack.c.b16 %v3177, %v3169
    %v4738 = vpack.c.b16 %v3178, %v3170
    %v4739 = vpack.c.b16 %v3179, %v3171
    %v4740 = vpack.c.b16 %v3180, %v3172
    %v4741 = vpack.c.b16 %v3181, %v3173
    %v4742 = vpack.c.b16 %v3190, %v3182
    %v4743 = vpack.c.b16 %v3191, %v3183
    %v4744 = vpack.c.b16 %v3192, %v3184
    %v4745 = vpack.c.b16 %v3193, %v3185
    %v4746 = vpack.c.b16 %v3194, %v3186
    %v4747 = vpack.c.b16 %v3195, %v3187
    %v4748 = vpack.c.b16 %v3196, %v3188
    %v4749 = vpack.c.b16 %v3197, %v3189
    %v4750 = vpack.c.b16 %v3206, %v3198
    %v4751 = vpack.c.b16 %v3207, %v3199
    %v4752 = vpack.c.b16 %v3208, %v3200
    %v4753 = vpack.c.b16 %v3209, %v3201
    %v4754 = vpack.c.b16 %v3210, %v3202
    %v4755 = vpack.c.b16 %v3211, %v3203
    %v4756 = vpack.c.b16 %v3212, %v3204
    %v4757 = vpack.c.b16 %v3213, %v3205
    %v4758 = vpack.c.b16 %v3222, %v3214
    %v4759 = vpack.c.b16 %v3223, %v3215
    %v4760 = vpack.c.b16 %v3224, %v3216
    %v4761 = vpack.c.b16 %v3225, %v3217
    %v4762 = vpack.c.b16 %v3226, %v3218
    %v4763 = vpack.c.b16 %v3227, %v3219
    %v4764 = vpack.c.b16 %v3228, %v3220
    %v4765 = vpack.c.b16 %v3229, %v3221
    %v4766 = vpack.c.b16 %v3238, %v3230
    %v4767 = vpack.c.b16 %v3239, %v3231
    %v4768 = vpack.c.b16 %v3240, %v3232
    %v4769 = vpack.c.b16 %v3241, %v3233
    %v4770 = vpack.c.b16 %v3242, %v3234
    %v4771 = vpack.c.b16 %v3243, %v3235
    %v4772 = vpack.c.b16 %v3244, %v3236
    %v4773 = vpack.c.b16 %v3245, %v3237
    %v4774 = vpack.c.b16 %v3254, %v3246
    %v4775 = vpack.c.b16 %v3255, %v3247
    %v4776 = vpack.c.b16 %v3256, %v3248
    %v4777 = vpack.c.b16 %v3257, %v3249
    %v4778 = vpack.c.b16 %v3258, %v3250
    %v4779 = vpack.c.b16 %v3259, %v3251
    %v4780 = vpack.c.b16 %v3260, %v3252
    %v4781 = vpack.c.b16 %v3261, %v3253
    %v4782 = vpack.c.b16 %v3270, %v3262
    %v4783 = vpack.c.b16 %v3271, %v3263
    %v4784 = vpack.c.b16 %v3272, %v3264
    %v4785 = vpack.c.b16 %v3273, %v3265
    %v4786 = vpack.c.b16 %v3274, %v3266
    %v4787 = vpack.c.b16 %v3275, %v3267
    %v4788 = vpack.c.b16 %v3276, %v3268
    %v4789 = vpack.c.b16 %v3277, %v3269
    %v4790 = vpack.c.b16 %v3286, %v3278
    %v4791 = vpack.c.b16 %v3287, %v3279
    %v4792 = vpack.c.b16 %v3288, %v3280
    %v4793 = vpack.c.b16 %v3289, %v3281
    %v4794 = vpack.c.b16 %v3290, %v3282
    %v4795 = vpack.c.b16 %v3291, %v3283
    %v4796 = vpack.c.b16 %v3292, %v3284
    %v4797 = vpack.c.b16 %v3293, %v3285
    %v4798 = vpack.c.b16 %v3302, %v3294
    %v4799 = vpack.c.b16 %v3303, %v3295
    %v4800 = vpack.c.b16 %v3304, %v3296
    %v4801 = vpack.c.b16 %v3305, %v3297
    %v4802 = vpack.c.b16 %v3306, %v3298
    %v4803 = vpack.c.b16 %v3307, %v3299
    %v4804 = vpack.c.b16 %v3308, %v3300
    %v4805 = vpack.c.b16 %v3309, %v3301
    %v4806 = vpack.c.b16 %v3318, %v3310
    %v4807 = vpack.c.b16 %v3319, %v3311
    %v4808 = vpack.c.b16 %v3320, %v3312
    %v4809 = vpack.c.b16 %v3321, %v3313
    %v4810 = vpack.c.b16 %v3322, %v3314
    %v4811 = vpack.c.b16 %v3323, %v3315
    %v4812 = vpack.c.b16 %v3324, %v3316
    %v4813 = vpack.c.b16 %v3325, %v3317
    %v4814 = vpack.c.b16 %v3334, %v3326
    %v4815 = vpack.c.b16 %v3335, %v3327
    %v4816 = vpack.c.b16 %v3336, %v3328
    %v4817 = vpack.c.b16 %v3337, %v3329
    %v4818 = vpack.c.b16 %v3338, %v3330
    %v4819 = vpack.c.b16 %v3339, %v3331
    %v4820 = vpack.c.b16 %v3340, %v3332
    %v4821 = vpack.c.b16 %v3341, %v3333
    %v4822 = vpack.c.b16 %v3350, %v3342
    %v4823 = vpack.c.b16 %v3351, %v3343
    %v4824 = vpack.c.b16 %v3352, %v3344
    %v4825 = vpack.c.b16 %v3353, %v3345
    %v4826 = vpack.c.b16 %v3354, %v3346
    %v4827 = vpack.c.b16 %v3355, %v3347
    %v4828 = vpack.c.b16 %v3356, %v3348
    %v4829 = vpack.c.b16 %v3357, %v3349
    %v4830 = vpack.c.b16 %v3366, %v3358
    %v4831 = vpack.c.b16 %v3367, %v3359
    %v4832 = vpack.c.b16 %v3368, %v3360
    %v4833 = vpack.c.b16 %v3369, %v3361
    %v4834 = vpack.c.b16 %v3370, %v3362
    %v4835 = vpack.c.b16 %v3371, %v3363
    %v4836 = vpack.c.b16 %v3372, %v3364
    %v4837 = vpack.c.b16 %v3373, %v3365
    %v4838 = vpack.c.b16 %v3382, %v3374
    %v4839 = vpack.c.b16 %v3383, %v3375
    %v4840 = vpack.c.b16 %v3384, %v3376
    %v4841 = vpack.c.b16 %v3385, %v3377
    %v4842 = vpack.c.b16 %v3386, %v3378
    %v4843 = vpack.c.b16 %v3387, %v3379
    %v4844 = vpack.c.b16 %v3388, %v3380
    %v4845 = vpack.c.b16 %v3389, %v3381
    %v4846 = vpack.c.b16 %v3398, %v3390
    %v4847 = vpack.c.b16 %v3399, %v3391
    %v4848 = vpack.c.b16 %v3400, %v3392
    %v4849 = vpack.c.b16 %v3401, %v3393
    %v4850 = vpack.c.b16 %v3402, %v3394
    %v4851 = vpack.c.b16 %v3403, %v3395
    %v4852 = vpack.c.b16 %v3404, %v3396
    %v4853 = vpack.c.b16 %v3405, %v3397
    %v4854 = vpack.c.b16 %v3414, %v3406
    %v4855 = vpack.c.b16 %v3415, %v3407
    %v4856 = vpack.c.b16 %v3416, %v3408
    %v4857 = vpack.c.b16 %v3417, %v3409
    %v4858 = vpack.c.b16 %v3418, %v3410
    %v4859 = vpack.c.b16 %v3419, %v3411
    %v4860 = vpack.c.b16 %v3420, %v3412
    %v4861 = vpack.c.b16 %v3421, %v3413
    %v4862 = vpack.c.b16 %v3430, %v3422
    %v4863 = vpack.c.b16 %v3431, %v3423
    %v4864 = vpack.c.b16 %v3432, %v3424
    %v4865 = vpack.c.b16 %v3433, %v3425
    %v4866 = vpack.c.b16 %v3434, %v3426
    %v4867 = vpack.c.b16 %v3435, %v3427
    %v4868 = vpack.c.b16 %v3436, %v3428
    %v4869 = vpack.c.b16 %v3437, %v3429
    %v4870 = vpack.c.b16 %v3446, %v3438
    %v4871 = vpack.c.b16 %v3447, %v3439
    %v4872 = vpack.c.b16 %v3448, %v3440
    %v4873 = vpack.c.b16 %v3449, %v3441
    %v4874 = vpack.c.b16 %v3450, %v3442
    %v4875 = vpack.c.b16 %v3451, %v3443
    %v4876 = vpack.c.b16 %v3452, %v3444
    %v4877 = vpack.c.b16 %v3453, %v3445
    %v4878 = vpack.c.b16 %v3462, %v3454
    %v4879 = vpack.c.b16 %v3463, %v3455
    %v4880 = vpack.c.b16 %v3464, %v3456
    %v4881 = vpack.c.b16 %v3465, %v3457
    %v4882 = vpack.c.b16 %v3466, %v3458
    %v4883 = vpack.c.b16 %v3467, %v3459
    %v4884 = vpack.c.b16 %v3468, %v3460
    %v4885 = vpack.c.b16 %v3469, %v3461
    %v4886 = vpack.c.b16 %v3478, %v3470
    %v4887 = vpack.c.b16 %v3479, %v3471
    %v4888 = vpack.c.b16 %v3480, %v3472
    %v4889 = vpack.c.b16 %v3481, %v3473
    %v4890 = vpack.c.b16 %v3482, %v3474
    %v4891 = vpack.c.b16 %v3483, %v3475
    %v4892 = vpack.c.b16 %v3484, %v3476
    %v4893 = vpack.c.b16 %v3485, %v3477
    %v4894 = vpack.c.b16 %v3494, %v3486
    %v4895 = vpack.c.b16 %v3495, %v3487
    %v4896 = vpack.c.b16 %v3496, %v3488
    %v4897 = vpack.c.b16 %v3497, %v3489
    %v4898 = vpack.c.b16 %v3498, %v3490
    %v4899 = vpack.c.b16 %v3499, %v3491
    %v4900 = vpack.c.b16 %v3500, %v3492
    %v4901 = vpack.c.b16 %v3501, %v3493
    %v4902 = vpack.c.b16 %v3510, %v3502
    %v4903 = vpack.c.b16 %v3511, %v3503
    %v4904 = vpack.c.b16 %v3512, %v3504
    %v4905 = vpack.c.b16 %v3513, %v3505
    %v4906 = vpack.c.b16 %v3514, %v3506
    %v4907 = vpack.c.b16 %v3515, %v3507
    %v4908 = vpack.c.b16 %v3516, %v3508
    %v4909 = vpack.c.b16 %v3517, %v3509
    %v4910 = vpack.c.b16 %v3526, %v3518
    %v4911 = vpack.c.b16 %v3527, %v3519
    %v4912 = vpack.c.b16 %v3528, %v3520
    %v4913 = vpack.c.b16 %v3529, %v3521
    %v4914 = vpack.c.b16 %v3530, %v3522
    %v4915 = vpack.c.b16 %v3531, %v3523
    %v4916 = vpack.c.b16 %v3532, %v3524
    %v4917 = vpack.c.b16 %v3533, %v3525
    %v4918 = vpack.c.b16 %v3542, %v3534
    %v4919 = vpack.c.b16 %v3543, %v3535
    %v4920 = vpack.c.b16 %v3544, %v3536
    %v4921 = vpack.c.b16 %v3545, %v3537
    %v4922 = vpack.c.b16 %v3546, %v3538
    %v4923 = vpack.c.b16 %v3547, %v3539
    %v4924 = vpack.c.b16 %v3548, %v3540
    %v4925 = vpack.c.b16 %v3549, %v3541
    %v4926 = vpack.c.b16 %v3558, %v3550
    %v4927 = vpack.c.b16 %v3559, %v3551
    %v4928 = vpack.c.b16 %v3560, %v3552
    %v4929 = vpack.c.b16 %v3561, %v3553
    %v4930 = vpack.c.b16 %v3562, %v3554
    %v4931 = vpack.c.b16 %v3563, %v3555
    %v4932 = vpack.c.b16 %v3564, %v3556
    %v4933 = vpack.c.b16 %v3565, %v3557
    %v4934 = vpack.c.b16 %v3574, %v3566
    %v4935 = vpack.c.b16 %v3575, %v3567
    %v4936 = vpack.c.b16 %v3576, %v3568
    %v4937 = vpack.c.b16 %v3577, %v3569
    %v4938 = vpack.c.b16 %v3578, %v3570
    %v4939 = vpack.c.b16 %v3579, %v3571
    %v4940 = vpack.c.b16 %v3580, %v3572
    %v4941 = vpack.c.b16 %v3581, %v3573
    %v4942 = vpack.c.b16 %v3590, %v3582
    %v4943 = vpack.c.b16 %v3591, %v3583
    %v4944 = vpack.c.b16 %v3592, %v3584
    %v4945 = vpack.c.b16 %v3593, %v3585
    %v4946 = vpack.c.b16 %v3594, %v3586
    %v4947 = vpack.c.b16 %v3595, %v3587
    %v4948 = vpack.c.b16 %v3596, %v3588
    %v4949 = vpack.c.b16 %v3597, %v3589
    %v4950 = vpack.c.b16 %v3606, %v3598
    %v4951 = vpack.c.b16 %v3607, %v3599
    %v4952 = vpack.c.b16 %v3608, %v3600
    %v4953 = vpack.c.b16 %v3609, %v3601
    %v4954 = vpack.c.b16 %v3610, %v3602
    %v4955 = vpack.c.b16 %v3611, %v3603
    %v4956 = vpack.c.b16 %v3612, %v3604
    %v4957 = vpack.c.b16 %v3613, %v3605
    %v4958 = vpack.c.b16 %v3622, %v3614
    %v4959 = vpack.c.b16 %v3623, %v3615
    %v4960 = vpack.c.b16 %v3624, %v3616
    %v4961 = vpack.c.b16 %v3625, %v3617
    %v4962 = vpack.c.b16 %v3626, %v3618
    %v4963 = vpack.c.b16 %v3627, %v3619
    %v4964 = vpack.c.b16 %v3628, %v3620
    %v4965 = vpack.c.b16 %v3629, %v3621
    %v4966 = vpack.c.b16 %v3638, %v3630
    %v4967 = vpack.c.b16 %v3639, %v3631
    %v4968 = vpack.c.b16 %v3640, %v3632
    %v4969 = vpack.c.b16 %v3641, %v3633
    %v4970 = vpack.c.b16 %v3642, %v3634
    %v4971 = vpack.c.b16 %v3643, %v3635
    %v4972 = vpack.c.b16 %v3644, %v3636
    %v4973 = vpack.c.b16 %v3645, %v3637
    %v4974 = vpack.c.b16 %v3654, %v3646
    %v4975 = vpack.c.b16 %v3655, %v3647
    %v4976 = vpack.c.b16 %v3656, %v3648
    %v4977 = vpack.c.b16 %v3657, %v3649
    %v4978 = vpack.c.b16 %v3658, %v3650
    %v4979 = vpack.c.b16 %v3659, %v3651
    %v4980 = vpack.c.b16 %v3660, %v3652
    %v4981 = vpack.c.b16 %v3661, %v3653
    %v4982 = vpack.c.b16 %v3670, %v3662
    %v4983 = vpack.c.b16 %v3671, %v3663
    %v4984 = vpack.c.b16 %v3672, %v3664
    %v4985 = vpack.c.b16 %v3673, %v3665
    %v4986 = vpack.c.b16 %v3674, %v3666
    %v4987 = vpack.c.b16 %v3675, %v3667
    %v4988 = vpack.c.b16 %v3676, %v3668
    %v4989 = vpack.c.b16 %v3677, %v3669
    %v4990 = vpack.c.b16 %v3686, %v3678
    %v4991 = vpack.c.b16 %v3687, %v3679
    %v4992 = vpack.c.b16 %v3688, %v3680
    %v4993 = vpack.c.b16 %v3689, %v3681
    %v4994 = vpack.c.b16 %v3690, %v3682
    %v4995 = vpack.c.b16 %v3691, %v3683
    %v4996 = vpack.c.b16 %v3692, %v3684
    %v4997 = vpack.c.b16 %v3693, %v3685
    %v4998 = vpack.c.b16 %v3702, %v3694
    %v4999 = vpack.c.b16 %v3703, %v3695
    %v5000 = vpack.c.b16 %v3704, %v3696
    %v5001 = vpack.c.b16 %v3705, %v3697
    %v5002 = vpack.c.b16 %v3706, %v3698
    %v5003 = vpack.c.b16 %v3707, %v3699
    %v5004 = vpack.c.b16 %v3708, %v3700
    %v5005 = vpack.c.b16 %v3709, %v3701
    %v5006 = vpack.c.b16 %v3718, %v3710
    %v5007 = vpack.c.b16 %v3719, %v3711
    %v5008 = vpack.c.b16 %v3720, %v3712
    %v5009 = vpack.c.b16 %v3721, %v3713
    %v5010 = vpack.c.b16 %v3722, %v3714
    %v5011 = vpack.c.b16 %v3723, %v3715
    %v5012 = vpack.c.b16 %v3724, %v3716
    %v5013 = vpack.c.b16 %v3725, %v3717
    %v5014 = vpack.c.b16 %v3734, %v3726
    %v5015 = vpack.c.b16 %v3735, %v3727
    %v5016 = vpack.c.b16 %v3736, %v3728
    %v5017 = vpack.c.b16 %v3737, %v3729
    %v5018 = vpack.c.b16 %v3738, %v3730
    %v5019 = vpack.c.b16 %v3739, %v3731
    %v5020 = vpack.c.b16 %v3740, %v3732
    %v5021 = vpack.c.b16 %v3741, %v3733
    %v5022 = vpack.c.b16 %v3750, %v3742
    %v5023 = vpack.c.b16 %v3751, %v3743
    %v5024 = vpack.c.b16 %v3752, %v3744
    %v5025 = vpack.c.b16 %v3753, %v3745
    %v5026 = vpack.c.b16 %v3754, %v3746
    %v5027 = vpack.c.b16 %v3755, %v3747
    %v5028 = vpack.c.b16 %v3756, %v3748
    %v5029 = vpack.c.b16 %v3757, %v3749
    %v5030 = vpack.c.b16 %v3766, %v3758
    %v5031 = vpack.c.b16 %v3767, %v3759
    %v5032 = vpack.c.b16 %v3768, %v3760
    %v5033 = vpack.c.b16 %v3769, %v3761
    %v5034 = vpack.c.b16 %v3770, %v3762
    %v5035 = vpack.c.b16 %v3771, %v3763
    %v5036 = vpack.c.b16 %v3772, %v3764
    %v5037 = vpack.c.b16 %v3773, %v3765
    %v5038 = vpack.c.b16 %v3782, %v3774
    %v5039 = vpack.c.b16 %v3783, %v3775
    %v5040 = vpack.c.b16 %v3784, %v3776
    %v5041 = vpack.c.b16 %v3785, %v3777
    %v5042 = vpack.c.b16 %v3786, %v3778
    %v5043 = vpack.c.b16 %v3787, %v3779
    %v5044 = vpack.c.b16 %v3788, %v3780
    %v5045 = vpack.c.b16 %v3789, %v3781
    %v5046 = vpack.c.b16 %v3798, %v3790
    %v5047 = vpack.c.b16 %v3799, %v3791
    %v5048 = vpack.c.b16 %v3800, %v3792
    %v5049 = vpack.c.b16 %v3801, %v3793
    %v5050 = vpack.c.b16 %v3802, %v3794
    %v5051 = vpack.c.b16 %v3803, %v3795
    %v5052 = vpack.c.b16 %v3804, %v3796
    %v5053 = vpack.c.b16 %v3805, %v3797
    %v5054 = vpack.c.b16 %v3814, %v3806
    %v5055 = vpack.c.b16 %v3815, %v3807
    %v5056 = vpack.c.b16 %v3816, %v3808
    %v5057 = vpack.c.b16 %v3817, %v3809
    %v5058 = vpack.c.b16 %v3818, %v3810
    %v5059 = vpack.c.b16 %v3819, %v3811
    %v5060 = vpack.c.b16 %v3820, %v3812
    %v5061 = vpack.c.b16 %v3821, %v3813
    %v5062 = vpack.c.b16 %v3830, %v3822
    %v5063 = vpack.c.b16 %v3831, %v3823
    %v5064 = vpack.c.b16 %v3832, %v3824
    %v5065 = vpack.c.b16 %v3833, %v3825
    %v5066 = vpack.c.b16 %v3834, %v3826
    %v5067 = vpack.c.b16 %v3835, %v3827
    %v5068 = vpack.c.b16 %v3836, %v3828
    %v5069 = vpack.c.b16 %v3837, %v3829
    %v5070 = vpack.c.b16 %v3846, %v3838
    %v5071 = vpack.c.b16 %v3847, %v3839
    %v5072 = vpack.c.b16 %v3848, %v3840
    %v5073 = vpack.c.b16 %v3849, %v3841
    %v5074 = vpack.c.b16 %v3850, %v3842
    %v5075 = vpack.c.b16 %v3851, %v3843
    %v5076 = vpack.c.b16 %v3852, %v3844
    %v5077 = vpack.c.b16 %v3853, %v3845
    %v5078 = vpack.c.b16 %v3862, %v3854
    %v5079 = vpack.c.b16 %v3863, %v3855
    %v5080 = vpack.c.b16 %v3864, %v3856
    %v5081 = vpack.c.b16 %v3865, %v3857
    %v5082 = vpack.c.b16 %v3866, %v3858
    %v5083 = vpack.c.b16 %v3867, %v3859
    %v5084 = vpack.c.b16 %v3868, %v3860
    %v5085 = vpack.c.b16 %v3869, %v3861
    %v5086 = vpack.c.b16 %v3878, %v3870
    %v5087 = vpack.c.b16 %v3879, %v3871
    %v5088 = vpack.c.b16 %v3880, %v3872
    %v5089 = vpack.c.b16 %v3881, %v3873
    %v5090 = vpack.c.b16 %v3882, %v3874
    %v5091 = vpack.c.b16 %v3883, %v3875
    %v5092 = vpack.c.b16 %v3884, %v3876
    %v5093 = vpack.c.b16 %v3885, %v3877
    %v5094 = vpack.c.b16 %v3894, %v3886
    %v5095 = vpack.c.b16 %v3895, %v3887
    %v5096 = vpack.c.b16 %v3896, %v3888
    %v5097 = vpack.c.b16 %v3897, %v3889
    %v5098 = vpack.c.b16 %v3898, %v3890
    %v5099 = vpack.c.b16 %v3899, %v3891
    %v5100 = vpack.c.b16 %v3900, %v3892
    %v5101 = vpack.c.b16 %v3901, %v3893
    %v5102 = vpack.c.b16 %v3910, %v3902
    %v5103 = vpack.c.b16 %v3911, %v3903
    %v5104 = vpack.c.b16 %v3912, %v3904
    %v5105 = vpack.c.b16 %v3913, %v3905
    %v5106 = vpack.c.b16 %v3914, %v3906
    %v5107 = vpack.c.b16 %v3915, %v3907
    %v5108 = vpack.c.b16 %v3916, %v3908
    %v5109 = vpack.c.b16 %v3917, %v3909
    %v5110 = vpack.c.b16 %v3926, %v3918
    %v5111 = vpack.c.b16 %v3927, %v3919
    %v5112 = vpack.c.b16 %v3928, %v3920
    %v5113 = vpack.c.b16 %v3929, %v3921
    %v5114 = vpack.c.b16 %v3930, %v3922
    %v5115 = vpack.c.b16 %v3931, %v3923
    %v5116 = vpack.c.b16 %v3932, %v3924
    %v5117 = vpack.c.b16 %v3933, %v3925
    %v5118 = vpack.c.b16 %v3942, %v3934
    %v5119 = vpack.c.b16 %v3943, %v3935
    %v5120 = vpack.c.b16 %v3944, %v3936
    %v5121 = vpack.c.b16 %v3945, %v3937
    %v5122 = vpack.c.b16 %v3946, %v3938
    %v5123 = vpack.c.b16 %v3947, %v3939
    %v5124 = vpack.c.b16 %v3948, %v3940
    %v5125 = vpack.c.b16 %v3949, %v3941
    %v5126 = vpack.c.b16 %v3958, %v3950
    %v5127 = vpack.c.b16 %v3959, %v3951
    %v5128 = vpack.c.b16 %v3960, %v3952
    %v5129 = vpack.c.b16 %v3961, %v3953
    %v5130 = vpack.c.b16 %v3962, %v3954
    %v5131 = vpack.c.b16 %v3963, %v3955
    %v5132 = vpack.c.b16 %v3964, %v3956
    %v5133 = vpack.c.b16 %v3965, %v3957
    %v5134 = vpack.c.b16 %v3974, %v3966
    %v5135 = vpack.c.b16 %v3975, %v3967
    %v5136 = vpack.c.b16 %v3976, %v3968
    %v5137 = vpack.c.b16 %v3977, %v3969
    %v5138 = vpack.c.b16 %v3978, %v3970
    %v5139 = vpack.c.b16 %v3979, %v3971
    %v5140 = vpack.c.b16 %v3980, %v3972
    %v5141 = vpack.c.b16 %v3981, %v3973
    %v5142 = vpack.c.b16 %v3990, %v3982
    %v5143 = vpack.c.b16 %v3991, %v3983
    %v5144 = vpack.c.b16 %v3992, %v3984
    %v5145 = vpack.c.b16 %v3993, %v3985
    %v5146 = vpack.c.b16 %v3994, %v3986
    %v5147 = vpack.c.b16 %v3995, %v3987
    %v5148 = vpack.c.b16 %v3996, %v3988
    %v5149 = vpack.c.b16 %v3997, %v3989
    %v5150 = vpack.c.b16 %v4006, %v3998
    %v5151 = vpack.c.b16 %v4007, %v3999
    %v5152 = vpack.c.b16 %v4008, %v4000
    %v5153 = vpack.c.b16 %v4009, %v4001
    %v5154 = vpack.c.b16 %v4010, %v4002
    %v5155 = vpack.c.b16 %v4011, %v4003
    %v5156 = vpack.c.b16 %v4012, %v4004
    %v5157 = vpack.c.b16 %v4013, %v4005
    %v5158 = vpack.c.b16 %v4022, %v4014
    %v5159 = vpack.c.b16 %v4023, %v4015
    %v5160 = vpack.c.b16 %v4024, %v4016
    %v5161 = vpack.c.b16 %v4025, %v4017
    %v5162 = vpack.c.b16 %v4026, %v4018
    %v5163 = vpack.c.b16 %v4027, %v4019
    %v5164 = vpack.c.b16 %v4028, %v4020
    %v5165 = vpack.c.b16 %v4029, %v4021
    %v5166 = vpack.c.b16 %v4038, %v4030
    %v5167 = vpack.c.b16 %v4039, %v4031
    %v5168 = vpack.c.b16 %v4040, %v4032
    %v5169 = vpack.c.b16 %v4041, %v4033
    %v5170 = vpack.c.b16 %v4042, %v4034
    %v5171 = vpack.c.b16 %v4043, %v4035
    %v5172 = vpack.c.b16 %v4044, %v4036
    %v5173 = vpack.c.b16 %v4045, %v4037
    %v5174 = vpack.c.b16 %v4054, %v4046
    %v5175 = vpack.c.b16 %v4055, %v4047
    %v5176 = vpack.c.b16 %v4056, %v4048
    %v5177 = vpack.c.b16 %v4057, %v4049
    %v5178 = vpack.c.b16 %v4058, %v4050
    %v5179 = vpack.c.b16 %v4059, %v4051
    %v5180 = vpack.c.b16 %v4060, %v4052
    %v5181 = vpack.c.b16 %v4061, %v4053
    %v5182 = vpack.c.b16 %v4070, %v4062
    %v5183 = vpack.c.b16 %v4071, %v4063
    %v5184 = vpack.c.b16 %v4072, %v4064
    %v5185 = vpack.c.b16 %v4073, %v4065
    %v5186 = vpack.c.b16 %v4074, %v4066
    %v5187 = vpack.c.b16 %v4075, %v4067
    %v5188 = vpack.c.b16 %v4076, %v4068
    %v5189 = vpack.c.b16 %v4077, %v4069
    %v5190 = vpack.c.b16 %v4086, %v4078
    %v5191 = vpack.c.b16 %v4087, %v4079
    %v5192 = vpack.c.b16 %v4088, %v4080
    %v5193 = vpack.c.b16 %v4089, %v4081
    %v5194 = vpack.c.b16 %v4090, %v4082
    %v5195 = vpack.c.b16 %v4091, %v4083
    %v5196 = vpack.c.b16 %v4092, %v4084
    %v5197 = vpack.c.b16 %v4093, %v4085
    %v5198 = vpack.c.b16 %v4102, %v4094
    %v5199 = vpack.c.b16 %v4103, %v4095
    %v5200 = vpack.c.b16 %v4104, %v4096
    %v5201 = vpack.c.b16 %v4105, %v4097
    %v5202 = vpack.c.b16 %v4106, %v4098
    %v5203 = vpack.c.b16 %v4107, %v4099
    %v5204 = vpack.c.b16 %v4108, %v4100
    %v5205 = vpack.c.b16 %v4109, %v4101
    %v5206 = vpack.c.b16 %v4118, %v4110
    %v5207 = vpack.c.b16 %v4119, %v4111
    %v5208 = vpack.c.b16 %v4120, %v4112
    %v5209 = vpack.c.b16 %v4121, %v4113
    %v5210 = vpack.c.b16 %v4122, %v4114
    %v5211 = vpack.c.b16 %v4123, %v4115
    %v5212 = vpack.c.b16 %v4124, %v4116
    %v5213 = vpack.c.b16 %v4125, %v4117
    %v5214 = vpack.c.b16 %v4134, %v4126
    %v5215 = vpack.c.b16 %v4135, %v4127
    %v5216 = vpack.c.b16 %v4136, %v4128
    %v5217 = vpack.c.b16 %v4137, %v4129
    %v5218 = vpack.c.b16 %v4138, %v4130
    %v5219 = vpack.c.b16 %v4139, %v4131
    %v5220 = vpack.c.b16 %v4140, %v4132
    %v5221 = vpack.c.b16 %v4141, %v4133
    %v5222 = vpack.c.b16 %v4150, %v4142
    %v5223 = vpack.c.b16 %v4151, %v4143
    %v5224 = vpack.c.b16 %v4152, %v4144
    %v5225 = vpack.c.b16 %v4153, %v4145
    %v5226 = vpack.c.b16 %v4154, %v4146
    %v5227 = vpack.c.b16 %v4155, %v4147
    %v5228 = vpack.c.b16 %v4156, %v4148
    %v5229 = vpack.c.b16 %v4157, %v4149
    %v5230 = vpack.c.b16 %v4166, %v4158
    %v5231 = vpack.c.b16 %v4167, %v4159
    %v5232 = vpack.c.b16 %v4168, %v4160
    %v5233 = vpack.c.b16 %v4169, %v4161
    %v5234 = vpack.c.b16 %v4170, %v4162
    %v5235 = vpack.c.b16 %v4171, %v4163
    %v5236 = vpack.c.b16 %v4172, %v4164
    %v5237 = vpack.c.b16 %v4173, %v4165
    %v5238 = vpack.c.b16 %v4182, %v4174
    %v5239 = vpack.c.b16 %v4183, %v4175
    %v5240 = vpack.c.b16 %v4184, %v4176
    %v5241 = vpack.c.b16 %v4185, %v4177
    %v5242 = vpack.c.b16 %v4186, %v4178
    %v5243 = vpack.c.b16 %v4187, %v4179
    %v5244 = vpack.c.b16 %v4188, %v4180
    %v5245 = vpack.c.b16 %v4189, %v4181
    %v5246 = vpack.c.b16 %v4198, %v4190
    %v5247 = vpack.c.b16 %v4199, %v4191
    %v5248 = vpack.c.b16 %v4200, %v4192
    %v5249 = vpack.c.b16 %v4201, %v4193
    %v5250 = vpack.c.b16 %v4202, %v4194
    %v5251 = vpack.c.b16 %v4203, %v4195
    %v5252 = vpack.c.b16 %v4204, %v4196
    %v5253 = vpack.c.b16 %v4205, %v4197
    %v5254 = vpack.c.b16 %v4214, %v4206
    %v5255 = vpack.c.b16 %v4215, %v4207
    %v5256 = vpack.c.b16 %v4216, %v4208
    %v5257 = vpack.c.b16 %v4217, %v4209
    %v5258 = vpack.c.b16 %v4218, %v4210
    %v5259 = vpack.c.b16 %v4219, %v4211
    %v5260 = vpack.c.b16 %v4220, %v4212
    %v5261 = vpack.c.b16 %v4221, %v4213
    %v5262 = vpack.c.b16 %v4230, %v4222
    %v5263 = vpack.c.b16 %v4231, %v4223
    %v5264 = vpack.c.b16 %v4232, %v4224
    %v5265 = vpack.c.b16 %v4233, %v4225
    %v5266 = vpack.c.b16 %v4234, %v4226
    %v5267 = vpack.c.b16 %v4235, %v4227
    %v5268 = vpack.c.b16 %v4236, %v4228
    %v5269 = vpack.c.b16 %v4237, %v4229
    %v5270 = vpack.c.b16 %v4246, %v4238
    %v5271 = vpack.c.b16 %v4247, %v4239
    %v5272 = vpack.c.b16 %v4248, %v4240
    %v5273 = vpack.c.b16 %v4249, %v4241
    %v5274 = vpack.c.b16 %v4250, %v4242
    %v5275 = vpack.c.b16 %v4251, %v4243
    %v5276 = vpack.c.b16 %v4252, %v4244
    %v5277 = vpack.c.b16 %v4253, %v4245
    %6302 = vmatpush.bf16.msra.mxu0 %v4310
    %6303 = vmatpush.bf16.msra.mxu0 %v4302
    %6304 = vmatpush.bf16.msra.mxu0 %v4294
    %6305 = vmatpush.bf16.msra.mxu0 %v4286
    %6306 = vmatpush.bf16.msra.mxu0 %v4278
    %6307 = vmatpush.bf16.msra.mxu0 %v4270
    %6308 = vmatpush.bf16.msra.mxu0 %v4262
    %6309 = vmatpush.bf16.msra.mxu0 %v4254
    %6310 = vmatmul.bf16.gmra.mxu0 %v1150
    %v6311 = vpop.f32.mrf.mxu0
    %v6312 = vadd.f32 %v1086, %v6311
    %v6313 = vpop.f32.mrf.mxu0
    %v6314 = vadd.f32 %v1086, %v6313
    %6315 = vdwg.mxu0
    %6316 = vmatpush.bf16.msra.mxu0 %v4374
    %6317 = vmatpush.bf16.msra.mxu0 %v4366
    %6318 = vmatpush.bf16.msra.mxu0 %v4358
    %6319 = vmatpush.bf16.msra.mxu0 %v4350
    %6320 = vmatpush.bf16.msra.mxu0 %v4342
    %6321 = vmatpush.bf16.msra.mxu0 %v4334
    %6322 = vmatpush.bf16.msra.mxu0 %v4326
    %6323 = vmatpush.bf16.msra.mxu0 %v4318
    %6324 = vmatmul.bf16.gmra.mxu0 %v1151
    %v6325 = vpop.f32.mrf.mxu0
    %v6326 = vadd.f32 %v6312, %v6325
    %v6327 = vpop.f32.mrf.mxu0
    %v6328 = vadd.f32 %v6314, %v6327
    %6329 = vdwg.mxu0
    %6330 = vmatpush.bf16.msra.mxu0 %v4438
    %6331 = vmatpush.bf16.msra.mxu0 %v4430
    %6332 = vmatpush.bf16.msra.mxu0 %v4422
    %6333 = vmatpush.bf16.msra.mxu0 %v4414
    %6334 = vmatpush.bf16.msra.mxu0 %v4406
    %6335 = vmatpush.bf16.msra.mxu0 %v4398
    %6336 = vmatpush.bf16.msra.mxu0 %v4390
    %6337 = vmatpush.bf16.msra.mxu0 %v4382
    %6338 = vmatmul.bf16.gmra.mxu0 %v1152
    %v6339 = vpop.f32.mrf.mxu0
    %v6340 = vadd.f32 %v6326, %v6339
    %v6341 = vpop.f32.mrf.mxu0
    %v6342 = vadd.f32 %v6328, %v6341
    %6343 = vdwg.mxu0
    %6344 = vmatpush.bf16.msra.mxu0 %v4502
    %6345 = vmatpush.bf16.msra.mxu0 %v4494
    %6346 = vmatpush.bf16.msra.mxu0 %v4486
    %6347 = vmatpush.bf16.msra.mxu0 %v4478
    %6348 = vmatpush.bf16.msra.mxu0 %v4470
    %6349 = vmatpush.bf16.msra.mxu0 %v4462
    %6350 = vmatpush.bf16.msra.mxu0 %v4454
    %6351 = vmatpush.bf16.msra.mxu0 %v4446
    %6352 = vmatmul.bf16.gmra.mxu0 %v1153
    %v6353 = vpop.f32.mrf.mxu0
    %v6354 = vadd.f32 %v6340, %v6353
    %v6355 = vpop.f32.mrf.mxu0
    %v6356 = vadd.f32 %v6342, %v6355
    %6357 = vdwg.mxu0
    %6358 = vmatpush.bf16.msra.mxu0 %v4566
    %6359 = vmatpush.bf16.msra.mxu0 %v4558
    %6360 = vmatpush.bf16.msra.mxu0 %v4550
    %6361 = vmatpush.bf16.msra.mxu0 %v4542
    %6362 = vmatpush.bf16.msra.mxu0 %v4534
    %6363 = vmatpush.bf16.msra.mxu0 %v4526
    %6364 = vmatpush.bf16.msra.mxu0 %v4518
    %6365 = vmatpush.bf16.msra.mxu0 %v4510
    %6366 = vmatmul.bf16.gmra.mxu0 %v1154
    %v6367 = vpop.f32.mrf.mxu0
    %v6368 = vadd.f32 %v6354, %v6367
    %v6369 = vpop.f32.mrf.mxu0
    %v6370 = vadd.f32 %v6356, %v6369
    %6371 = vdwg.mxu0
    %6372 = vmatpush.bf16.msra.mxu0 %v4630
    %6373 = vmatpush.bf16.msra.mxu0 %v4622
    %6374 = vmatpush.bf16.msra.mxu0 %v4614
    %6375 = vmatpush.bf16.msra.mxu0 %v4606
    %6376 = vmatpush.bf16.msra.mxu0 %v4598
    %6377 = vmatpush.bf16.msra.mxu0 %v4590
    %6378 = vmatpush.bf16.msra.mxu0 %v4582
    %6379 = vmatpush.bf16.msra.mxu0 %v4574
    %6380 = vmatmul.bf16.gmra.mxu0 %v1155
    %v6381 = vpop.f32.mrf.mxu0
    %v6382 = vadd.f32 %v6368, %v6381
    %v6383 = vpop.f32.mrf.mxu0
    %v6384 = vadd.f32 %v6370, %v6383
    %6385 = vdwg.mxu0
    %6386 = vmatpush.bf16.msra.mxu0 %v4694
    %6387 = vmatpush.bf16.msra.mxu0 %v4686
    %6388 = vmatpush.bf16.msra.mxu0 %v4678
    %6389 = vmatpush.bf16.msra.mxu0 %v4670
    %6390 = vmatpush.bf16.msra.mxu0 %v4662
    %6391 = vmatpush.bf16.msra.mxu0 %v4654
    %6392 = vmatpush.bf16.msra.mxu0 %v4646
    %6393 = vmatpush.bf16.msra.mxu0 %v4638
    %6394 = vmatmul.bf16.gmra.mxu0 %v1156
    %v6395 = vpop.f32.mrf.mxu0
    %v6396 = vadd.f32 %v6382, %v6395
    %v6397 = vpop.f32.mrf.mxu0
    %v6398 = vadd.f32 %v6384, %v6397
    %6399 = vdwg.mxu0
    %6400 = vmatpush.bf16.msra.mxu0 %v4758
    %6401 = vmatpush.bf16.msra.mxu0 %v4750
    %6402 = vmatpush.bf16.msra.mxu0 %v4742
    %6403 = vmatpush.bf16.msra.mxu0 %v4734
    %6404 = vmatpush.bf16.msra.mxu0 %v4726
    %6405 = vmatpush.bf16.msra.mxu0 %v4718
    %6406 = vmatpush.bf16.msra.mxu0 %v4710
    %6407 = vmatpush.bf16.msra.mxu0 %v4702
    %6408 = vmatmul.bf16.gmra.mxu0 %v1157
    %v6409 = vpop.f32.mrf.mxu0
    %v6410 = vadd.f32 %v6396, %v6409
    %v6411 = vpop.f32.mrf.mxu0
    %v6412 = vadd.f32 %v6398, %v6411
    %6413 = vdwg.mxu0
    %6414 = vmatpush.bf16.msra.mxu0 %v4822
    %6415 = vmatpush.bf16.msra.mxu0 %v4814
    %6416 = vmatpush.bf16.msra.mxu0 %v4806
    %6417 = vmatpush.bf16.msra.mxu0 %v4798
    %6418 = vmatpush.bf16.msra.mxu0 %v4790
    %6419 = vmatpush.bf16.msra.mxu0 %v4782
    %6420 = vmatpush.bf16.msra.mxu0 %v4774
    %6421 = vmatpush.bf16.msra.mxu0 %v4766
    %6422 = vmatmul.bf16.gmra.mxu0 %v1158
    %v6423 = vpop.f32.mrf.mxu0
    %v6424 = vadd.f32 %v6410, %v6423
    %v6425 = vpop.f32.mrf.mxu0
    %v6426 = vadd.f32 %v6412, %v6425
    %6427 = vdwg.mxu0
    %6428 = vmatpush.bf16.msra.mxu0 %v4886
    %6429 = vmatpush.bf16.msra.mxu0 %v4878
    %6430 = vmatpush.bf16.msra.mxu0 %v4870
    %6431 = vmatpush.bf16.msra.mxu0 %v4862
    %6432 = vmatpush.bf16.msra.mxu0 %v4854
    %6433 = vmatpush.bf16.msra.mxu0 %v4846
    %6434 = vmatpush.bf16.msra.mxu0 %v4838
    %6435 = vmatpush.bf16.msra.mxu0 %v4830
    %6436 = vmatmul.bf16.gmra.mxu0 %v1159
    %v6437 = vpop.f32.mrf.mxu0
    %v6438 = vadd.f32 %v6424, %v6437
    %v6439 = vpop.f32.mrf.mxu0
    %v6440 = vadd.f32 %v6426, %v6439
    %6441 = vdwg.mxu0
    %6442 = vmatpush.bf16.msra.mxu0 %v4950
    %6443 = vmatpush.bf16.msra.mxu0 %v4942
    %6444 = vmatpush.bf16.msra.mxu0 %v4934
    %6445 = vmatpush.bf16.msra.mxu0 %v4926
    %6446 = vmatpush.bf16.msra.mxu0 %v4918
    %6447 = vmatpush.bf16.msra.mxu0 %v4910
    %6448 = vmatpush.bf16.msra.mxu0 %v4902
    %6449 = vmatpush.bf16.msra.mxu0 %v4894
    %6450 = vmatmul.bf16.gmra.mxu0 %v1160
    %v6451 = vpop.f32.mrf.mxu0
    %v6452 = vadd.f32 %v6438, %v6451
    %v6453 = vpop.f32.mrf.mxu0
    %v6454 = vadd.f32 %v6440, %v6453
    %6455 = vdwg.mxu0
    %6456 = vmatpush.bf16.msra.mxu0 %v5014
    %6457 = vmatpush.bf16.msra.mxu0 %v5006
    %6458 = vmatpush.bf16.msra.mxu0 %v4998
    %6459 = vmatpush.bf16.msra.mxu0 %v4990
    %6460 = vmatpush.bf16.msra.mxu0 %v4982
    %6461 = vmatpush.bf16.msra.mxu0 %v4974
    %6462 = vmatpush.bf16.msra.mxu0 %v4966
    %6463 = vmatpush.bf16.msra.mxu0 %v4958
    %6464 = vmatmul.bf16.gmra.mxu0 %v1161
    %v6465 = vpop.f32.mrf.mxu0
    %v6466 = vadd.f32 %v6452, %v6465
    %v6467 = vpop.f32.mrf.mxu0
    %v6468 = vadd.f32 %v6454, %v6467
    %6469 = vdwg.mxu0
    %6470 = vmatpush.bf16.msra.mxu0 %v5078
    %6471 = vmatpush.bf16.msra.mxu0 %v5070
    %6472 = vmatpush.bf16.msra.mxu0 %v5062
    %6473 = vmatpush.bf16.msra.mxu0 %v5054
    %6474 = vmatpush.bf16.msra.mxu0 %v5046
    %6475 = vmatpush.bf16.msra.mxu0 %v5038
    %6476 = vmatpush.bf16.msra.mxu0 %v5030
    %6477 = vmatpush.bf16.msra.mxu0 %v5022
    %6478 = vmatmul.bf16.gmra.mxu0 %v1162
    %v6479 = vpop.f32.mrf.mxu0
    %v6480 = vadd.f32 %v6466, %v6479
    %v6481 = vpop.f32.mrf.mxu0
    %v6482 = vadd.f32 %v6468, %v6481
    %6483 = vdwg.mxu0
    %6484 = vmatpush.bf16.msra.mxu0 %v5142
    %6485 = vmatpush.bf16.msra.mxu0 %v5134
    %6486 = vmatpush.bf16.msra.mxu0 %v5126
    %6487 = vmatpush.bf16.msra.mxu0 %v5118
    %6488 = vmatpush.bf16.msra.mxu0 %v5110
    %6489 = vmatpush.bf16.msra.mxu0 %v5102
    %6490 = vmatpush.bf16.msra.mxu0 %v5094
    %6491 = vmatpush.bf16.msra.mxu0 %v5086
    %6492 = vmatmul.bf16.gmra.mxu0 %v1163
    %v6493 = vpop.f32.mrf.mxu0
    %v6494 = vadd.f32 %v6480, %v6493
    %v6495 = vpop.f32.mrf.mxu0
    %v6496 = vadd.f32 %v6482, %v6495
    %6497 = vdwg.mxu0
    %6498 = vmatpush.bf16.msra.mxu0 %v5206
    %6499 = vmatpush.bf16.msra.mxu0 %v5198
    %6500 = vmatpush.bf16.msra.mxu0 %v5190
    %6501 = vmatpush.bf16.msra.mxu0 %v5182
    %6502 = vmatpush.bf16.msra.mxu0 %v5174
    %6503 = vmatpush.bf16.msra.mxu0 %v5166
    %6504 = vmatpush.bf16.msra.mxu0 %v5158
    %6505 = vmatpush.bf16.msra.mxu0 %v5150
    %6506 = vmatmul.bf16.gmra.mxu0 %v1164
    %v6507 = vpop.f32.mrf.mxu0
    %v6508 = vadd.f32 %v6494, %v6507
    %v6509 = vpop.f32.mrf.mxu0
    %v6510 = vadd.f32 %v6496, %v6509
    %6511 = vdwg.mxu0
    %6512 = vmatpush.bf16.msra.mxu0 %v5270
    %6513 = vmatpush.bf16.msra.mxu0 %v5262
    %6514 = vmatpush.bf16.msra.mxu0 %v5254
    %6515 = vmatpush.bf16.msra.mxu0 %v5246
    %6516 = vmatpush.bf16.msra.mxu0 %v5238
    %6517 = vmatpush.bf16.msra.mxu0 %v5230
    %6518 = vmatpush.bf16.msra.mxu0 %v5222
    %6519 = vmatpush.bf16.msra.mxu0 %v5214
    %6520 = vmatmul.bf16.gmra.mxu0 %v1165
    %v6521 = vpop.f32.mrf.mxu0
    %v6522 = vadd.f32 %v6508, %v6521
    %v6523 = vpop.f32.mrf.mxu0
    %v6524 = vadd.f32 %v6510, %v6523
    %6525 = vdwg.mxu0
    %6526 = vmatpush.bf16.msra.mxu0 %v4311
    %6527 = vmatpush.bf16.msra.mxu0 %v4303
    %6528 = vmatpush.bf16.msra.mxu0 %v4295
    %6529 = vmatpush.bf16.msra.mxu0 %v4287
    %6530 = vmatpush.bf16.msra.mxu0 %v4279
    %6531 = vmatpush.bf16.msra.mxu0 %v4271
    %6532 = vmatpush.bf16.msra.mxu0 %v4263
    %6533 = vmatpush.bf16.msra.mxu0 %v4255
    %6534 = vmatmul.bf16.gmra.mxu0 %v1150
    %v6535 = vpop.f32.mrf.mxu0
    %v6536 = vadd.f32 %v1087, %v6535
    %v6537 = vpop.f32.mrf.mxu0
    %v6538 = vadd.f32 %v1087, %v6537
    %6539 = vdwg.mxu0
    %6540 = vmatpush.bf16.msra.mxu0 %v4375
    %6541 = vmatpush.bf16.msra.mxu0 %v4367
    %6542 = vmatpush.bf16.msra.mxu0 %v4359
    %6543 = vmatpush.bf16.msra.mxu0 %v4351
    %6544 = vmatpush.bf16.msra.mxu0 %v4343
    %6545 = vmatpush.bf16.msra.mxu0 %v4335
    %6546 = vmatpush.bf16.msra.mxu0 %v4327
    %6547 = vmatpush.bf16.msra.mxu0 %v4319
    %6548 = vmatmul.bf16.gmra.mxu0 %v1151
    %v6549 = vpop.f32.mrf.mxu0
    %v6550 = vadd.f32 %v6536, %v6549
    %v6551 = vpop.f32.mrf.mxu0
    %v6552 = vadd.f32 %v6538, %v6551
    %6553 = vdwg.mxu0
    %6554 = vmatpush.bf16.msra.mxu0 %v4439
    %6555 = vmatpush.bf16.msra.mxu0 %v4431
    %6556 = vmatpush.bf16.msra.mxu0 %v4423
    %6557 = vmatpush.bf16.msra.mxu0 %v4415
    %6558 = vmatpush.bf16.msra.mxu0 %v4407
    %6559 = vmatpush.bf16.msra.mxu0 %v4399
    %6560 = vmatpush.bf16.msra.mxu0 %v4391
    %6561 = vmatpush.bf16.msra.mxu0 %v4383
    %6562 = vmatmul.bf16.gmra.mxu0 %v1152
    %v6563 = vpop.f32.mrf.mxu0
    %v6564 = vadd.f32 %v6550, %v6563
    %v6565 = vpop.f32.mrf.mxu0
    %v6566 = vadd.f32 %v6552, %v6565
    %6567 = vdwg.mxu0
    %6568 = vmatpush.bf16.msra.mxu0 %v4503
    %6569 = vmatpush.bf16.msra.mxu0 %v4495
    %6570 = vmatpush.bf16.msra.mxu0 %v4487
    %6571 = vmatpush.bf16.msra.mxu0 %v4479
    %6572 = vmatpush.bf16.msra.mxu0 %v4471
    %6573 = vmatpush.bf16.msra.mxu0 %v4463
    %6574 = vmatpush.bf16.msra.mxu0 %v4455
    %6575 = vmatpush.bf16.msra.mxu0 %v4447
    %6576 = vmatmul.bf16.gmra.mxu0 %v1153
    %v6577 = vpop.f32.mrf.mxu0
    %v6578 = vadd.f32 %v6564, %v6577
    %v6579 = vpop.f32.mrf.mxu0
    %v6580 = vadd.f32 %v6566, %v6579
    %6581 = vdwg.mxu0
    %6582 = vmatpush.bf16.msra.mxu0 %v4567
    %6583 = vmatpush.bf16.msra.mxu0 %v4559
    %6584 = vmatpush.bf16.msra.mxu0 %v4551
    %6585 = vmatpush.bf16.msra.mxu0 %v4543
    %6586 = vmatpush.bf16.msra.mxu0 %v4535
    %6587 = vmatpush.bf16.msra.mxu0 %v4527
    %6588 = vmatpush.bf16.msra.mxu0 %v4519
    %6589 = vmatpush.bf16.msra.mxu0 %v4511
    %6590 = vmatmul.bf16.gmra.mxu0 %v1154
    %v6591 = vpop.f32.mrf.mxu0
    %v6592 = vadd.f32 %v6578, %v6591
    %v6593 = vpop.f32.mrf.mxu0
    %v6594 = vadd.f32 %v6580, %v6593
    %6595 = vdwg.mxu0
    %6596 = vmatpush.bf16.msra.mxu0 %v4631
    %6597 = vmatpush.bf16.msra.mxu0 %v4623
    %6598 = vmatpush.bf16.msra.mxu0 %v4615
    %6599 = vmatpush.bf16.msra.mxu0 %v4607
    %6600 = vmatpush.bf16.msra.mxu0 %v4599
    %6601 = vmatpush.bf16.msra.mxu0 %v4591
    %6602 = vmatpush.bf16.msra.mxu0 %v4583
    %6603 = vmatpush.bf16.msra.mxu0 %v4575
    %6604 = vmatmul.bf16.gmra.mxu0 %v1155
    %v6605 = vpop.f32.mrf.mxu0
    %v6606 = vadd.f32 %v6592, %v6605
    %v6607 = vpop.f32.mrf.mxu0
    %v6608 = vadd.f32 %v6594, %v6607
    %6609 = vdwg.mxu0
    %6610 = vmatpush.bf16.msra.mxu0 %v4695
    %6611 = vmatpush.bf16.msra.mxu0 %v4687
    %6612 = vmatpush.bf16.msra.mxu0 %v4679
    %6613 = vmatpush.bf16.msra.mxu0 %v4671
    %6614 = vmatpush.bf16.msra.mxu0 %v4663
    %6615 = vmatpush.bf16.msra.mxu0 %v4655
    %6616 = vmatpush.bf16.msra.mxu0 %v4647
    %6617 = vmatpush.bf16.msra.mxu0 %v4639
    %6618 = vmatmul.bf16.gmra.mxu0 %v1156
    %v6619 = vpop.f32.mrf.mxu0
    %v6620 = vadd.f32 %v6606, %v6619
    %v6621 = vpop.f32.mrf.mxu0
    %v6622 = vadd.f32 %v6608, %v6621
    %6623 = vdwg.mxu0
    %6624 = vmatpush.bf16.msra.mxu0 %v4759
    %6625 = vmatpush.bf16.msra.mxu0 %v4751
    %6626 = vmatpush.bf16.msra.mxu0 %v4743
    %6627 = vmatpush.bf16.msra.mxu0 %v4735
    %6628 = vmatpush.bf16.msra.mxu0 %v4727
    %6629 = vmatpush.bf16.msra.mxu0 %v4719
    %6630 = vmatpush.bf16.msra.mxu0 %v4711
    %6631 = vmatpush.bf16.msra.mxu0 %v4703
    %6632 = vmatmul.bf16.gmra.mxu0 %v1157
    %v6633 = vpop.f32.mrf.mxu0
    %v6634 = vadd.f32 %v6620, %v6633
    %v6635 = vpop.f32.mrf.mxu0
    %v6636 = vadd.f32 %v6622, %v6635
    %6637 = vdwg.mxu0
    %6638 = vmatpush.bf16.msra.mxu0 %v4823
    %6639 = vmatpush.bf16.msra.mxu0 %v4815
    %6640 = vmatpush.bf16.msra.mxu0 %v4807
    %6641 = vmatpush.bf16.msra.mxu0 %v4799
    %6642 = vmatpush.bf16.msra.mxu0 %v4791
    %6643 = vmatpush.bf16.msra.mxu0 %v4783
    %6644 = vmatpush.bf16.msra.mxu0 %v4775
    %6645 = vmatpush.bf16.msra.mxu0 %v4767
    %6646 = vmatmul.bf16.gmra.mxu0 %v1158
    %v6647 = vpop.f32.mrf.mxu0
    %v6648 = vadd.f32 %v6634, %v6647
    %v6649 = vpop.f32.mrf.mxu0
    %v6650 = vadd.f32 %v6636, %v6649
    %6651 = vdwg.mxu0
    %6652 = vmatpush.bf16.msra.mxu0 %v4887
    %6653 = vmatpush.bf16.msra.mxu0 %v4879
    %6654 = vmatpush.bf16.msra.mxu0 %v4871
    %6655 = vmatpush.bf16.msra.mxu0 %v4863
    %6656 = vmatpush.bf16.msra.mxu0 %v4855
    %6657 = vmatpush.bf16.msra.mxu0 %v4847
    %6658 = vmatpush.bf16.msra.mxu0 %v4839
    %6659 = vmatpush.bf16.msra.mxu0 %v4831
    %6660 = vmatmul.bf16.gmra.mxu0 %v1159
    %v6661 = vpop.f32.mrf.mxu0
    %v6662 = vadd.f32 %v6648, %v6661
    %v6663 = vpop.f32.mrf.mxu0
    %v6664 = vadd.f32 %v6650, %v6663
    %6665 = vdwg.mxu0
    %6666 = vmatpush.bf16.msra.mxu0 %v4951
    %6667 = vmatpush.bf16.msra.mxu0 %v4943
    %6668 = vmatpush.bf16.msra.mxu0 %v4935
    %6669 = vmatpush.bf16.msra.mxu0 %v4927
    %6670 = vmatpush.bf16.msra.mxu0 %v4919
    %6671 = vmatpush.bf16.msra.mxu0 %v4911
    %6672 = vmatpush.bf16.msra.mxu0 %v4903
    %6673 = vmatpush.bf16.msra.mxu0 %v4895
    %6674 = vmatmul.bf16.gmra.mxu0 %v1160
    %v6675 = vpop.f32.mrf.mxu0
    %v6676 = vadd.f32 %v6662, %v6675
    %v6677 = vpop.f32.mrf.mxu0
    %v6678 = vadd.f32 %v6664, %v6677
    %6679 = vdwg.mxu0
    %6680 = vmatpush.bf16.msra.mxu0 %v5015
    %6681 = vmatpush.bf16.msra.mxu0 %v5007
    %6682 = vmatpush.bf16.msra.mxu0 %v4999
    %6683 = vmatpush.bf16.msra.mxu0 %v4991
    %6684 = vmatpush.bf16.msra.mxu0 %v4983
    %6685 = vmatpush.bf16.msra.mxu0 %v4975
    %6686 = vmatpush.bf16.msra.mxu0 %v4967
    %6687 = vmatpush.bf16.msra.mxu0 %v4959
    %6688 = vmatmul.bf16.gmra.mxu0 %v1161
    %v6689 = vpop.f32.mrf.mxu0
    %v6690 = vadd.f32 %v6676, %v6689
    %v6691 = vpop.f32.mrf.mxu0
    %v6692 = vadd.f32 %v6678, %v6691
    %6693 = vdwg.mxu0
    %6694 = vmatpush.bf16.msra.mxu0 %v5079
    %6695 = vmatpush.bf16.msra.mxu0 %v5071
    %6696 = vmatpush.bf16.msra.mxu0 %v5063
    %6697 = vmatpush.bf16.msra.mxu0 %v5055
    %6698 = vmatpush.bf16.msra.mxu0 %v5047
    %6699 = vmatpush.bf16.msra.mxu0 %v5039
    %6700 = vmatpush.bf16.msra.mxu0 %v5031
    %6701 = vmatpush.bf16.msra.mxu0 %v5023
    %6702 = vmatmul.bf16.gmra.mxu0 %v1162
    %v6703 = vpop.f32.mrf.mxu0
    %v6704 = vadd.f32 %v6690, %v6703
    %v6705 = vpop.f32.mrf.mxu0
    %v6706 = vadd.f32 %v6692, %v6705
    %6707 = vdwg.mxu0
    %6708 = vmatpush.bf16.msra.mxu0 %v5143
    %6709 = vmatpush.bf16.msra.mxu0 %v5135
    %6710 = vmatpush.bf16.msra.mxu0 %v5127
    %6711 = vmatpush.bf16.msra.mxu0 %v5119
    %6712 = vmatpush.bf16.msra.mxu0 %v5111
    %6713 = vmatpush.bf16.msra.mxu0 %v5103
    %6714 = vmatpush.bf16.msra.mxu0 %v5095
    %6715 = vmatpush.bf16.msra.mxu0 %v5087
    %6716 = vmatmul.bf16.gmra.mxu0 %v1163
    %v6717 = vpop.f32.mrf.mxu0
    %v6718 = vadd.f32 %v6704, %v6717
    %v6719 = vpop.f32.mrf.mxu0
    %v6720 = vadd.f32 %v6706, %v6719
    %6721 = vdwg.mxu0
    %6722 = vmatpush.bf16.msra.mxu0 %v5207
    %6723 = vmatpush.bf16.msra.mxu0 %v5199
    %6724 = vmatpush.bf16.msra.mxu0 %v5191
    %6725 = vmatpush.bf16.msra.mxu0 %v5183
    %6726 = vmatpush.bf16.msra.mxu0 %v5175
    %6727 = vmatpush.bf16.msra.mxu0 %v5167
    %6728 = vmatpush.bf16.msra.mxu0 %v5159
    %6729 = vmatpush.bf16.msra.mxu0 %v5151
    %6730 = vmatmul.bf16.gmra.mxu0 %v1164
    %v6731 = vpop.f32.mrf.mxu0
    %v6732 = vadd.f32 %v6718, %v6731
    %v6733 = vpop.f32.mrf.mxu0
    %v6734 = vadd.f32 %v6720, %v6733
    %6735 = vdwg.mxu0
    %6736 = vmatpush.bf16.msra.mxu0 %v5271
    %6737 = vmatpush.bf16.msra.mxu0 %v5263
    %6738 = vmatpush.bf16.msra.mxu0 %v5255
    %6739 = vmatpush.bf16.msra.mxu0 %v5247
    %6740 = vmatpush.bf16.msra.mxu0 %v5239
    %6741 = vmatpush.bf16.msra.mxu0 %v5231
    %6742 = vmatpush.bf16.msra.mxu0 %v5223
    %6743 = vmatpush.bf16.msra.mxu0 %v5215
    %6744 = vmatmul.bf16.gmra.mxu0 %v1165
    %v6745 = vpop.f32.mrf.mxu0
    %v6746 = vadd.f32 %v6732, %v6745
    %v6747 = vpop.f32.mrf.mxu0
    %v6748 = vadd.f32 %v6734, %v6747
    %6749 = vdwg.mxu0
    %6750 = vmatpush.bf16.msra.mxu0 %v4312
    %6751 = vmatpush.bf16.msra.mxu0 %v4304
    %6752 = vmatpush.bf16.msra.mxu0 %v4296
    %6753 = vmatpush.bf16.msra.mxu0 %v4288
    %6754 = vmatpush.bf16.msra.mxu0 %v4280
    %6755 = vmatpush.bf16.msra.mxu0 %v4272
    %6756 = vmatpush.bf16.msra.mxu0 %v4264
    %6757 = vmatpush.bf16.msra.mxu0 %v4256
    %6758 = vmatmul.bf16.gmra.mxu0 %v1150
    %v6759 = vpop.f32.mrf.mxu0
    %v6760 = vadd.f32 %v1088, %v6759
    %v6761 = vpop.f32.mrf.mxu0
    %v6762 = vadd.f32 %v1088, %v6761
    %6763 = vdwg.mxu0
    %6764 = vmatpush.bf16.msra.mxu0 %v4376
    %6765 = vmatpush.bf16.msra.mxu0 %v4368
    %6766 = vmatpush.bf16.msra.mxu0 %v4360
    %6767 = vmatpush.bf16.msra.mxu0 %v4352
    %6768 = vmatpush.bf16.msra.mxu0 %v4344
    %6769 = vmatpush.bf16.msra.mxu0 %v4336
    %6770 = vmatpush.bf16.msra.mxu0 %v4328
    %6771 = vmatpush.bf16.msra.mxu0 %v4320
    %6772 = vmatmul.bf16.gmra.mxu0 %v1151
    %v6773 = vpop.f32.mrf.mxu0
    %v6774 = vadd.f32 %v6760, %v6773
    %v6775 = vpop.f32.mrf.mxu0
    %v6776 = vadd.f32 %v6762, %v6775
    %6777 = vdwg.mxu0
    %6778 = vmatpush.bf16.msra.mxu0 %v4440
    %6779 = vmatpush.bf16.msra.mxu0 %v4432
    %6780 = vmatpush.bf16.msra.mxu0 %v4424
    %6781 = vmatpush.bf16.msra.mxu0 %v4416
    %6782 = vmatpush.bf16.msra.mxu0 %v4408
    %6783 = vmatpush.bf16.msra.mxu0 %v4400
    %6784 = vmatpush.bf16.msra.mxu0 %v4392
    %6785 = vmatpush.bf16.msra.mxu0 %v4384
    %6786 = vmatmul.bf16.gmra.mxu0 %v1152
    %v6787 = vpop.f32.mrf.mxu0
    %v6788 = vadd.f32 %v6774, %v6787
    %v6789 = vpop.f32.mrf.mxu0
    %v6790 = vadd.f32 %v6776, %v6789
    %6791 = vdwg.mxu0
    %6792 = vmatpush.bf16.msra.mxu0 %v4504
    %6793 = vmatpush.bf16.msra.mxu0 %v4496
    %6794 = vmatpush.bf16.msra.mxu0 %v4488
    %6795 = vmatpush.bf16.msra.mxu0 %v4480
    %6796 = vmatpush.bf16.msra.mxu0 %v4472
    %6797 = vmatpush.bf16.msra.mxu0 %v4464
    %6798 = vmatpush.bf16.msra.mxu0 %v4456
    %6799 = vmatpush.bf16.msra.mxu0 %v4448
    %6800 = vmatmul.bf16.gmra.mxu0 %v1153
    %v6801 = vpop.f32.mrf.mxu0
    %v6802 = vadd.f32 %v6788, %v6801
    %v6803 = vpop.f32.mrf.mxu0
    %v6804 = vadd.f32 %v6790, %v6803
    %6805 = vdwg.mxu0
    %6806 = vmatpush.bf16.msra.mxu0 %v4568
    %6807 = vmatpush.bf16.msra.mxu0 %v4560
    %6808 = vmatpush.bf16.msra.mxu0 %v4552
    %6809 = vmatpush.bf16.msra.mxu0 %v4544
    %6810 = vmatpush.bf16.msra.mxu0 %v4536
    %6811 = vmatpush.bf16.msra.mxu0 %v4528
    %6812 = vmatpush.bf16.msra.mxu0 %v4520
    %6813 = vmatpush.bf16.msra.mxu0 %v4512
    %6814 = vmatmul.bf16.gmra.mxu0 %v1154
    %v6815 = vpop.f32.mrf.mxu0
    %v6816 = vadd.f32 %v6802, %v6815
    %v6817 = vpop.f32.mrf.mxu0
    %v6818 = vadd.f32 %v6804, %v6817
    %6819 = vdwg.mxu0
    %6820 = vmatpush.bf16.msra.mxu0 %v4632
    %6821 = vmatpush.bf16.msra.mxu0 %v4624
    %6822 = vmatpush.bf16.msra.mxu0 %v4616
    %6823 = vmatpush.bf16.msra.mxu0 %v4608
    %6824 = vmatpush.bf16.msra.mxu0 %v4600
    %6825 = vmatpush.bf16.msra.mxu0 %v4592
    %6826 = vmatpush.bf16.msra.mxu0 %v4584
    %6827 = vmatpush.bf16.msra.mxu0 %v4576
    %6828 = vmatmul.bf16.gmra.mxu0 %v1155
    %v6829 = vpop.f32.mrf.mxu0
    %v6830 = vadd.f32 %v6816, %v6829
    %v6831 = vpop.f32.mrf.mxu0
    %v6832 = vadd.f32 %v6818, %v6831
    %6833 = vdwg.mxu0
    %6834 = vmatpush.bf16.msra.mxu0 %v4696
    %6835 = vmatpush.bf16.msra.mxu0 %v4688
    %6836 = vmatpush.bf16.msra.mxu0 %v4680
    %6837 = vmatpush.bf16.msra.mxu0 %v4672
    %6838 = vmatpush.bf16.msra.mxu0 %v4664
    %6839 = vmatpush.bf16.msra.mxu0 %v4656
    %6840 = vmatpush.bf16.msra.mxu0 %v4648
    %6841 = vmatpush.bf16.msra.mxu0 %v4640
    %6842 = vmatmul.bf16.gmra.mxu0 %v1156
    %v6843 = vpop.f32.mrf.mxu0
    %v6844 = vadd.f32 %v6830, %v6843
    %v6845 = vpop.f32.mrf.mxu0
    %v6846 = vadd.f32 %v6832, %v6845
    %6847 = vdwg.mxu0
    %6848 = vmatpush.bf16.msra.mxu0 %v4760
    %6849 = vmatpush.bf16.msra.mxu0 %v4752
    %6850 = vmatpush.bf16.msra.mxu0 %v4744
    %6851 = vmatpush.bf16.msra.mxu0 %v4736
    %6852 = vmatpush.bf16.msra.mxu0 %v4728
    %6853 = vmatpush.bf16.msra.mxu0 %v4720
    %6854 = vmatpush.bf16.msra.mxu0 %v4712
    %6855 = vmatpush.bf16.msra.mxu0 %v4704
    %6856 = vmatmul.bf16.gmra.mxu0 %v1157
    %v6857 = vpop.f32.mrf.mxu0
    %v6858 = vadd.f32 %v6844, %v6857
    %v6859 = vpop.f32.mrf.mxu0
    %v6860 = vadd.f32 %v6846, %v6859
    %6861 = vdwg.mxu0
    %6862 = vmatpush.bf16.msra.mxu0 %v4824
    %6863 = vmatpush.bf16.msra.mxu0 %v4816
    %6864 = vmatpush.bf16.msra.mxu0 %v4808
    %6865 = vmatpush.bf16.msra.mxu0 %v4800
    %6866 = vmatpush.bf16.msra.mxu0 %v4792
    %6867 = vmatpush.bf16.msra.mxu0 %v4784
    %6868 = vmatpush.bf16.msra.mxu0 %v4776
    %6869 = vmatpush.bf16.msra.mxu0 %v4768
    %6870 = vmatmul.bf16.gmra.mxu0 %v1158
    %v6871 = vpop.f32.mrf.mxu0
    %v6872 = vadd.f32 %v6858, %v6871
    %v6873 = vpop.f32.mrf.mxu0
    %v6874 = vadd.f32 %v6860, %v6873
    %6875 = vdwg.mxu0
    %6876 = vmatpush.bf16.msra.mxu0 %v4888
    %6877 = vmatpush.bf16.msra.mxu0 %v4880
    %6878 = vmatpush.bf16.msra.mxu0 %v4872
    %6879 = vmatpush.bf16.msra.mxu0 %v4864
    %6880 = vmatpush.bf16.msra.mxu0 %v4856
    %6881 = vmatpush.bf16.msra.mxu0 %v4848
    %6882 = vmatpush.bf16.msra.mxu0 %v4840
    %6883 = vmatpush.bf16.msra.mxu0 %v4832
    %6884 = vmatmul.bf16.gmra.mxu0 %v1159
    %v6885 = vpop.f32.mrf.mxu0
    %v6886 = vadd.f32 %v6872, %v6885
    %v6887 = vpop.f32.mrf.mxu0
    %v6888 = vadd.f32 %v6874, %v6887
    %6889 = vdwg.mxu0
    %6890 = vmatpush.bf16.msra.mxu0 %v4952
    %6891 = vmatpush.bf16.msra.mxu0 %v4944
    %6892 = vmatpush.bf16.msra.mxu0 %v4936
    %6893 = vmatpush.bf16.msra.mxu0 %v4928
    %6894 = vmatpush.bf16.msra.mxu0 %v4920
    %6895 = vmatpush.bf16.msra.mxu0 %v4912
    %6896 = vmatpush.bf16.msra.mxu0 %v4904
    %6897 = vmatpush.bf16.msra.mxu0 %v4896
    %6898 = vmatmul.bf16.gmra.mxu0 %v1160
    %v6899 = vpop.f32.mrf.mxu0
    %v6900 = vadd.f32 %v6886, %v6899
    %v6901 = vpop.f32.mrf.mxu0
    %v6902 = vadd.f32 %v6888, %v6901
    %6903 = vdwg.mxu0
    %6904 = vmatpush.bf16.msra.mxu0 %v5016
    %6905 = vmatpush.bf16.msra.mxu0 %v5008
    %6906 = vmatpush.bf16.msra.mxu0 %v5000
    %6907 = vmatpush.bf16.msra.mxu0 %v4992
    %6908 = vmatpush.bf16.msra.mxu0 %v4984
    %6909 = vmatpush.bf16.msra.mxu0 %v4976
    %6910 = vmatpush.bf16.msra.mxu0 %v4968
    %6911 = vmatpush.bf16.msra.mxu0 %v4960
    %6912 = vmatmul.bf16.gmra.mxu0 %v1161
    %v6913 = vpop.f32.mrf.mxu0
    %v6914 = vadd.f32 %v6900, %v6913
    %v6915 = vpop.f32.mrf.mxu0
    %v6916 = vadd.f32 %v6902, %v6915
    %6917 = vdwg.mxu0
    %6918 = vmatpush.bf16.msra.mxu0 %v5080
    %6919 = vmatpush.bf16.msra.mxu0 %v5072
    %6920 = vmatpush.bf16.msra.mxu0 %v5064
    %6921 = vmatpush.bf16.msra.mxu0 %v5056
    %6922 = vmatpush.bf16.msra.mxu0 %v5048
    %6923 = vmatpush.bf16.msra.mxu0 %v5040
    %6924 = vmatpush.bf16.msra.mxu0 %v5032
    %6925 = vmatpush.bf16.msra.mxu0 %v5024
    %6926 = vmatmul.bf16.gmra.mxu0 %v1162
    %v6927 = vpop.f32.mrf.mxu0
    %v6928 = vadd.f32 %v6914, %v6927
    %v6929 = vpop.f32.mrf.mxu0
    %v6930 = vadd.f32 %v6916, %v6929
    %6931 = vdwg.mxu0
    %6932 = vmatpush.bf16.msra.mxu0 %v5144
    %6933 = vmatpush.bf16.msra.mxu0 %v5136
    %6934 = vmatpush.bf16.msra.mxu0 %v5128
    %6935 = vmatpush.bf16.msra.mxu0 %v5120
    %6936 = vmatpush.bf16.msra.mxu0 %v5112
    %6937 = vmatpush.bf16.msra.mxu0 %v5104
    %6938 = vmatpush.bf16.msra.mxu0 %v5096
    %6939 = vmatpush.bf16.msra.mxu0 %v5088
    %6940 = vmatmul.bf16.gmra.mxu0 %v1163
    %v6941 = vpop.f32.mrf.mxu0
    %v6942 = vadd.f32 %v6928, %v6941
    %v6943 = vpop.f32.mrf.mxu0
    %v6944 = vadd.f32 %v6930, %v6943
    %6945 = vdwg.mxu0
    %6946 = vmatpush.bf16.msra.mxu0 %v5208
    %6947 = vmatpush.bf16.msra.mxu0 %v5200
    %6948 = vmatpush.bf16.msra.mxu0 %v5192
    %6949 = vmatpush.bf16.msra.mxu0 %v5184
    %6950 = vmatpush.bf16.msra.mxu0 %v5176
    %6951 = vmatpush.bf16.msra.mxu0 %v5168
    %6952 = vmatpush.bf16.msra.mxu0 %v5160
    %6953 = vmatpush.bf16.msra.mxu0 %v5152
    %6954 = vmatmul.bf16.gmra.mxu0 %v1164
    %v6955 = vpop.f32.mrf.mxu0
    %v6956 = vadd.f32 %v6942, %v6955
    %v6957 = vpop.f32.mrf.mxu0
    %v6958 = vadd.f32 %v6944, %v6957
    %6959 = vdwg.mxu0
    %6960 = vmatpush.bf16.msra.mxu0 %v5272
    %6961 = vmatpush.bf16.msra.mxu0 %v5264
    %6962 = vmatpush.bf16.msra.mxu0 %v5256
    %6963 = vmatpush.bf16.msra.mxu0 %v5248
    %6964 = vmatpush.bf16.msra.mxu0 %v5240
    %6965 = vmatpush.bf16.msra.mxu0 %v5232
    %6966 = vmatpush.bf16.msra.mxu0 %v5224
    %6967 = vmatpush.bf16.msra.mxu0 %v5216
    %6968 = vmatmul.bf16.gmra.mxu0 %v1165
    %v6969 = vpop.f32.mrf.mxu0
    %v6970 = vadd.f32 %v6956, %v6969
    %v6971 = vpop.f32.mrf.mxu0
    %v6972 = vadd.f32 %v6958, %v6971
    %6973 = vdwg.mxu0
    %6974 = vmatpush.bf16.msra.mxu0 %v4313
    %6975 = vmatpush.bf16.msra.mxu0 %v4305
    %6976 = vmatpush.bf16.msra.mxu0 %v4297
    %6977 = vmatpush.bf16.msra.mxu0 %v4289
    %6978 = vmatpush.bf16.msra.mxu0 %v4281
    %6979 = vmatpush.bf16.msra.mxu0 %v4273
    %6980 = vmatpush.bf16.msra.mxu0 %v4265
    %6981 = vmatpush.bf16.msra.mxu0 %v4257
    %6982 = vmatmul.bf16.gmra.mxu0 %v1150
    %v6983 = vpop.f32.mrf.mxu0
    %v6984 = vadd.f32 %v1089, %v6983
    %v6985 = vpop.f32.mrf.mxu0
    %v6986 = vadd.f32 %v1089, %v6985
    %6987 = vdwg.mxu0
    %6988 = vmatpush.bf16.msra.mxu0 %v4377
    %6989 = vmatpush.bf16.msra.mxu0 %v4369
    %6990 = vmatpush.bf16.msra.mxu0 %v4361
    %6991 = vmatpush.bf16.msra.mxu0 %v4353
    %6992 = vmatpush.bf16.msra.mxu0 %v4345
    %6993 = vmatpush.bf16.msra.mxu0 %v4337
    %6994 = vmatpush.bf16.msra.mxu0 %v4329
    %6995 = vmatpush.bf16.msra.mxu0 %v4321
    %6996 = vmatmul.bf16.gmra.mxu0 %v1151
    %v6997 = vpop.f32.mrf.mxu0
    %v6998 = vadd.f32 %v6984, %v6997
    %v6999 = vpop.f32.mrf.mxu0
    %v7000 = vadd.f32 %v6986, %v6999
    %7001 = vdwg.mxu0
    %7002 = vmatpush.bf16.msra.mxu0 %v4441
    %7003 = vmatpush.bf16.msra.mxu0 %v4433
    %7004 = vmatpush.bf16.msra.mxu0 %v4425
    %7005 = vmatpush.bf16.msra.mxu0 %v4417
    %7006 = vmatpush.bf16.msra.mxu0 %v4409
    %7007 = vmatpush.bf16.msra.mxu0 %v4401
    %7008 = vmatpush.bf16.msra.mxu0 %v4393
    %7009 = vmatpush.bf16.msra.mxu0 %v4385
    %7010 = vmatmul.bf16.gmra.mxu0 %v1152
    %v7011 = vpop.f32.mrf.mxu0
    %v7012 = vadd.f32 %v6998, %v7011
    %v7013 = vpop.f32.mrf.mxu0
    %v7014 = vadd.f32 %v7000, %v7013
    %7015 = vdwg.mxu0
    %7016 = vmatpush.bf16.msra.mxu0 %v4505
    %7017 = vmatpush.bf16.msra.mxu0 %v4497
    %7018 = vmatpush.bf16.msra.mxu0 %v4489
    %7019 = vmatpush.bf16.msra.mxu0 %v4481
    %7020 = vmatpush.bf16.msra.mxu0 %v4473
    %7021 = vmatpush.bf16.msra.mxu0 %v4465
    %7022 = vmatpush.bf16.msra.mxu0 %v4457
    %7023 = vmatpush.bf16.msra.mxu0 %v4449
    %7024 = vmatmul.bf16.gmra.mxu0 %v1153
    %v7025 = vpop.f32.mrf.mxu0
    %v7026 = vadd.f32 %v7012, %v7025
    %v7027 = vpop.f32.mrf.mxu0
    %v7028 = vadd.f32 %v7014, %v7027
    %7029 = vdwg.mxu0
    %7030 = vmatpush.bf16.msra.mxu0 %v4569
    %7031 = vmatpush.bf16.msra.mxu0 %v4561
    %7032 = vmatpush.bf16.msra.mxu0 %v4553
    %7033 = vmatpush.bf16.msra.mxu0 %v4545
    %7034 = vmatpush.bf16.msra.mxu0 %v4537
    %7035 = vmatpush.bf16.msra.mxu0 %v4529
    %7036 = vmatpush.bf16.msra.mxu0 %v4521
    %7037 = vmatpush.bf16.msra.mxu0 %v4513
    %7038 = vmatmul.bf16.gmra.mxu0 %v1154
    %v7039 = vpop.f32.mrf.mxu0
    %v7040 = vadd.f32 %v7026, %v7039
    %v7041 = vpop.f32.mrf.mxu0
    %v7042 = vadd.f32 %v7028, %v7041
    %7043 = vdwg.mxu0
    %7044 = vmatpush.bf16.msra.mxu0 %v4633
    %7045 = vmatpush.bf16.msra.mxu0 %v4625
    %7046 = vmatpush.bf16.msra.mxu0 %v4617
    %7047 = vmatpush.bf16.msra.mxu0 %v4609
    %7048 = vmatpush.bf16.msra.mxu0 %v4601
    %7049 = vmatpush.bf16.msra.mxu0 %v4593
    %7050 = vmatpush.bf16.msra.mxu0 %v4585
    %7051 = vmatpush.bf16.msra.mxu0 %v4577
    %7052 = vmatmul.bf16.gmra.mxu0 %v1155
    %v7053 = vpop.f32.mrf.mxu0
    %v7054 = vadd.f32 %v7040, %v7053
    %v7055 = vpop.f32.mrf.mxu0
    %v7056 = vadd.f32 %v7042, %v7055
    %7057 = vdwg.mxu0
    %7058 = vmatpush.bf16.msra.mxu0 %v4697
    %7059 = vmatpush.bf16.msra.mxu0 %v4689
    %7060 = vmatpush.bf16.msra.mxu0 %v4681
    %7061 = vmatpush.bf16.msra.mxu0 %v4673
    %7062 = vmatpush.bf16.msra.mxu0 %v4665
    %7063 = vmatpush.bf16.msra.mxu0 %v4657
    %7064 = vmatpush.bf16.msra.mxu0 %v4649
    %7065 = vmatpush.bf16.msra.mxu0 %v4641
    %7066 = vmatmul.bf16.gmra.mxu0 %v1156
    %v7067 = vpop.f32.mrf.mxu0
    %v7068 = vadd.f32 %v7054, %v7067
    %v7069 = vpop.f32.mrf.mxu0
    %v7070 = vadd.f32 %v7056, %v7069
    %7071 = vdwg.mxu0
    %7072 = vmatpush.bf16.msra.mxu0 %v4761
    %7073 = vmatpush.bf16.msra.mxu0 %v4753
    %7074 = vmatpush.bf16.msra.mxu0 %v4745
    %7075 = vmatpush.bf16.msra.mxu0 %v4737
    %7076 = vmatpush.bf16.msra.mxu0 %v4729
    %7077 = vmatpush.bf16.msra.mxu0 %v4721
    %7078 = vmatpush.bf16.msra.mxu0 %v4713
    %7079 = vmatpush.bf16.msra.mxu0 %v4705
    %7080 = vmatmul.bf16.gmra.mxu0 %v1157
    %v7081 = vpop.f32.mrf.mxu0
    %v7082 = vadd.f32 %v7068, %v7081
    %v7083 = vpop.f32.mrf.mxu0
    %v7084 = vadd.f32 %v7070, %v7083
    %7085 = vdwg.mxu0
    %7086 = vmatpush.bf16.msra.mxu0 %v4825
    %7087 = vmatpush.bf16.msra.mxu0 %v4817
    %7088 = vmatpush.bf16.msra.mxu0 %v4809
    %7089 = vmatpush.bf16.msra.mxu0 %v4801
    %7090 = vmatpush.bf16.msra.mxu0 %v4793
    %7091 = vmatpush.bf16.msra.mxu0 %v4785
    %7092 = vmatpush.bf16.msra.mxu0 %v4777
    %7093 = vmatpush.bf16.msra.mxu0 %v4769
    %7094 = vmatmul.bf16.gmra.mxu0 %v1158
    %v7095 = vpop.f32.mrf.mxu0
    %v7096 = vadd.f32 %v7082, %v7095
    %v7097 = vpop.f32.mrf.mxu0
    %v7098 = vadd.f32 %v7084, %v7097
    %7099 = vdwg.mxu0
    %7100 = vmatpush.bf16.msra.mxu0 %v4889
    %7101 = vmatpush.bf16.msra.mxu0 %v4881
    %7102 = vmatpush.bf16.msra.mxu0 %v4873
    %7103 = vmatpush.bf16.msra.mxu0 %v4865
    %7104 = vmatpush.bf16.msra.mxu0 %v4857
    %7105 = vmatpush.bf16.msra.mxu0 %v4849
    %7106 = vmatpush.bf16.msra.mxu0 %v4841
    %7107 = vmatpush.bf16.msra.mxu0 %v4833
    %7108 = vmatmul.bf16.gmra.mxu0 %v1159
    %v7109 = vpop.f32.mrf.mxu0
    %v7110 = vadd.f32 %v7096, %v7109
    %v7111 = vpop.f32.mrf.mxu0
    %v7112 = vadd.f32 %v7098, %v7111
    %7113 = vdwg.mxu0
    %7114 = vmatpush.bf16.msra.mxu0 %v4953
    %7115 = vmatpush.bf16.msra.mxu0 %v4945
    %7116 = vmatpush.bf16.msra.mxu0 %v4937
    %7117 = vmatpush.bf16.msra.mxu0 %v4929
    %7118 = vmatpush.bf16.msra.mxu0 %v4921
    %7119 = vmatpush.bf16.msra.mxu0 %v4913
    %7120 = vmatpush.bf16.msra.mxu0 %v4905
    %7121 = vmatpush.bf16.msra.mxu0 %v4897
    %7122 = vmatmul.bf16.gmra.mxu0 %v1160
    %v7123 = vpop.f32.mrf.mxu0
    %v7124 = vadd.f32 %v7110, %v7123
    %v7125 = vpop.f32.mrf.mxu0
    %v7126 = vadd.f32 %v7112, %v7125
    %7127 = vdwg.mxu0
    %7128 = vmatpush.bf16.msra.mxu0 %v5017
    %7129 = vmatpush.bf16.msra.mxu0 %v5009
    %7130 = vmatpush.bf16.msra.mxu0 %v5001
    %7131 = vmatpush.bf16.msra.mxu0 %v4993
    %7132 = vmatpush.bf16.msra.mxu0 %v4985
    %7133 = vmatpush.bf16.msra.mxu0 %v4977
    %7134 = vmatpush.bf16.msra.mxu0 %v4969
    %7135 = vmatpush.bf16.msra.mxu0 %v4961
    %7136 = vmatmul.bf16.gmra.mxu0 %v1161
    %v7137 = vpop.f32.mrf.mxu0
    %v7138 = vadd.f32 %v7124, %v7137
    %v7139 = vpop.f32.mrf.mxu0
    %v7140 = vadd.f32 %v7126, %v7139
    %7141 = vdwg.mxu0
    %7142 = vmatpush.bf16.msra.mxu0 %v5081
    %7143 = vmatpush.bf16.msra.mxu0 %v5073
    %7144 = vmatpush.bf16.msra.mxu0 %v5065
    %7145 = vmatpush.bf16.msra.mxu0 %v5057
    %7146 = vmatpush.bf16.msra.mxu0 %v5049
    %7147 = vmatpush.bf16.msra.mxu0 %v5041
    %7148 = vmatpush.bf16.msra.mxu0 %v5033
    %7149 = vmatpush.bf16.msra.mxu0 %v5025
    %7150 = vmatmul.bf16.gmra.mxu0 %v1162
    %v7151 = vpop.f32.mrf.mxu0
    %v7152 = vadd.f32 %v7138, %v7151
    %v7153 = vpop.f32.mrf.mxu0
    %v7154 = vadd.f32 %v7140, %v7153
    %7155 = vdwg.mxu0
    %7156 = vmatpush.bf16.msra.mxu0 %v5145
    %7157 = vmatpush.bf16.msra.mxu0 %v5137
    %7158 = vmatpush.bf16.msra.mxu0 %v5129
    %7159 = vmatpush.bf16.msra.mxu0 %v5121
    %7160 = vmatpush.bf16.msra.mxu0 %v5113
    %7161 = vmatpush.bf16.msra.mxu0 %v5105
    %7162 = vmatpush.bf16.msra.mxu0 %v5097
    %7163 = vmatpush.bf16.msra.mxu0 %v5089
    %7164 = vmatmul.bf16.gmra.mxu0 %v1163
    %v7165 = vpop.f32.mrf.mxu0
    %v7166 = vadd.f32 %v7152, %v7165
    %v7167 = vpop.f32.mrf.mxu0
    %v7168 = vadd.f32 %v7154, %v7167
    %7169 = vdwg.mxu0
    %7170 = vmatpush.bf16.msra.mxu0 %v5209
    %7171 = vmatpush.bf16.msra.mxu0 %v5201
    %7172 = vmatpush.bf16.msra.mxu0 %v5193
    %7173 = vmatpush.bf16.msra.mxu0 %v5185
    %7174 = vmatpush.bf16.msra.mxu0 %v5177
    %7175 = vmatpush.bf16.msra.mxu0 %v5169
    %7176 = vmatpush.bf16.msra.mxu0 %v5161
    %7177 = vmatpush.bf16.msra.mxu0 %v5153
    %7178 = vmatmul.bf16.gmra.mxu0 %v1164
    %v7179 = vpop.f32.mrf.mxu0
    %v7180 = vadd.f32 %v7166, %v7179
    %v7181 = vpop.f32.mrf.mxu0
    %v7182 = vadd.f32 %v7168, %v7181
    %7183 = vdwg.mxu0
    %7184 = vmatpush.bf16.msra.mxu0 %v5273
    %7185 = vmatpush.bf16.msra.mxu0 %v5265
    %7186 = vmatpush.bf16.msra.mxu0 %v5257
    %7187 = vmatpush.bf16.msra.mxu0 %v5249
    %7188 = vmatpush.bf16.msra.mxu0 %v5241
    %7189 = vmatpush.bf16.msra.mxu0 %v5233
    %7190 = vmatpush.bf16.msra.mxu0 %v5225
    %7191 = vmatpush.bf16.msra.mxu0 %v5217
    %7192 = vmatmul.bf16.gmra.mxu0 %v1165
    %v7193 = vpop.f32.mrf.mxu0
    %v7194 = vadd.f32 %v7180, %v7193
    %v7195 = vpop.f32.mrf.mxu0
    %v7196 = vadd.f32 %v7182, %v7195
    %7197 = vdwg.mxu0
    %7198 = vmatpush.bf16.msra.mxu0 %v4314
    %7199 = vmatpush.bf16.msra.mxu0 %v4306
    %7200 = vmatpush.bf16.msra.mxu0 %v4298
    %7201 = vmatpush.bf16.msra.mxu0 %v4290
    %7202 = vmatpush.bf16.msra.mxu0 %v4282
    %7203 = vmatpush.bf16.msra.mxu0 %v4274
    %7204 = vmatpush.bf16.msra.mxu0 %v4266
    %7205 = vmatpush.bf16.msra.mxu0 %v4258
    %7206 = vmatmul.bf16.gmra.mxu0 %v1150
    %v7207 = vpop.f32.mrf.mxu0
    %v7208 = vadd.f32 %v1090, %v7207
    %v7209 = vpop.f32.mrf.mxu0
    %v7210 = vadd.f32 %v1090, %v7209
    %7211 = vdwg.mxu0
    %7212 = vmatpush.bf16.msra.mxu0 %v4378
    %7213 = vmatpush.bf16.msra.mxu0 %v4370
    %7214 = vmatpush.bf16.msra.mxu0 %v4362
    %7215 = vmatpush.bf16.msra.mxu0 %v4354
    %7216 = vmatpush.bf16.msra.mxu0 %v4346
    %7217 = vmatpush.bf16.msra.mxu0 %v4338
    %7218 = vmatpush.bf16.msra.mxu0 %v4330
    %7219 = vmatpush.bf16.msra.mxu0 %v4322
    %7220 = vmatmul.bf16.gmra.mxu0 %v1151
    %v7221 = vpop.f32.mrf.mxu0
    %v7222 = vadd.f32 %v7208, %v7221
    %v7223 = vpop.f32.mrf.mxu0
    %v7224 = vadd.f32 %v7210, %v7223
    %7225 = vdwg.mxu0
    %7226 = vmatpush.bf16.msra.mxu0 %v4442
    %7227 = vmatpush.bf16.msra.mxu0 %v4434
    %7228 = vmatpush.bf16.msra.mxu0 %v4426
    %7229 = vmatpush.bf16.msra.mxu0 %v4418
    %7230 = vmatpush.bf16.msra.mxu0 %v4410
    %7231 = vmatpush.bf16.msra.mxu0 %v4402
    %7232 = vmatpush.bf16.msra.mxu0 %v4394
    %7233 = vmatpush.bf16.msra.mxu0 %v4386
    %7234 = vmatmul.bf16.gmra.mxu0 %v1152
    %v7235 = vpop.f32.mrf.mxu0
    %v7236 = vadd.f32 %v7222, %v7235
    %v7237 = vpop.f32.mrf.mxu0
    %v7238 = vadd.f32 %v7224, %v7237
    %7239 = vdwg.mxu0
    %7240 = vmatpush.bf16.msra.mxu0 %v4506
    %7241 = vmatpush.bf16.msra.mxu0 %v4498
    %7242 = vmatpush.bf16.msra.mxu0 %v4490
    %7243 = vmatpush.bf16.msra.mxu0 %v4482
    %7244 = vmatpush.bf16.msra.mxu0 %v4474
    %7245 = vmatpush.bf16.msra.mxu0 %v4466
    %7246 = vmatpush.bf16.msra.mxu0 %v4458
    %7247 = vmatpush.bf16.msra.mxu0 %v4450
    %7248 = vmatmul.bf16.gmra.mxu0 %v1153
    %v7249 = vpop.f32.mrf.mxu0
    %v7250 = vadd.f32 %v7236, %v7249
    %v7251 = vpop.f32.mrf.mxu0
    %v7252 = vadd.f32 %v7238, %v7251
    %7253 = vdwg.mxu0
    %7254 = vmatpush.bf16.msra.mxu0 %v4570
    %7255 = vmatpush.bf16.msra.mxu0 %v4562
    %7256 = vmatpush.bf16.msra.mxu0 %v4554
    %7257 = vmatpush.bf16.msra.mxu0 %v4546
    %7258 = vmatpush.bf16.msra.mxu0 %v4538
    %7259 = vmatpush.bf16.msra.mxu0 %v4530
    %7260 = vmatpush.bf16.msra.mxu0 %v4522
    %7261 = vmatpush.bf16.msra.mxu0 %v4514
    %7262 = vmatmul.bf16.gmra.mxu0 %v1154
    %v7263 = vpop.f32.mrf.mxu0
    %v7264 = vadd.f32 %v7250, %v7263
    %v7265 = vpop.f32.mrf.mxu0
    %v7266 = vadd.f32 %v7252, %v7265
    %7267 = vdwg.mxu0
    %7268 = vmatpush.bf16.msra.mxu0 %v4634
    %7269 = vmatpush.bf16.msra.mxu0 %v4626
    %7270 = vmatpush.bf16.msra.mxu0 %v4618
    %7271 = vmatpush.bf16.msra.mxu0 %v4610
    %7272 = vmatpush.bf16.msra.mxu0 %v4602
    %7273 = vmatpush.bf16.msra.mxu0 %v4594
    %7274 = vmatpush.bf16.msra.mxu0 %v4586
    %7275 = vmatpush.bf16.msra.mxu0 %v4578
    %7276 = vmatmul.bf16.gmra.mxu0 %v1155
    %v7277 = vpop.f32.mrf.mxu0
    %v7278 = vadd.f32 %v7264, %v7277
    %v7279 = vpop.f32.mrf.mxu0
    %v7280 = vadd.f32 %v7266, %v7279
    %7281 = vdwg.mxu0
    %7282 = vmatpush.bf16.msra.mxu0 %v4698
    %7283 = vmatpush.bf16.msra.mxu0 %v4690
    %7284 = vmatpush.bf16.msra.mxu0 %v4682
    %7285 = vmatpush.bf16.msra.mxu0 %v4674
    %7286 = vmatpush.bf16.msra.mxu0 %v4666
    %7287 = vmatpush.bf16.msra.mxu0 %v4658
    %7288 = vmatpush.bf16.msra.mxu0 %v4650
    %7289 = vmatpush.bf16.msra.mxu0 %v4642
    %7290 = vmatmul.bf16.gmra.mxu0 %v1156
    %v7291 = vpop.f32.mrf.mxu0
    %v7292 = vadd.f32 %v7278, %v7291
    %v7293 = vpop.f32.mrf.mxu0
    %v7294 = vadd.f32 %v7280, %v7293
    %7295 = vdwg.mxu0
    %7296 = vmatpush.bf16.msra.mxu0 %v4762
    %7297 = vmatpush.bf16.msra.mxu0 %v4754
    %7298 = vmatpush.bf16.msra.mxu0 %v4746
    %7299 = vmatpush.bf16.msra.mxu0 %v4738
    %7300 = vmatpush.bf16.msra.mxu0 %v4730
    %7301 = vmatpush.bf16.msra.mxu0 %v4722
    %7302 = vmatpush.bf16.msra.mxu0 %v4714
    %7303 = vmatpush.bf16.msra.mxu0 %v4706
    %7304 = vmatmul.bf16.gmra.mxu0 %v1157
    %v7305 = vpop.f32.mrf.mxu0
    %v7306 = vadd.f32 %v7292, %v7305
    %v7307 = vpop.f32.mrf.mxu0
    %v7308 = vadd.f32 %v7294, %v7307
    %7309 = vdwg.mxu0
    %7310 = vmatpush.bf16.msra.mxu0 %v4826
    %7311 = vmatpush.bf16.msra.mxu0 %v4818
    %7312 = vmatpush.bf16.msra.mxu0 %v4810
    %7313 = vmatpush.bf16.msra.mxu0 %v4802
    %7314 = vmatpush.bf16.msra.mxu0 %v4794
    %7315 = vmatpush.bf16.msra.mxu0 %v4786
    %7316 = vmatpush.bf16.msra.mxu0 %v4778
    %7317 = vmatpush.bf16.msra.mxu0 %v4770
    %7318 = vmatmul.bf16.gmra.mxu0 %v1158
    %v7319 = vpop.f32.mrf.mxu0
    %v7320 = vadd.f32 %v7306, %v7319
    %v7321 = vpop.f32.mrf.mxu0
    %v7322 = vadd.f32 %v7308, %v7321
    %7323 = vdwg.mxu0
    %7324 = vmatpush.bf16.msra.mxu0 %v4890
    %7325 = vmatpush.bf16.msra.mxu0 %v4882
    %7326 = vmatpush.bf16.msra.mxu0 %v4874
    %7327 = vmatpush.bf16.msra.mxu0 %v4866
    %7328 = vmatpush.bf16.msra.mxu0 %v4858
    %7329 = vmatpush.bf16.msra.mxu0 %v4850
    %7330 = vmatpush.bf16.msra.mxu0 %v4842
    %7331 = vmatpush.bf16.msra.mxu0 %v4834
    %7332 = vmatmul.bf16.gmra.mxu0 %v1159
    %v7333 = vpop.f32.mrf.mxu0
    %v7334 = vadd.f32 %v7320, %v7333
    %v7335 = vpop.f32.mrf.mxu0
    %v7336 = vadd.f32 %v7322, %v7335
    %7337 = vdwg.mxu0
    %7338 = vmatpush.bf16.msra.mxu0 %v4954
    %7339 = vmatpush.bf16.msra.mxu0 %v4946
    %7340 = vmatpush.bf16.msra.mxu0 %v4938
    %7341 = vmatpush.bf16.msra.mxu0 %v4930
    %7342 = vmatpush.bf16.msra.mxu0 %v4922
    %7343 = vmatpush.bf16.msra.mxu0 %v4914
    %7344 = vmatpush.bf16.msra.mxu0 %v4906
    %7345 = vmatpush.bf16.msra.mxu0 %v4898
    %7346 = vmatmul.bf16.gmra.mxu0 %v1160
    %v7347 = vpop.f32.mrf.mxu0
    %v7348 = vadd.f32 %v7334, %v7347
    %v7349 = vpop.f32.mrf.mxu0
    %v7350 = vadd.f32 %v7336, %v7349
    %7351 = vdwg.mxu0
    %7352 = vmatpush.bf16.msra.mxu0 %v5018
    %7353 = vmatpush.bf16.msra.mxu0 %v5010
    %7354 = vmatpush.bf16.msra.mxu0 %v5002
    %7355 = vmatpush.bf16.msra.mxu0 %v4994
    %7356 = vmatpush.bf16.msra.mxu0 %v4986
    %7357 = vmatpush.bf16.msra.mxu0 %v4978
    %7358 = vmatpush.bf16.msra.mxu0 %v4970
    %7359 = vmatpush.bf16.msra.mxu0 %v4962
    %7360 = vmatmul.bf16.gmra.mxu0 %v1161
    %v7361 = vpop.f32.mrf.mxu0
    %v7362 = vadd.f32 %v7348, %v7361
    %v7363 = vpop.f32.mrf.mxu0
    %v7364 = vadd.f32 %v7350, %v7363
    %7365 = vdwg.mxu0
    %7366 = vmatpush.bf16.msra.mxu0 %v5082
    %7367 = vmatpush.bf16.msra.mxu0 %v5074
    %7368 = vmatpush.bf16.msra.mxu0 %v5066
    %7369 = vmatpush.bf16.msra.mxu0 %v5058
    %7370 = vmatpush.bf16.msra.mxu0 %v5050
    %7371 = vmatpush.bf16.msra.mxu0 %v5042
    %7372 = vmatpush.bf16.msra.mxu0 %v5034
    %7373 = vmatpush.bf16.msra.mxu0 %v5026
    %7374 = vmatmul.bf16.gmra.mxu0 %v1162
    %v7375 = vpop.f32.mrf.mxu0
    %v7376 = vadd.f32 %v7362, %v7375
    %v7377 = vpop.f32.mrf.mxu0
    %v7378 = vadd.f32 %v7364, %v7377
    %7379 = vdwg.mxu0
    %7380 = vmatpush.bf16.msra.mxu0 %v5146
    %7381 = vmatpush.bf16.msra.mxu0 %v5138
    %7382 = vmatpush.bf16.msra.mxu0 %v5130
    %7383 = vmatpush.bf16.msra.mxu0 %v5122
    %7384 = vmatpush.bf16.msra.mxu0 %v5114
    %7385 = vmatpush.bf16.msra.mxu0 %v5106
    %7386 = vmatpush.bf16.msra.mxu0 %v5098
    %7387 = vmatpush.bf16.msra.mxu0 %v5090
    %7388 = vmatmul.bf16.gmra.mxu0 %v1163
    %v7389 = vpop.f32.mrf.mxu0
    %v7390 = vadd.f32 %v7376, %v7389
    %v7391 = vpop.f32.mrf.mxu0
    %v7392 = vadd.f32 %v7378, %v7391
    %7393 = vdwg.mxu0
    %7394 = vmatpush.bf16.msra.mxu0 %v5210
    %7395 = vmatpush.bf16.msra.mxu0 %v5202
    %7396 = vmatpush.bf16.msra.mxu0 %v5194
    %7397 = vmatpush.bf16.msra.mxu0 %v5186
    %7398 = vmatpush.bf16.msra.mxu0 %v5178
    %7399 = vmatpush.bf16.msra.mxu0 %v5170
    %7400 = vmatpush.bf16.msra.mxu0 %v5162
    %7401 = vmatpush.bf16.msra.mxu0 %v5154
    %7402 = vmatmul.bf16.gmra.mxu0 %v1164
    %v7403 = vpop.f32.mrf.mxu0
    %v7404 = vadd.f32 %v7390, %v7403
    %v7405 = vpop.f32.mrf.mxu0
    %v7406 = vadd.f32 %v7392, %v7405
    %7407 = vdwg.mxu0
    %7408 = vmatpush.bf16.msra.mxu0 %v5274
    %7409 = vmatpush.bf16.msra.mxu0 %v5266
    %7410 = vmatpush.bf16.msra.mxu0 %v5258
    %7411 = vmatpush.bf16.msra.mxu0 %v5250
    %7412 = vmatpush.bf16.msra.mxu0 %v5242
    %7413 = vmatpush.bf16.msra.mxu0 %v5234
    %7414 = vmatpush.bf16.msra.mxu0 %v5226
    %7415 = vmatpush.bf16.msra.mxu0 %v5218
    %7416 = vmatmul.bf16.gmra.mxu0 %v1165
    %v7417 = vpop.f32.mrf.mxu0
    %v7418 = vadd.f32 %v7404, %v7417
    %v7419 = vpop.f32.mrf.mxu0
    %v7420 = vadd.f32 %v7406, %v7419
    %7421 = vdwg.mxu0
    %7422 = vmatpush.bf16.msra.mxu0 %v4315
    %7423 = vmatpush.bf16.msra.mxu0 %v4307
    %7424 = vmatpush.bf16.msra.mxu0 %v4299
    %7425 = vmatpush.bf16.msra.mxu0 %v4291
    %7426 = vmatpush.bf16.msra.mxu0 %v4283
    %7427 = vmatpush.bf16.msra.mxu0 %v4275
    %7428 = vmatpush.bf16.msra.mxu0 %v4267
    %7429 = vmatpush.bf16.msra.mxu0 %v4259
    %7430 = vmatmul.bf16.gmra.mxu0 %v1150
    %v7431 = vpop.f32.mrf.mxu0
    %v7432 = vadd.f32 %v1091, %v7431
    %v7433 = vpop.f32.mrf.mxu0
    %v7434 = vadd.f32 %v1091, %v7433
    %7435 = vdwg.mxu0
    %7436 = vmatpush.bf16.msra.mxu0 %v4379
    %7437 = vmatpush.bf16.msra.mxu0 %v4371
    %7438 = vmatpush.bf16.msra.mxu0 %v4363
    %7439 = vmatpush.bf16.msra.mxu0 %v4355
    %7440 = vmatpush.bf16.msra.mxu0 %v4347
    %7441 = vmatpush.bf16.msra.mxu0 %v4339
    %7442 = vmatpush.bf16.msra.mxu0 %v4331
    %7443 = vmatpush.bf16.msra.mxu0 %v4323
    %7444 = vmatmul.bf16.gmra.mxu0 %v1151
    %v7445 = vpop.f32.mrf.mxu0
    %v7446 = vadd.f32 %v7432, %v7445
    %v7447 = vpop.f32.mrf.mxu0
    %v7448 = vadd.f32 %v7434, %v7447
    %7449 = vdwg.mxu0
    %7450 = vmatpush.bf16.msra.mxu0 %v4443
    %7451 = vmatpush.bf16.msra.mxu0 %v4435
    %7452 = vmatpush.bf16.msra.mxu0 %v4427
    %7453 = vmatpush.bf16.msra.mxu0 %v4419
    %7454 = vmatpush.bf16.msra.mxu0 %v4411
    %7455 = vmatpush.bf16.msra.mxu0 %v4403
    %7456 = vmatpush.bf16.msra.mxu0 %v4395
    %7457 = vmatpush.bf16.msra.mxu0 %v4387
    %7458 = vmatmul.bf16.gmra.mxu0 %v1152
    %v7459 = vpop.f32.mrf.mxu0
    %v7460 = vadd.f32 %v7446, %v7459
    %v7461 = vpop.f32.mrf.mxu0
    %v7462 = vadd.f32 %v7448, %v7461
    %7463 = vdwg.mxu0
    %7464 = vmatpush.bf16.msra.mxu0 %v4507
    %7465 = vmatpush.bf16.msra.mxu0 %v4499
    %7466 = vmatpush.bf16.msra.mxu0 %v4491
    %7467 = vmatpush.bf16.msra.mxu0 %v4483
    %7468 = vmatpush.bf16.msra.mxu0 %v4475
    %7469 = vmatpush.bf16.msra.mxu0 %v4467
    %7470 = vmatpush.bf16.msra.mxu0 %v4459
    %7471 = vmatpush.bf16.msra.mxu0 %v4451
    %7472 = vmatmul.bf16.gmra.mxu0 %v1153
    %v7473 = vpop.f32.mrf.mxu0
    %v7474 = vadd.f32 %v7460, %v7473
    %v7475 = vpop.f32.mrf.mxu0
    %v7476 = vadd.f32 %v7462, %v7475
    %7477 = vdwg.mxu0
    %7478 = vmatpush.bf16.msra.mxu0 %v4571
    %7479 = vmatpush.bf16.msra.mxu0 %v4563
    %7480 = vmatpush.bf16.msra.mxu0 %v4555
    %7481 = vmatpush.bf16.msra.mxu0 %v4547
    %7482 = vmatpush.bf16.msra.mxu0 %v4539
    %7483 = vmatpush.bf16.msra.mxu0 %v4531
    %7484 = vmatpush.bf16.msra.mxu0 %v4523
    %7485 = vmatpush.bf16.msra.mxu0 %v4515
    %7486 = vmatmul.bf16.gmra.mxu0 %v1154
    %v7487 = vpop.f32.mrf.mxu0
    %v7488 = vadd.f32 %v7474, %v7487
    %v7489 = vpop.f32.mrf.mxu0
    %v7490 = vadd.f32 %v7476, %v7489
    %7491 = vdwg.mxu0
    %7492 = vmatpush.bf16.msra.mxu0 %v4635
    %7493 = vmatpush.bf16.msra.mxu0 %v4627
    %7494 = vmatpush.bf16.msra.mxu0 %v4619
    %7495 = vmatpush.bf16.msra.mxu0 %v4611
    %7496 = vmatpush.bf16.msra.mxu0 %v4603
    %7497 = vmatpush.bf16.msra.mxu0 %v4595
    %7498 = vmatpush.bf16.msra.mxu0 %v4587
    %7499 = vmatpush.bf16.msra.mxu0 %v4579
    %7500 = vmatmul.bf16.gmra.mxu0 %v1155
    %v7501 = vpop.f32.mrf.mxu0
    %v7502 = vadd.f32 %v7488, %v7501
    %v7503 = vpop.f32.mrf.mxu0
    %v7504 = vadd.f32 %v7490, %v7503
    %7505 = vdwg.mxu0
    %7506 = vmatpush.bf16.msra.mxu0 %v4699
    %7507 = vmatpush.bf16.msra.mxu0 %v4691
    %7508 = vmatpush.bf16.msra.mxu0 %v4683
    %7509 = vmatpush.bf16.msra.mxu0 %v4675
    %7510 = vmatpush.bf16.msra.mxu0 %v4667
    %7511 = vmatpush.bf16.msra.mxu0 %v4659
    %7512 = vmatpush.bf16.msra.mxu0 %v4651
    %7513 = vmatpush.bf16.msra.mxu0 %v4643
    %7514 = vmatmul.bf16.gmra.mxu0 %v1156
    %v7515 = vpop.f32.mrf.mxu0
    %v7516 = vadd.f32 %v7502, %v7515
    %v7517 = vpop.f32.mrf.mxu0
    %v7518 = vadd.f32 %v7504, %v7517
    %7519 = vdwg.mxu0
    %7520 = vmatpush.bf16.msra.mxu0 %v4763
    %7521 = vmatpush.bf16.msra.mxu0 %v4755
    %7522 = vmatpush.bf16.msra.mxu0 %v4747
    %7523 = vmatpush.bf16.msra.mxu0 %v4739
    %7524 = vmatpush.bf16.msra.mxu0 %v4731
    %7525 = vmatpush.bf16.msra.mxu0 %v4723
    %7526 = vmatpush.bf16.msra.mxu0 %v4715
    %7527 = vmatpush.bf16.msra.mxu0 %v4707
    %7528 = vmatmul.bf16.gmra.mxu0 %v1157
    %v7529 = vpop.f32.mrf.mxu0
    %v7530 = vadd.f32 %v7516, %v7529
    %v7531 = vpop.f32.mrf.mxu0
    %v7532 = vadd.f32 %v7518, %v7531
    %7533 = vdwg.mxu0
    %7534 = vmatpush.bf16.msra.mxu0 %v4827
    %7535 = vmatpush.bf16.msra.mxu0 %v4819
    %7536 = vmatpush.bf16.msra.mxu0 %v4811
    %7537 = vmatpush.bf16.msra.mxu0 %v4803
    %7538 = vmatpush.bf16.msra.mxu0 %v4795
    %7539 = vmatpush.bf16.msra.mxu0 %v4787
    %7540 = vmatpush.bf16.msra.mxu0 %v4779
    %7541 = vmatpush.bf16.msra.mxu0 %v4771
    %7542 = vmatmul.bf16.gmra.mxu0 %v1158
    %v7543 = vpop.f32.mrf.mxu0
    %v7544 = vadd.f32 %v7530, %v7543
    %v7545 = vpop.f32.mrf.mxu0
    %v7546 = vadd.f32 %v7532, %v7545
    %7547 = vdwg.mxu0
    %7548 = vmatpush.bf16.msra.mxu0 %v4891
    %7549 = vmatpush.bf16.msra.mxu0 %v4883
    %7550 = vmatpush.bf16.msra.mxu0 %v4875
    %7551 = vmatpush.bf16.msra.mxu0 %v4867
    %7552 = vmatpush.bf16.msra.mxu0 %v4859
    %7553 = vmatpush.bf16.msra.mxu0 %v4851
    %7554 = vmatpush.bf16.msra.mxu0 %v4843
    %7555 = vmatpush.bf16.msra.mxu0 %v4835
    %7556 = vmatmul.bf16.gmra.mxu0 %v1159
    %v7557 = vpop.f32.mrf.mxu0
    %v7558 = vadd.f32 %v7544, %v7557
    %v7559 = vpop.f32.mrf.mxu0
    %v7560 = vadd.f32 %v7546, %v7559
    %7561 = vdwg.mxu0
    %7562 = vmatpush.bf16.msra.mxu0 %v4955
    %7563 = vmatpush.bf16.msra.mxu0 %v4947
    %7564 = vmatpush.bf16.msra.mxu0 %v4939
    %7565 = vmatpush.bf16.msra.mxu0 %v4931
    %7566 = vmatpush.bf16.msra.mxu0 %v4923
    %7567 = vmatpush.bf16.msra.mxu0 %v4915
    %7568 = vmatpush.bf16.msra.mxu0 %v4907
    %7569 = vmatpush.bf16.msra.mxu0 %v4899
    %7570 = vmatmul.bf16.gmra.mxu0 %v1160
    %v7571 = vpop.f32.mrf.mxu0
    %v7572 = vadd.f32 %v7558, %v7571
    %v7573 = vpop.f32.mrf.mxu0
    %v7574 = vadd.f32 %v7560, %v7573
    %7575 = vdwg.mxu0
    %7576 = vmatpush.bf16.msra.mxu0 %v5019
    %7577 = vmatpush.bf16.msra.mxu0 %v5011
    %7578 = vmatpush.bf16.msra.mxu0 %v5003
    %7579 = vmatpush.bf16.msra.mxu0 %v4995
    %7580 = vmatpush.bf16.msra.mxu0 %v4987
    %7581 = vmatpush.bf16.msra.mxu0 %v4979
    %7582 = vmatpush.bf16.msra.mxu0 %v4971
    %7583 = vmatpush.bf16.msra.mxu0 %v4963
    %7584 = vmatmul.bf16.gmra.mxu0 %v1161
    %v7585 = vpop.f32.mrf.mxu0
    %v7586 = vadd.f32 %v7572, %v7585
    %v7587 = vpop.f32.mrf.mxu0
    %v7588 = vadd.f32 %v7574, %v7587
    %7589 = vdwg.mxu0
    %7590 = vmatpush.bf16.msra.mxu0 %v5083
    %7591 = vmatpush.bf16.msra.mxu0 %v5075
    %7592 = vmatpush.bf16.msra.mxu0 %v5067
    %7593 = vmatpush.bf16.msra.mxu0 %v5059
    %7594 = vmatpush.bf16.msra.mxu0 %v5051
    %7595 = vmatpush.bf16.msra.mxu0 %v5043
    %7596 = vmatpush.bf16.msra.mxu0 %v5035
    %7597 = vmatpush.bf16.msra.mxu0 %v5027
    %7598 = vmatmul.bf16.gmra.mxu0 %v1162
    %v7599 = vpop.f32.mrf.mxu0
    %v7600 = vadd.f32 %v7586, %v7599
    %v7601 = vpop.f32.mrf.mxu0
    %v7602 = vadd.f32 %v7588, %v7601
    %7603 = vdwg.mxu0
    %7604 = vmatpush.bf16.msra.mxu0 %v5147
    %7605 = vmatpush.bf16.msra.mxu0 %v5139
    %7606 = vmatpush.bf16.msra.mxu0 %v5131
    %7607 = vmatpush.bf16.msra.mxu0 %v5123
    %7608 = vmatpush.bf16.msra.mxu0 %v5115
    %7609 = vmatpush.bf16.msra.mxu0 %v5107
    %7610 = vmatpush.bf16.msra.mxu0 %v5099
    %7611 = vmatpush.bf16.msra.mxu0 %v5091
    %7612 = vmatmul.bf16.gmra.mxu0 %v1163
    %v7613 = vpop.f32.mrf.mxu0
    %v7614 = vadd.f32 %v7600, %v7613
    %v7615 = vpop.f32.mrf.mxu0
    %v7616 = vadd.f32 %v7602, %v7615
    %7617 = vdwg.mxu0
    %7618 = vmatpush.bf16.msra.mxu0 %v5211
    %7619 = vmatpush.bf16.msra.mxu0 %v5203
    %7620 = vmatpush.bf16.msra.mxu0 %v5195
    %7621 = vmatpush.bf16.msra.mxu0 %v5187
    %7622 = vmatpush.bf16.msra.mxu0 %v5179
    %7623 = vmatpush.bf16.msra.mxu0 %v5171
    %7624 = vmatpush.bf16.msra.mxu0 %v5163
    %7625 = vmatpush.bf16.msra.mxu0 %v5155
    %7626 = vmatmul.bf16.gmra.mxu0 %v1164
    %v7627 = vpop.f32.mrf.mxu0
    %v7628 = vadd.f32 %v7614, %v7627
    %v7629 = vpop.f32.mrf.mxu0
    %v7630 = vadd.f32 %v7616, %v7629
    %7631 = vdwg.mxu0
    %7632 = vmatpush.bf16.msra.mxu0 %v5275
    %7633 = vmatpush.bf16.msra.mxu0 %v5267
    %7634 = vmatpush.bf16.msra.mxu0 %v5259
    %7635 = vmatpush.bf16.msra.mxu0 %v5251
    %7636 = vmatpush.bf16.msra.mxu0 %v5243
    %7637 = vmatpush.bf16.msra.mxu0 %v5235
    %7638 = vmatpush.bf16.msra.mxu0 %v5227
    %7639 = vmatpush.bf16.msra.mxu0 %v5219
    %7640 = vmatmul.bf16.gmra.mxu0 %v1165
    %v7641 = vpop.f32.mrf.mxu0
    %v7642 = vadd.f32 %v7628, %v7641
    %v7643 = vpop.f32.mrf.mxu0
    %v7644 = vadd.f32 %v7630, %v7643
    %7645 = vdwg.mxu0
    %7646 = vmatpush.bf16.msra.mxu0 %v4316
    %7647 = vmatpush.bf16.msra.mxu0 %v4308
    %7648 = vmatpush.bf16.msra.mxu0 %v4300
    %7649 = vmatpush.bf16.msra.mxu0 %v4292
    %7650 = vmatpush.bf16.msra.mxu0 %v4284
    %7651 = vmatpush.bf16.msra.mxu0 %v4276
    %7652 = vmatpush.bf16.msra.mxu0 %v4268
    %7653 = vmatpush.bf16.msra.mxu0 %v4260
    %7654 = vmatmul.bf16.gmra.mxu0 %v1150
    %v7655 = vpop.f32.mrf.mxu0
    %v7656 = vadd.f32 %v1092, %v7655
    %v7657 = vpop.f32.mrf.mxu0
    %v7658 = vadd.f32 %v1092, %v7657
    %7659 = vdwg.mxu0
    %7660 = vmatpush.bf16.msra.mxu0 %v4380
    %7661 = vmatpush.bf16.msra.mxu0 %v4372
    %7662 = vmatpush.bf16.msra.mxu0 %v4364
    %7663 = vmatpush.bf16.msra.mxu0 %v4356
    %7664 = vmatpush.bf16.msra.mxu0 %v4348
    %7665 = vmatpush.bf16.msra.mxu0 %v4340
    %7666 = vmatpush.bf16.msra.mxu0 %v4332
    %7667 = vmatpush.bf16.msra.mxu0 %v4324
    %7668 = vmatmul.bf16.gmra.mxu0 %v1151
    %v7669 = vpop.f32.mrf.mxu0
    %v7670 = vadd.f32 %v7656, %v7669
    %v7671 = vpop.f32.mrf.mxu0
    %v7672 = vadd.f32 %v7658, %v7671
    %7673 = vdwg.mxu0
    %7674 = vmatpush.bf16.msra.mxu0 %v4444
    %7675 = vmatpush.bf16.msra.mxu0 %v4436
    %7676 = vmatpush.bf16.msra.mxu0 %v4428
    %7677 = vmatpush.bf16.msra.mxu0 %v4420
    %7678 = vmatpush.bf16.msra.mxu0 %v4412
    %7679 = vmatpush.bf16.msra.mxu0 %v4404
    %7680 = vmatpush.bf16.msra.mxu0 %v4396
    %7681 = vmatpush.bf16.msra.mxu0 %v4388
    %7682 = vmatmul.bf16.gmra.mxu0 %v1152
    %v7683 = vpop.f32.mrf.mxu0
    %v7684 = vadd.f32 %v7670, %v7683
    %v7685 = vpop.f32.mrf.mxu0
    %v7686 = vadd.f32 %v7672, %v7685
    %7687 = vdwg.mxu0
    %7688 = vmatpush.bf16.msra.mxu0 %v4508
    %7689 = vmatpush.bf16.msra.mxu0 %v4500
    %7690 = vmatpush.bf16.msra.mxu0 %v4492
    %7691 = vmatpush.bf16.msra.mxu0 %v4484
    %7692 = vmatpush.bf16.msra.mxu0 %v4476
    %7693 = vmatpush.bf16.msra.mxu0 %v4468
    %7694 = vmatpush.bf16.msra.mxu0 %v4460
    %7695 = vmatpush.bf16.msra.mxu0 %v4452
    %7696 = vmatmul.bf16.gmra.mxu0 %v1153
    %v7697 = vpop.f32.mrf.mxu0
    %v7698 = vadd.f32 %v7684, %v7697
    %v7699 = vpop.f32.mrf.mxu0
    %v7700 = vadd.f32 %v7686, %v7699
    %7701 = vdwg.mxu0
    %7702 = vmatpush.bf16.msra.mxu0 %v4572
    %7703 = vmatpush.bf16.msra.mxu0 %v4564
    %7704 = vmatpush.bf16.msra.mxu0 %v4556
    %7705 = vmatpush.bf16.msra.mxu0 %v4548
    %7706 = vmatpush.bf16.msra.mxu0 %v4540
    %7707 = vmatpush.bf16.msra.mxu0 %v4532
    %7708 = vmatpush.bf16.msra.mxu0 %v4524
    %7709 = vmatpush.bf16.msra.mxu0 %v4516
    %7710 = vmatmul.bf16.gmra.mxu0 %v1154
    %v7711 = vpop.f32.mrf.mxu0
    %v7712 = vadd.f32 %v7698, %v7711
    %v7713 = vpop.f32.mrf.mxu0
    %v7714 = vadd.f32 %v7700, %v7713
    %7715 = vdwg.mxu0
    %7716 = vmatpush.bf16.msra.mxu0 %v4636
    %7717 = vmatpush.bf16.msra.mxu0 %v4628
    %7718 = vmatpush.bf16.msra.mxu0 %v4620
    %7719 = vmatpush.bf16.msra.mxu0 %v4612
    %7720 = vmatpush.bf16.msra.mxu0 %v4604
    %7721 = vmatpush.bf16.msra.mxu0 %v4596
    %7722 = vmatpush.bf16.msra.mxu0 %v4588
    %7723 = vmatpush.bf16.msra.mxu0 %v4580
    %7724 = vmatmul.bf16.gmra.mxu0 %v1155
    %v7725 = vpop.f32.mrf.mxu0
    %v7726 = vadd.f32 %v7712, %v7725
    %v7727 = vpop.f32.mrf.mxu0
    %v7728 = vadd.f32 %v7714, %v7727
    %7729 = vdwg.mxu0
    %7730 = vmatpush.bf16.msra.mxu0 %v4700
    %7731 = vmatpush.bf16.msra.mxu0 %v4692
    %7732 = vmatpush.bf16.msra.mxu0 %v4684
    %7733 = vmatpush.bf16.msra.mxu0 %v4676
    %7734 = vmatpush.bf16.msra.mxu0 %v4668
    %7735 = vmatpush.bf16.msra.mxu0 %v4660
    %7736 = vmatpush.bf16.msra.mxu0 %v4652
    %7737 = vmatpush.bf16.msra.mxu0 %v4644
    %7738 = vmatmul.bf16.gmra.mxu0 %v1156
    %v7739 = vpop.f32.mrf.mxu0
    %v7740 = vadd.f32 %v7726, %v7739
    %v7741 = vpop.f32.mrf.mxu0
    %v7742 = vadd.f32 %v7728, %v7741
    %7743 = vdwg.mxu0
    %7744 = vmatpush.bf16.msra.mxu0 %v4764
    %7745 = vmatpush.bf16.msra.mxu0 %v4756
    %7746 = vmatpush.bf16.msra.mxu0 %v4748
    %7747 = vmatpush.bf16.msra.mxu0 %v4740
    %7748 = vmatpush.bf16.msra.mxu0 %v4732
    %7749 = vmatpush.bf16.msra.mxu0 %v4724
    %7750 = vmatpush.bf16.msra.mxu0 %v4716
    %7751 = vmatpush.bf16.msra.mxu0 %v4708
    %7752 = vmatmul.bf16.gmra.mxu0 %v1157
    %v7753 = vpop.f32.mrf.mxu0
    %v7754 = vadd.f32 %v7740, %v7753
    %v7755 = vpop.f32.mrf.mxu0
    %v7756 = vadd.f32 %v7742, %v7755
    %7757 = vdwg.mxu0
    %7758 = vmatpush.bf16.msra.mxu0 %v4828
    %7759 = vmatpush.bf16.msra.mxu0 %v4820
    %7760 = vmatpush.bf16.msra.mxu0 %v4812
    %7761 = vmatpush.bf16.msra.mxu0 %v4804
    %7762 = vmatpush.bf16.msra.mxu0 %v4796
    %7763 = vmatpush.bf16.msra.mxu0 %v4788
    %7764 = vmatpush.bf16.msra.mxu0 %v4780
    %7765 = vmatpush.bf16.msra.mxu0 %v4772
    %7766 = vmatmul.bf16.gmra.mxu0 %v1158
    %v7767 = vpop.f32.mrf.mxu0
    %v7768 = vadd.f32 %v7754, %v7767
    %v7769 = vpop.f32.mrf.mxu0
    %v7770 = vadd.f32 %v7756, %v7769
    %7771 = vdwg.mxu0
    %7772 = vmatpush.bf16.msra.mxu0 %v4892
    %7773 = vmatpush.bf16.msra.mxu0 %v4884
    %7774 = vmatpush.bf16.msra.mxu0 %v4876
    %7775 = vmatpush.bf16.msra.mxu0 %v4868
    %7776 = vmatpush.bf16.msra.mxu0 %v4860
    %7777 = vmatpush.bf16.msra.mxu0 %v4852
    %7778 = vmatpush.bf16.msra.mxu0 %v4844
    %7779 = vmatpush.bf16.msra.mxu0 %v4836
    %7780 = vmatmul.bf16.gmra.mxu0 %v1159
    %v7781 = vpop.f32.mrf.mxu0
    %v7782 = vadd.f32 %v7768, %v7781
    %v7783 = vpop.f32.mrf.mxu0
    %v7784 = vadd.f32 %v7770, %v7783
    %7785 = vdwg.mxu0
    %7786 = vmatpush.bf16.msra.mxu0 %v4956
    %7787 = vmatpush.bf16.msra.mxu0 %v4948
    %7788 = vmatpush.bf16.msra.mxu0 %v4940
    %7789 = vmatpush.bf16.msra.mxu0 %v4932
    %7790 = vmatpush.bf16.msra.mxu0 %v4924
    %7791 = vmatpush.bf16.msra.mxu0 %v4916
    %7792 = vmatpush.bf16.msra.mxu0 %v4908
    %7793 = vmatpush.bf16.msra.mxu0 %v4900
    %7794 = vmatmul.bf16.gmra.mxu0 %v1160
    %v7795 = vpop.f32.mrf.mxu0
    %v7796 = vadd.f32 %v7782, %v7795
    %v7797 = vpop.f32.mrf.mxu0
    %v7798 = vadd.f32 %v7784, %v7797
    %7799 = vdwg.mxu0
    %7800 = vmatpush.bf16.msra.mxu0 %v5020
    %7801 = vmatpush.bf16.msra.mxu0 %v5012
    %7802 = vmatpush.bf16.msra.mxu0 %v5004
    %7803 = vmatpush.bf16.msra.mxu0 %v4996
    %7804 = vmatpush.bf16.msra.mxu0 %v4988
    %7805 = vmatpush.bf16.msra.mxu0 %v4980
    %7806 = vmatpush.bf16.msra.mxu0 %v4972
    %7807 = vmatpush.bf16.msra.mxu0 %v4964
    %7808 = vmatmul.bf16.gmra.mxu0 %v1161
    %v7809 = vpop.f32.mrf.mxu0
    %v7810 = vadd.f32 %v7796, %v7809
    %v7811 = vpop.f32.mrf.mxu0
    %v7812 = vadd.f32 %v7798, %v7811
    %7813 = vdwg.mxu0
    %7814 = vmatpush.bf16.msra.mxu0 %v5084
    %7815 = vmatpush.bf16.msra.mxu0 %v5076
    %7816 = vmatpush.bf16.msra.mxu0 %v5068
    %7817 = vmatpush.bf16.msra.mxu0 %v5060
    %7818 = vmatpush.bf16.msra.mxu0 %v5052
    %7819 = vmatpush.bf16.msra.mxu0 %v5044
    %7820 = vmatpush.bf16.msra.mxu0 %v5036
    %7821 = vmatpush.bf16.msra.mxu0 %v5028
    %7822 = vmatmul.bf16.gmra.mxu0 %v1162
    %v7823 = vpop.f32.mrf.mxu0
    %v7824 = vadd.f32 %v7810, %v7823
    %v7825 = vpop.f32.mrf.mxu0
    %v7826 = vadd.f32 %v7812, %v7825
    %7827 = vdwg.mxu0
    %7828 = vmatpush.bf16.msra.mxu0 %v5148
    %7829 = vmatpush.bf16.msra.mxu0 %v5140
    %7830 = vmatpush.bf16.msra.mxu0 %v5132
    %7831 = vmatpush.bf16.msra.mxu0 %v5124
    %7832 = vmatpush.bf16.msra.mxu0 %v5116
    %7833 = vmatpush.bf16.msra.mxu0 %v5108
    %7834 = vmatpush.bf16.msra.mxu0 %v5100
    %7835 = vmatpush.bf16.msra.mxu0 %v5092
    %7836 = vmatmul.bf16.gmra.mxu0 %v1163
    %v7837 = vpop.f32.mrf.mxu0
    %v7838 = vadd.f32 %v7824, %v7837
    %v7839 = vpop.f32.mrf.mxu0
    %v7840 = vadd.f32 %v7826, %v7839
    %7841 = vdwg.mxu0
    %7842 = vmatpush.bf16.msra.mxu0 %v5212
    %7843 = vmatpush.bf16.msra.mxu0 %v5204
    %7844 = vmatpush.bf16.msra.mxu0 %v5196
    %7845 = vmatpush.bf16.msra.mxu0 %v5188
    %7846 = vmatpush.bf16.msra.mxu0 %v5180
    %7847 = vmatpush.bf16.msra.mxu0 %v5172
    %7848 = vmatpush.bf16.msra.mxu0 %v5164
    %7849 = vmatpush.bf16.msra.mxu0 %v5156
    %7850 = vmatmul.bf16.gmra.mxu0 %v1164
    %v7851 = vpop.f32.mrf.mxu0
    %v7852 = vadd.f32 %v7838, %v7851
    %v7853 = vpop.f32.mrf.mxu0
    %v7854 = vadd.f32 %v7840, %v7853
    %7855 = vdwg.mxu0
    %7856 = vmatpush.bf16.msra.mxu0 %v5276
    %7857 = vmatpush.bf16.msra.mxu0 %v5268
    %7858 = vmatpush.bf16.msra.mxu0 %v5260
    %7859 = vmatpush.bf16.msra.mxu0 %v5252
    %7860 = vmatpush.bf16.msra.mxu0 %v5244
    %7861 = vmatpush.bf16.msra.mxu0 %v5236
    %7862 = vmatpush.bf16.msra.mxu0 %v5228
    %7863 = vmatpush.bf16.msra.mxu0 %v5220
    %7864 = vmatmul.bf16.gmra.mxu0 %v1165
    %v7865 = vpop.f32.mrf.mxu0
    %v7866 = vadd.f32 %v7852, %v7865
    %v7867 = vpop.f32.mrf.mxu0
    %v7868 = vadd.f32 %v7854, %v7867
    %7869 = vdwg.mxu0
    %7870 = vmatpush.bf16.msra.mxu0 %v4317
    %7871 = vmatpush.bf16.msra.mxu0 %v4309
    %7872 = vmatpush.bf16.msra.mxu0 %v4301
    %7873 = vmatpush.bf16.msra.mxu0 %v4293
    %7874 = vmatpush.bf16.msra.mxu0 %v4285
    %7875 = vmatpush.bf16.msra.mxu0 %v4277
    %7876 = vmatpush.bf16.msra.mxu0 %v4269
    %7877 = vmatpush.bf16.msra.mxu0 %v4261
    %7878 = vmatmul.bf16.gmra.mxu0 %v1150
    %v7879 = vpop.f32.mrf.mxu0
    %v7880 = vadd.f32 %v1093, %v7879
    %v7881 = vpop.f32.mrf.mxu0
    %v7882 = vadd.f32 %v1093, %v7881
    %7883 = vdwg.mxu0
    %7884 = vmatpush.bf16.msra.mxu0 %v4381
    %7885 = vmatpush.bf16.msra.mxu0 %v4373
    %7886 = vmatpush.bf16.msra.mxu0 %v4365
    %7887 = vmatpush.bf16.msra.mxu0 %v4357
    %7888 = vmatpush.bf16.msra.mxu0 %v4349
    %7889 = vmatpush.bf16.msra.mxu0 %v4341
    %7890 = vmatpush.bf16.msra.mxu0 %v4333
    %7891 = vmatpush.bf16.msra.mxu0 %v4325
    %7892 = vmatmul.bf16.gmra.mxu0 %v1151
    %v7893 = vpop.f32.mrf.mxu0
    %v7894 = vadd.f32 %v7880, %v7893
    %v7895 = vpop.f32.mrf.mxu0
    %v7896 = vadd.f32 %v7882, %v7895
    %7897 = vdwg.mxu0
    %7898 = vmatpush.bf16.msra.mxu0 %v4445
    %7899 = vmatpush.bf16.msra.mxu0 %v4437
    %7900 = vmatpush.bf16.msra.mxu0 %v4429
    %7901 = vmatpush.bf16.msra.mxu0 %v4421
    %7902 = vmatpush.bf16.msra.mxu0 %v4413
    %7903 = vmatpush.bf16.msra.mxu0 %v4405
    %7904 = vmatpush.bf16.msra.mxu0 %v4397
    %7905 = vmatpush.bf16.msra.mxu0 %v4389
    %7906 = vmatmul.bf16.gmra.mxu0 %v1152
    %v7907 = vpop.f32.mrf.mxu0
    %v7908 = vadd.f32 %v7894, %v7907
    %v7909 = vpop.f32.mrf.mxu0
    %v7910 = vadd.f32 %v7896, %v7909
    %7911 = vdwg.mxu0
    %7912 = vmatpush.bf16.msra.mxu0 %v4509
    %7913 = vmatpush.bf16.msra.mxu0 %v4501
    %7914 = vmatpush.bf16.msra.mxu0 %v4493
    %7915 = vmatpush.bf16.msra.mxu0 %v4485
    %7916 = vmatpush.bf16.msra.mxu0 %v4477
    %7917 = vmatpush.bf16.msra.mxu0 %v4469
    %7918 = vmatpush.bf16.msra.mxu0 %v4461
    %7919 = vmatpush.bf16.msra.mxu0 %v4453
    %7920 = vmatmul.bf16.gmra.mxu0 %v1153
    %v7921 = vpop.f32.mrf.mxu0
    %v7922 = vadd.f32 %v7908, %v7921
    %v7923 = vpop.f32.mrf.mxu0
    %v7924 = vadd.f32 %v7910, %v7923
    %7925 = vdwg.mxu0
    %7926 = vmatpush.bf16.msra.mxu0 %v4573
    %7927 = vmatpush.bf16.msra.mxu0 %v4565
    %7928 = vmatpush.bf16.msra.mxu0 %v4557
    %7929 = vmatpush.bf16.msra.mxu0 %v4549
    %7930 = vmatpush.bf16.msra.mxu0 %v4541
    %7931 = vmatpush.bf16.msra.mxu0 %v4533
    %7932 = vmatpush.bf16.msra.mxu0 %v4525
    %7933 = vmatpush.bf16.msra.mxu0 %v4517
    %7934 = vmatmul.bf16.gmra.mxu0 %v1154
    %v7935 = vpop.f32.mrf.mxu0
    %v7936 = vadd.f32 %v7922, %v7935
    %v7937 = vpop.f32.mrf.mxu0
    %v7938 = vadd.f32 %v7924, %v7937
    %7939 = vdwg.mxu0
    %7940 = vmatpush.bf16.msra.mxu0 %v4637
    %7941 = vmatpush.bf16.msra.mxu0 %v4629
    %7942 = vmatpush.bf16.msra.mxu0 %v4621
    %7943 = vmatpush.bf16.msra.mxu0 %v4613
    %7944 = vmatpush.bf16.msra.mxu0 %v4605
    %7945 = vmatpush.bf16.msra.mxu0 %v4597
    %7946 = vmatpush.bf16.msra.mxu0 %v4589
    %7947 = vmatpush.bf16.msra.mxu0 %v4581
    %7948 = vmatmul.bf16.gmra.mxu0 %v1155
    %v7949 = vpop.f32.mrf.mxu0
    %v7950 = vadd.f32 %v7936, %v7949
    %v7951 = vpop.f32.mrf.mxu0
    %v7952 = vadd.f32 %v7938, %v7951
    %7953 = vdwg.mxu0
    %7954 = vmatpush.bf16.msra.mxu0 %v4701
    %7955 = vmatpush.bf16.msra.mxu0 %v4693
    %7956 = vmatpush.bf16.msra.mxu0 %v4685
    %7957 = vmatpush.bf16.msra.mxu0 %v4677
    %7958 = vmatpush.bf16.msra.mxu0 %v4669
    %7959 = vmatpush.bf16.msra.mxu0 %v4661
    %7960 = vmatpush.bf16.msra.mxu0 %v4653
    %7961 = vmatpush.bf16.msra.mxu0 %v4645
    %7962 = vmatmul.bf16.gmra.mxu0 %v1156
    %v7963 = vpop.f32.mrf.mxu0
    %v7964 = vadd.f32 %v7950, %v7963
    %v7965 = vpop.f32.mrf.mxu0
    %v7966 = vadd.f32 %v7952, %v7965
    %7967 = vdwg.mxu0
    %7968 = vmatpush.bf16.msra.mxu0 %v4765
    %7969 = vmatpush.bf16.msra.mxu0 %v4757
    %7970 = vmatpush.bf16.msra.mxu0 %v4749
    %7971 = vmatpush.bf16.msra.mxu0 %v4741
    %7972 = vmatpush.bf16.msra.mxu0 %v4733
    %7973 = vmatpush.bf16.msra.mxu0 %v4725
    %7974 = vmatpush.bf16.msra.mxu0 %v4717
    %7975 = vmatpush.bf16.msra.mxu0 %v4709
    %7976 = vmatmul.bf16.gmra.mxu0 %v1157
    %v7977 = vpop.f32.mrf.mxu0
    %v7978 = vadd.f32 %v7964, %v7977
    %v7979 = vpop.f32.mrf.mxu0
    %v7980 = vadd.f32 %v7966, %v7979
    %7981 = vdwg.mxu0
    %7982 = vmatpush.bf16.msra.mxu0 %v4829
    %7983 = vmatpush.bf16.msra.mxu0 %v4821
    %7984 = vmatpush.bf16.msra.mxu0 %v4813
    %7985 = vmatpush.bf16.msra.mxu0 %v4805
    %7986 = vmatpush.bf16.msra.mxu0 %v4797
    %7987 = vmatpush.bf16.msra.mxu0 %v4789
    %7988 = vmatpush.bf16.msra.mxu0 %v4781
    %7989 = vmatpush.bf16.msra.mxu0 %v4773
    %7990 = vmatmul.bf16.gmra.mxu0 %v1158
    %v7991 = vpop.f32.mrf.mxu0
    %v7992 = vadd.f32 %v7978, %v7991
    %v7993 = vpop.f32.mrf.mxu0
    %v7994 = vadd.f32 %v7980, %v7993
    %7995 = vdwg.mxu0
    %7996 = vmatpush.bf16.msra.mxu0 %v4893
    %7997 = vmatpush.bf16.msra.mxu0 %v4885
    %7998 = vmatpush.bf16.msra.mxu0 %v4877
    %7999 = vmatpush.bf16.msra.mxu0 %v4869
    %8000 = vmatpush.bf16.msra.mxu0 %v4861
    %8001 = vmatpush.bf16.msra.mxu0 %v4853
    %8002 = vmatpush.bf16.msra.mxu0 %v4845
    %8003 = vmatpush.bf16.msra.mxu0 %v4837
    %8004 = vmatmul.bf16.gmra.mxu0 %v1159
    %v8005 = vpop.f32.mrf.mxu0
    %v8006 = vadd.f32 %v7992, %v8005
    %v8007 = vpop.f32.mrf.mxu0
    %v8008 = vadd.f32 %v7994, %v8007
    %8009 = vdwg.mxu0
    %8010 = vmatpush.bf16.msra.mxu0 %v4957
    %8011 = vmatpush.bf16.msra.mxu0 %v4949
    %8012 = vmatpush.bf16.msra.mxu0 %v4941
    %8013 = vmatpush.bf16.msra.mxu0 %v4933
    %8014 = vmatpush.bf16.msra.mxu0 %v4925
    %8015 = vmatpush.bf16.msra.mxu0 %v4917
    %8016 = vmatpush.bf16.msra.mxu0 %v4909
    %8017 = vmatpush.bf16.msra.mxu0 %v4901
    %8018 = vmatmul.bf16.gmra.mxu0 %v1160
    %v8019 = vpop.f32.mrf.mxu0
    %v8020 = vadd.f32 %v8006, %v8019
    %v8021 = vpop.f32.mrf.mxu0
    %v8022 = vadd.f32 %v8008, %v8021
    %8023 = vdwg.mxu0
    %8024 = vmatpush.bf16.msra.mxu0 %v5021
    %8025 = vmatpush.bf16.msra.mxu0 %v5013
    %8026 = vmatpush.bf16.msra.mxu0 %v5005
    %8027 = vmatpush.bf16.msra.mxu0 %v4997
    %8028 = vmatpush.bf16.msra.mxu0 %v4989
    %8029 = vmatpush.bf16.msra.mxu0 %v4981
    %8030 = vmatpush.bf16.msra.mxu0 %v4973
    %8031 = vmatpush.bf16.msra.mxu0 %v4965
    %8032 = vmatmul.bf16.gmra.mxu0 %v1161
    %v8033 = vpop.f32.mrf.mxu0
    %v8034 = vadd.f32 %v8020, %v8033
    %v8035 = vpop.f32.mrf.mxu0
    %v8036 = vadd.f32 %v8022, %v8035
    %8037 = vdwg.mxu0
    %8038 = vmatpush.bf16.msra.mxu0 %v5085
    %8039 = vmatpush.bf16.msra.mxu0 %v5077
    %8040 = vmatpush.bf16.msra.mxu0 %v5069
    %8041 = vmatpush.bf16.msra.mxu0 %v5061
    %8042 = vmatpush.bf16.msra.mxu0 %v5053
    %8043 = vmatpush.bf16.msra.mxu0 %v5045
    %8044 = vmatpush.bf16.msra.mxu0 %v5037
    %8045 = vmatpush.bf16.msra.mxu0 %v5029
    %8046 = vmatmul.bf16.gmra.mxu0 %v1162
    %v8047 = vpop.f32.mrf.mxu0
    %v8048 = vadd.f32 %v8034, %v8047
    %v8049 = vpop.f32.mrf.mxu0
    %v8050 = vadd.f32 %v8036, %v8049
    %8051 = vdwg.mxu0
    %8052 = vmatpush.bf16.msra.mxu0 %v5149
    %8053 = vmatpush.bf16.msra.mxu0 %v5141
    %8054 = vmatpush.bf16.msra.mxu0 %v5133
    %8055 = vmatpush.bf16.msra.mxu0 %v5125
    %8056 = vmatpush.bf16.msra.mxu0 %v5117
    %8057 = vmatpush.bf16.msra.mxu0 %v5109
    %8058 = vmatpush.bf16.msra.mxu0 %v5101
    %8059 = vmatpush.bf16.msra.mxu0 %v5093
    %8060 = vmatmul.bf16.gmra.mxu0 %v1163
    %v8061 = vpop.f32.mrf.mxu0
    %v8062 = vadd.f32 %v8048, %v8061
    %v8063 = vpop.f32.mrf.mxu0
    %v8064 = vadd.f32 %v8050, %v8063
    %8065 = vdwg.mxu0
    %8066 = vmatpush.bf16.msra.mxu0 %v5213
    %8067 = vmatpush.bf16.msra.mxu0 %v5205
    %8068 = vmatpush.bf16.msra.mxu0 %v5197
    %8069 = vmatpush.bf16.msra.mxu0 %v5189
    %8070 = vmatpush.bf16.msra.mxu0 %v5181
    %8071 = vmatpush.bf16.msra.mxu0 %v5173
    %8072 = vmatpush.bf16.msra.mxu0 %v5165
    %8073 = vmatpush.bf16.msra.mxu0 %v5157
    %8074 = vmatmul.bf16.gmra.mxu0 %v1164
    %v8075 = vpop.f32.mrf.mxu0
    %v8076 = vadd.f32 %v8062, %v8075
    %v8077 = vpop.f32.mrf.mxu0
    %v8078 = vadd.f32 %v8064, %v8077
    %8079 = vdwg.mxu0
    %8080 = vmatpush.bf16.msra.mxu0 %v5277
    %8081 = vmatpush.bf16.msra.mxu0 %v5269
    %8082 = vmatpush.bf16.msra.mxu0 %v5261
    %8083 = vmatpush.bf16.msra.mxu0 %v5253
    %8084 = vmatpush.bf16.msra.mxu0 %v5245
    %8085 = vmatpush.bf16.msra.mxu0 %v5237
    %8086 = vmatpush.bf16.msra.mxu0 %v5229
    %8087 = vmatpush.bf16.msra.mxu0 %v5221
    %8088 = vmatmul.bf16.gmra.mxu0 %v1165
    %v8089 = vpop.f32.mrf.mxu0
    %v8090 = vadd.f32 %v8076, %v8089
    %v8091 = vpop.f32.mrf.mxu0
    %v8092 = vadd.f32 %v8078, %v8091
    %8093 = vdwg.mxu0
    %8094 = vst [vmem:[%s3] sm:$0xff] %v6522
    %8095 = vst [vmem:[%s3 + $0x8] sm:$0xff] %v6746
    %8096 = vst [vmem:[%s3 + $0x10] sm:$0xff] %v6970
    %8097 = vst [vmem:[%s3 + $0x18] sm:$0xff] %v7194
    %8098 = vst [vmem:[%s3 + $0x20] sm:$0xff] %v7418
    %8099 = vst [vmem:[%s3 + $0x28] sm:$0xff] %v7642
    %8100 = vst [vmem:[%s3 + $0x30] sm:$0xff] %v7866
    %8101 = vst [vmem:[%s3 + $0x38] sm:$0xff] %v8090
    %8102 = vst [vmem:[%s3 + $0x40] sm:$0xff] %v6524
    %8103 = vst [vmem:[%s3 + $0x48] sm:$0xff] %v6748
    %8104 = vst [vmem:[%s3 + $0x50] sm:$0xff] %v6972
    %8105 = vst [vmem:[%s3 + $0x58] sm:$0xff] %v7196
    %8106 = vst [vmem:[%s3 + $0x60] sm:$0xff] %v7420
    %8107 = vst [vmem:[%s3 + $0x68] sm:$0xff] %v7644
    %8108 = vst [vmem:[%s3 + $0x70] sm:$0xff] %v7868
    %8109 = vst [vmem:[%s3 + $0x78] sm:$0xff] %v8092
    // Predicated region
    $region22: #{resnet50_c_forward.1} parent=1 // pred_check
      _
    $region23: #{resnet50_c_forward.1} parent=1 // pred_check_branch
      %8111 = sbr.rel (0) target = $region25
    $region24: #{resnet50_c_forward.1} parent=1 // pred_region
      _
    $region25: #{resnet50_c_forward.1} parent=1 // pred_fallthru
      _
    // Predicated region
    $region26: #{resnet50_c_forward.1} parent=1 // pred_check
      _
    $region27: #{resnet50_c_forward.1} parent=1 // pred_check_branch
      %8113 = sbr.rel (0) target = $region29
    $region28: #{resnet50_c_forward.1} parent=1 // pred_region
      _
    $region29: #{resnet50_c_forward.1} parent=1 // pred_fallthru
      _
    %8114 = vsyncpa [#allocation3], 1
    %8115 = vsyncpa [#allocation5], 1

</llo_original>
